<compile_context>
chip_gen: v7x
topology: tpu7x:2x2x1
jax: 0.10.0
libtpu: 0.0.40
codegen_flags: <defaults>
</compile_context>

<pallas_src>
import math
import jax
import jax.numpy as jnp
from jax.experimental import pallas as pl
from jax.experimental.pallas import tpu as pltpu

BP = 8  # padded batch (one f32 sublane group)


# ----------------------------- fused Pallas kernel -------------------------- #

def make_fused_lstm_fc_kernel(T, H, num_layers, out_dim):
    """Build a kernel fusing `num_layers` LSTM layers + the fc head (wavefront).

    Ref signature (all VMEM):
      x2d_ref : (T*BP, D_in)          time-major flattened padded input, row = t*BP + b
      per layer l:
        wih_t_ref : (D_l, 4H)         input->gates weights, pre-transposed
        whh_t_ref : (H, 4H)           hidden->gates weights, pre-transposed
        b_ref     : (1, 4H)           b_ih + b_hh combined
      wfc_t_ref : (T*H, out_dim)      fc weights, pre-transposed
      bfc_ref   : (1, out_dim)
      y_ref     : (BP, out_dim)       output (padded rows sliced off in the wrapper)
    Gate order matches PyTorch: i, f, g, o.
    """

    def kernel(*refs):
        x2d_ref = refs[0]
        layer_refs = refs[1:1 + 3 * num_layers]
        wfc_t_ref = refs[1 + 3 * num_layers]
        bfc_ref = refs[2 + 3 * num_layers]
        y_ref = refs[3 + 3 * num_layers]

        # Gate pre-scale: 0.5 for the i/f/o blocks (sigmoid(x) = 0.5*(tanh(x/2)+1)),
        # 1.0 for the g block (plain tanh).  One constant vreg, hoisted.
        lane = jax.lax.broadcasted_iota(jnp.int32, (1, 4 * H), 1)
        g_block = (lane >= 2 * H) & (lane < 3 * H)
        gate_scale = jnp.where(g_block, jnp.float32(1.0), jnp.float32(0.5))

        # Layer-0 input projection hoisted for the whole sequence (off the
        # recurrence critical path): (T*BP, D_in) @ (D_in, 4H) + b -> (T*BP, 4H).
        gx0 = jnp.dot(x2d_ref[...], layer_refs[0][...],
                      preferred_element_type=jnp.float32) + layer_refs[2][...]

        # Small per-layer weights loaded once (H=32 -> 4 vregs each).
        whh_t = [layer_refs[3 * l + 1][...] for l in range(num_layers)]
        wih_t = [None] + [layer_refs[3 * l][...] for l in range(1, num_layers)]
        b_lyr = [None] + [layer_refs[3 * l + 2][...] for l in range(1, num_layers)]

        h = [jnp.zeros((BP, H), jnp.float32) for _ in range(num_layers)]
        c = [jnp.zeros((BP, H), jnp.float32) for _ in range(num_layers)]
        y_acc = jnp.zeros((BP, out_dim), jnp.float32)

        for t in range(T):                          # static -> fully unrolled
            for l in range(num_layers):             # wavefront: l uses h[l-1] at step t
                if l == 0:
                    pre = gx0[t * BP:(t + 1) * BP, :]          # one aligned vreg slice
                else:
                    pre = jnp.dot(h[l - 1], wih_t[l],
                                  preferred_element_type=jnp.float32) + b_lyr[l]
                gates = pre + jnp.dot(h[l], whh_t[l],
                                      preferred_element_type=jnp.float32)  # (BP, 4H)

                # Single full-width EUP push for all four gate blocks.
                th = jnp.tanh(gates * gate_scale)
                i_g = 0.5 * (th[:, 0 * H:1 * H] + 1.0)
                f_g = 0.5 * (th[:, 1 * H:2 * H] + 1.0)
                g_g = th[:, 2 * H:3 * H]
                o_g = 0.5 * (th[:, 3 * H:4 * H] + 1.0)

                c[l] = f_g * c[l] + i_g * g_g
                h[l] = o_g * jnp.tanh(c[l])

            # fc head fused per timestep; only the (H, out_dim) slice for step t is
            # loaded from the ref, keeping vreg pressure low under full unroll.
            y_acc = y_acc + jnp.dot(h[num_layers - 1],
                                    wfc_t_ref[t * H:(t + 1) * H, :],
                                    preferred_element_type=jnp.float32)

        # TODO(synk): out_dim=12 < 128 lanes -> masked store; negligible at this size.
        y_ref[...] = y_acc + bfc_ref[...]

    return kernel


# ------------------------------ wrapper ------------------------------------- #

_VMEM = pl.BlockSpec(memory_space=pltpu.MemorySpace.VMEM)


def lstm_model_forward(x, kparams, seq_len, pred_len, hidden_size, n_features_out):
    """Replicates LSTM.forward: x (B, seq_len, D_in) -> (B, pred_len, n_features_out)."""
    B = x.shape[0]
    assert B <= BP, "this toy wrapper pads batch to 8; grid over batch tiles for larger B"
    T = seq_len
    H = hidden_size
    out_dim = pred_len * n_features_out
    num_layers = len(kparams["lstm_layers"])

    # Pad batch to one sublane group and flatten time-major: row index = t*BP + b.
    x_f32 = x.astype(jnp.float32)
    x_pad = jnp.pad(x_f32, ((0, BP - B), (0, 0), (0, 0)))
    x2d = jnp.transpose(x_pad, (1, 0, 2)).reshape(T * BP, -1)

    flat_weights = []
    for (wih_t, whh_t, b) in kparams["lstm_layers"]:
        flat_weights += [wih_t, whh_t, b]
    wfc_t, bfc = kparams["fc"]

    n_inputs = 1 + 3 * num_layers + 2
    kernel = make_fused_lstm_fc_kernel(T, H, num_layers, out_dim)

    y = pl.pallas_call(
        kernel,
        out_shape=jax.ShapeDtypeStruct((BP, out_dim), jnp.float32),
        in_specs=[_VMEM] * n_inputs,
        out_specs=_VMEM,
    )(x2d, *flat_weights, wfc_t, bfc)
    return y[:B].reshape(B, pred_len, n_features_out)


# --------------------------- parameter handling ------------------------------ #

def init_params(key, seq_len, pred_len, n_in, hidden, num_layers, n_out):
    """Raw PyTorch-layout params with U(-1/sqrt(H), 1/sqrt(H)) init (for reference)."""
    params = {"lstm_layers": []}
    bound = 1.0 / math.sqrt(hidden)
    for layer in range(num_layers):
        d_in = n_in if layer == 0 else hidden
        key, k1, k2, k3, k4 = jax.random.split(key, 5)
        wih = jax.random.uniform(k1, (4 * hidden, d_in), jnp.float32, -bound, bound)
        whh = jax.random.uniform(k2, (4 * hidden, hidden), jnp.float32, -bound, bound)
        bih = jax.random.uniform(k3, (4 * hidden,), jnp.float32, -bound, bound)
        bhh = jax.random.uniform(k4, (4 * hidden,), jnp.float32, -bound, bound)
        params["lstm_layers"].append((wih, whh, bih, bhh))
    fc_in = hidden * seq_len
    fc_out = pred_len * n_out
    fb = 1.0 / math.sqrt(fc_in)
    key, k1, k2 = jax.random.split(key, 3)
    w_fc = jax.random.uniform(k1, (fc_out, fc_in), jnp.float32, -fb, fb)
    b_fc = jax.random.uniform(k2, (fc_out,), jnp.float32, -fb, fb)
    params["fc"] = (w_fc, b_fc)
    return params


def prepare_kernel_params(params):
    """Pre-transpose weights / combine biases ONCE (model invariants, not per call)."""
    kparams = {"lstm_layers": []}
    for (wih, whh, bih, bhh) in params["lstm_layers"]:
        kparams["lstm_layers"].append(
            (jnp.asarray(wih.T), jnp.asarray(whh.T),
             (bih + bhh).reshape(1, -1)))
    w_fc, b_fc = params["fc"]
    kparams["fc"] = (jnp.asarray(w_fc.T), b_fc.reshape(1, -1))
    return kparams


# ---------------------------- pure-JAX reference ----------------------------- #

def reference_forward(x, params, seq_len, pred_len, hidden, n_out):
    B = x.shape[0]
    h_seq = x.astype(jnp.float32)
    for (wih, whh, bih, bhh) in params["lstm_layers"]:
        h = jnp.zeros((B, hidden), jnp.float32)
        c = jnp.zeros((B, hidden), jnp.float32)
        outs = []
        for t in range(seq_len):
            g = h_seq[:, t, :] @ wih.T + h @ whh.T + bih + bhh
            i = jax.nn.sigmoid(g[:, 0 * hidden:1 * hidden])
            f = jax.nn.sigmoid(g[:, 1 * hidden:2 * hidden])
            gg = jnp.tanh(g[:, 2 * hidden:3 * hidden])
            o = jax.nn.sigmoid(g[:, 3 * hidden:4 * hidden])
            c = f * c + i * gg
            h = o * jnp.tanh(c)
            outs.append(h)
        h_seq = jnp.stack(outs, axis=1)
    flat = h_seq.reshape(B, -1)
    w_fc, b_fc = params["fc"]
    return (flat @ w_fc.T + b_fc).reshape(B, pred_len, n_out)


# --------------------------------- main -------------------------------------- #

if __name__ == "__main__":
    B = 2
    seq_len = 8
    pred_len = 4
    n_features_in = 4
    hidden_size = 32
    num_layers = 2
    n_features_out = 3

    key = jax.random.PRNGKey(0)
    key, kx = jax.random.split(key)
    x = jax.random.normal(kx, (B, seq_len, n_features_in), jnp.float32)

    params = init_params(key, seq_len, pred_len, n_features_in,
                         hidden_size, num_layers, n_features_out)
    kparams = prepare_kernel_params(params)

    out = lstm_model_forward(x, kparams, seq_len, pred_len,
                             hidden_size, n_features_out)
    out = jax.block_until_ready(out)

    ref = reference_forward(x, params, seq_len, pred_len, hidden_size, n_features_out)
    assert out.shape == (B, pred_len, n_features_out), out.shape
    assert jnp.allclose(out, ref, atol=1e-4, rtol=1e-4), "mismatch vs pure-JAX reference"

    print("KERNEL_OK")
</pallas_src>

<mosaic_0001>
module attributes {stable_mosaic.version = 11 : i64} {
  func.func @kernel(%arg0: memref<64x4xf32, #tpu.memory_space<vmem>>, %arg1: memref<4x128xf32, #tpu.memory_space<vmem>>, %arg2: memref<32x128xf32, #tpu.memory_space<vmem>>, %arg3: memref<1x128xf32, #tpu.memory_space<vmem>>, %arg4: memref<32x128xf32, #tpu.memory_space<vmem>>, %arg5: memref<32x128xf32, #tpu.memory_space<vmem>>, %arg6: memref<1x128xf32, #tpu.memory_space<vmem>>, %arg7: memref<256x12xf32, #tpu.memory_space<vmem>>, %arg8: memref<1x12xf32, #tpu.memory_space<vmem>>, %arg9: memref<8x12xf32, #tpu.memory_space<vmem>>) attributes {dimension_semantics = [], scalar_prefetch = 0 : i64, scratch_operands = 0 : i64, tpu.core_type = #tpu.core_type<tc>} {
    %0 = tpu.iota {dimensions = array<i32: 1>} : vector<1x128xi32>
    %c64_i32 = arith.constant 64 : i32
    %1 = vector.broadcast %c64_i32 : i32 to vector<1x128xi32>
    %2 = arith.cmpi sge, %0, %1 : vector<1x128xi32>
    %c96_i32 = arith.constant 96 : i32
    %3 = vector.broadcast %c96_i32 : i32 to vector<1x128xi32>
    %4 = arith.cmpi slt, %0, %3 : vector<1x128xi32>
    %5 = arith.andi %2, %4 : vector<1x128xi1>
    %cst = arith.constant 1.000000e+00 : f32
    %cst_0 = arith.constant 5.000000e-01 : f32
    %6 = vector.broadcast %cst : f32 to vector<1x128xf32>
    %7 = vector.broadcast %cst_0 : f32 to vector<1x128xf32>
    %8 = arith.select %5, %6, %7 : vector<1x128xi1>, vector<1x128xf32>
    %c0 = arith.constant 0 : index
    %c0_1 = arith.constant 0 : index
    %9 = vector.load %arg0[%c0, %c0_1] : memref<64x4xf32, #tpu.memory_space<vmem>>, vector<64x4xf32>
    %c0_2 = arith.constant 0 : index
    %c0_3 = arith.constant 0 : index
    %10 = vector.load %arg1[%c0_2, %c0_3] : memref<4x128xf32, #tpu.memory_space<vmem>>, vector<4x128xf32>
    %cst_4 = arith.constant dense<0.000000e+00> : vector<64x128xf32>
    %11 = tpu.matmul %9, %10, %cst_4 {dimension_numbers = #tpu.dot_dimension_numbers<[1], [0], [0], [1], [0, 0, 1, 1], [], []>} : vector<64x4xf32>, vector<4x128xf32>, vector<64x128xf32> -> vector<64x128xf32>
    %c0_5 = arith.constant 0 : index
    %c0_6 = arith.constant 0 : index
    %12 = vector.load %arg3[%c0_5, %c0_6] : memref<1x128xf32, #tpu.memory_space<vmem>>, vector<1x128xf32>
    %13 = vector.broadcast %12 : vector<1x128xf32> to vector<64x128xf32>
    %14 = arith.addf %11, %13 : vector<64x128xf32>
    %c0_7 = arith.constant 0 : index
    %c0_8 = arith.constant 0 : index
    %15 = vector.load %arg2[%c0_7, %c0_8] : memref<32x128xf32, #tpu.memory_space<vmem>>, vector<32x128xf32>
    %c0_9 = arith.constant 0 : index
    %c0_10 = arith.constant 0 : index
    %16 = vector.load %arg5[%c0_9, %c0_10] : memref<32x128xf32, #tpu.memory_space<vmem>>, vector<32x128xf32>
    %c0_11 = arith.constant 0 : index
    %c0_12 = arith.constant 0 : index
    %17 = vector.load %arg4[%c0_11, %c0_12] : memref<32x128xf32, #tpu.memory_space<vmem>>, vector<32x128xf32>
    %c0_13 = arith.constant 0 : index
    %c0_14 = arith.constant 0 : index
    %18 = vector.load %arg6[%c0_13, %c0_14] : memref<1x128xf32, #tpu.memory_space<vmem>>, vector<1x128xf32>
    %cst_15 = arith.constant 0.000000e+00 : f32
    %19 = vector.broadcast %cst_15 : f32 to vector<8x32xf32>
    %cst_16 = arith.constant 0.000000e+00 : f32
    %20 = vector.broadcast %cst_16 : f32 to vector<8x32xf32>
    %cst_17 = arith.constant 0.000000e+00 : f32
    %21 = vector.broadcast %cst_17 : f32 to vector<8x32xf32>
    %cst_18 = arith.constant 0.000000e+00 : f32
    %22 = vector.broadcast %cst_18 : f32 to vector<8x32xf32>
    %cst_19 = arith.constant 0.000000e+00 : f32
    %23 = vector.broadcast %cst_19 : f32 to vector<8x12xf32>
    %24 = vector.extract_strided_slice %14 {offsets = [0, 0], sizes = [8, 128], strides = [1, 1]} : vector<64x128xf32> to vector<8x128xf32>
    %cst_20 = arith.constant dense<0.000000e+00> : vector<8x128xf32>
    %25 = tpu.matmul %19, %15, %cst_20 {dimension_numbers = #tpu.dot_dimension_numbers<[1], [0], [0], [1], [0, 0, 1, 1], [], []>} : vector<8x32xf32>, vector<32x128xf32>, vector<8x128xf32> -> vector<8x128xf32>
    %26 = arith.addf %24, %25 : vector<8x128xf32>
    %27 = vector.broadcast %8 : vector<1x128xf32> to vector<8x128xf32>
    %28 = arith.mulf %26, %27 : vector<8x128xf32>
    %29 = math.tanh %28 : vector<8x128xf32>
    %30 = vector.extract_strided_slice %29 {offsets = [0, 0], sizes = [8, 32], strides = [1, 1]} : vector<8x128xf32> to vector<8x32xf32>
    %cst_21 = arith.constant 1.000000e+00 : f32
    %31 = vector.broadcast %cst_21 : f32 to vector<8x32xf32>
    %32 = arith.addf %30, %31 : vector<8x32xf32>
    %cst_22 = arith.constant 5.000000e-01 : f32
    %33 = vector.broadcast %cst_22 : f32 to vector<8x32xf32>
    %34 = arith.mulf %33, %32 : vector<8x32xf32>
    %35 = vector.extract_strided_slice %29 {offsets = [0, 32], sizes = [8, 32], strides = [1, 1]} : vector<8x128xf32> to vector<8x32xf32>
    %cst_23 = arith.constant 1.000000e+00 : f32
    %36 = vector.broadcast %cst_23 : f32 to vector<8x32xf32>
    %37 = arith.addf %35, %36 : vector<8x32xf32>
    %cst_24 = arith.constant 5.000000e-01 : f32
    %38 = vector.broadcast %cst_24 : f32 to vector<8x32xf32>
    %39 = arith.mulf %38, %37 : vector<8x32xf32>
    %40 = vector.extract_strided_slice %29 {offsets = [0, 64], sizes = [8, 32], strides = [1, 1]} : vector<8x128xf32> to vector<8x32xf32>
    %41 = vector.extract_strided_slice %29 {offsets = [0, 96], sizes = [8, 32], strides = [1, 1]} : vector<8x128xf32> to vector<8x32xf32>
    %cst_25 = arith.constant 1.000000e+00 : f32
    %42 = vector.broadcast %cst_25 : f32 to vector<8x32xf32>
    %43 = arith.addf %41, %42 : vector<8x32xf32>
    %cst_26 = arith.constant 5.000000e-01 : f32
    %44 = vector.broadcast %cst_26 : f32 to vector<8x32xf32>
    %45 = arith.mulf %44, %43 : vector<8x32xf32>
    %46 = arith.mulf %39, %21 : vector<8x32xf32>
    %47 = arith.mulf %34, %40 : vector<8x32xf32>
    %48 = arith.addf %46, %47 : vector<8x32xf32>
    %49 = math.tanh %48 : vector<8x32xf32>
    %50 = arith.mulf %45, %49 : vector<8x32xf32>
    %cst_27 = arith.constant dense<0.000000e+00> : vector<8x128xf32>
    %51 = tpu.matmul %50, %17, %cst_27 {dimension_numbers = #tpu.dot_dimension_numbers<[1], [0], [0], [1], [0, 0, 1, 1], [], []>} : vector<8x32xf32>, vector<32x128xf32>, vector<8x128xf32> -> vector<8x128xf32>
    %52 = vector.broadcast %18 : vector<1x128xf32> to vector<8x128xf32>
    %53 = arith.addf %51, %52 : vector<8x128xf32>
    %cst_28 = arith.constant dense<0.000000e+00> : vector<8x128xf32>
    %54 = tpu.matmul %20, %16, %cst_28 {dimension_numbers = #tpu.dot_dimension_numbers<[1], [0], [0], [1], [0, 0, 1, 1], [], []>} : vector<8x32xf32>, vector<32x128xf32>, vector<8x128xf32> -> vector<8x128xf32>
    %55 = arith.addf %53, %54 : vector<8x128xf32>
    %56 = vector.broadcast %8 : vector<1x128xf32> to vector<8x128xf32>
    %57 = arith.mulf %55, %56 : vector<8x128xf32>
    %58 = math.tanh %57 : vector<8x128xf32>
    %59 = vector.extract_strided_slice %58 {offsets = [0, 0], sizes = [8, 32], strides = [1, 1]} : vector<8x128xf32> to vector<8x32xf32>
    %cst_29 = arith.constant 1.000000e+00 : f32
    %60 = vector.broadcast %cst_29 : f32 to vector<8x32xf32>
    %61 = arith.addf %59, %60 : vector<8x32xf32>
    %cst_30 = arith.constant 5.000000e-01 : f32
    %62 = vector.broadcast %cst_30 : f32 to vector<8x32xf32>
    %63 = arith.mulf %62, %61 : vector<8x32xf32>
    %64 = vector.extract_strided_slice %58 {offsets = [0, 32], sizes = [8, 32], strides = [1, 1]} : vector<8x128xf32> to vector<8x32xf32>
    %cst_31 = arith.constant 1.000000e+00 : f32
    %65 = vector.broadcast %cst_31 : f32 to vector<8x32xf32>
    %66 = arith.addf %64, %65 : vector<8x32xf32>
    %cst_32 = arith.constant 5.000000e-01 : f32
    %67 = vector.broadcast %cst_32 : f32 to vector<8x32xf32>
    %68 = arith.mulf %67, %66 : vector<8x32xf32>
    %69 = vector.extract_strided_slice %58 {offsets = [0, 64], sizes = [8, 32], strides = [1, 1]} : vector<8x128xf32> to vector<8x32xf32>
    %70 = vector.extract_strided_slice %58 {offsets = [0, 96], sizes = [8, 32], strides = [1, 1]} : vector<8x128xf32> to vector<8x32xf32>
    %cst_33 = arith.constant 1.000000e+00 : f32
    %71 = vector.broadcast %cst_33 : f32 to vector<8x32xf32>
    %72 = arith.addf %70, %71 : vector<8x32xf32>
    %cst_34 = arith.constant 5.000000e-01 : f32
    %73 = vector.broadcast %cst_34 : f32 to vector<8x32xf32>
    %74 = arith.mulf %73, %72 : vector<8x32xf32>
    %75 = arith.mulf %68, %22 : vector<8x32xf32>
    %76 = arith.mulf %63, %69 : vector<8x32xf32>
    %77 = arith.addf %75, %76 : vector<8x32xf32>
    %78 = math.tanh %77 : vector<8x32xf32>
    %79 = arith.mulf %74, %78 : vector<8x32xf32>
    %c0_35 = arith.constant 0 : index
    %c0_36 = arith.constant 0 : index
    %80 = vector.load %arg7[%c0_35, %c0_36] : memref<256x12xf32, #tpu.memory_space<vmem>>, vector<32x12xf32>
    %cst_37 = arith.constant dense<0.000000e+00> : vector<8x12xf32>
    %81 = tpu.matmul %79, %80, %cst_37 {dimension_numbers = #tpu.dot_dimension_numbers<[1], [0], [0], [1], [0, 0, 1, 1], [], []>} : vector<8x32xf32>, vector<32x12xf32>, vector<8x12xf32> -> vector<8x12xf32>
    %82 = arith.addf %23, %81 : vector<8x12xf32>
    %83 = vector.extract_strided_slice %14 {offsets = [8, 0], sizes = [8, 128], strides = [1, 1]} : vector<64x128xf32> to vector<8x128xf32>
    %cst_38 = arith.constant dense<0.000000e+00> : vector<8x128xf32>
    %84 = tpu.matmul %50, %15, %cst_38 {dimension_numbers = #tpu.dot_dimension_numbers<[1], [0], [0], [1], [0, 0, 1, 1], [], []>} : vector<8x32xf32>, vector<32x128xf32>, vector<8x128xf32> -> vector<8x128xf32>
    %85 = arith.addf %83, %84 : vector<8x128xf32>
    %86 = vector.broadcast %8 : vector<1x128xf32> to vector<8x128xf32>
    %87 = arith.mulf %85, %86 : vector<8x128xf32>
    %88 = math.tanh %87 : vector<8x128xf32>
    %89 = vector.extract_strided_slice %88 {offsets = [0, 0], sizes = [8, 32], strides = [1, 1]} : vector<8x128xf32> to vector<8x32xf32>
    %cst_39 = arith.constant 1.000000e+00 : f32
    %90 = vector.broadcast %cst_39 : f32 to vector<8x32xf32>
    %91 = arith.addf %89, %90 : vector<8x32xf32>
    %cst_40 = arith.constant 5.000000e-01 : f32
    %92 = vector.broadcast %cst_40 : f32 to vector<8x32xf32>
    %93 = arith.mulf %92, %91 : vector<8x32xf32>
    %94 = vector.extract_strided_slice %88 {offsets = [0, 32], sizes = [8, 32], strides = [1, 1]} : vector<8x128xf32> to vector<8x32xf32>
    %cst_41 = arith.constant 1.000000e+00 : f32
    %95 = vector.broadcast %cst_41 : f32 to vector<8x32xf32>
    %96 = arith.addf %94, %95 : vector<8x32xf32>
    %cst_42 = arith.constant 5.000000e-01 : f32
    %97 = vector.broadcast %cst_42 : f32 to vector<8x32xf32>
    %98 = arith.mulf %97, %96 : vector<8x32xf32>
    %99 = vector.extract_strided_slice %88 {offsets = [0, 64], sizes = [8, 32], strides = [1, 1]} : vector<8x128xf32> to vector<8x32xf32>
    %100 = vector.extract_strided_slice %88 {offsets = [0, 96], sizes = [8, 32], strides = [1, 1]} : vector<8x128xf32> to vector<8x32xf32>
    %cst_43 = arith.constant 1.000000e+00 : f32
    %101 = vector.broadcast %cst_43 : f32 to vector<8x32xf32>
    %102 = arith.addf %100, %101 : vector<8x32xf32>
    %cst_44 = arith.constant 5.000000e-01 : f32
    %103 = vector.broadcast %cst_44 : f32 to vector<8x32xf32>
    %104 = arith.mulf %103, %102 : vector<8x32xf32>
    %105 = arith.mulf %98, %48 : vector<8x32xf32>
    %106 = arith.mulf %93, %99 : vector<8x32xf32>
    %107 = arith.addf %105, %106 : vector<8x32xf32>
    %108 = math.tanh %107 : vector<8x32xf32>
    %109 = arith.mulf %104, %108 : vector<8x32xf32>
    %cst_45 = arith.constant dense<0.000000e+00> : vector<8x128xf32>
    %110 = tpu.matmul %109, %17, %cst_45 {dimension_numbers = #tpu.dot_dimension_numbers<[1], [0], [0], [1], [0, 0, 1, 1], [], []>} : vector<8x32xf32>, vector<32x128xf32>, vector<8x128xf32> -> vector<8x128xf32>
    %111 = vector.broadcast %18 : vector<1x128xf32> to vector<8x128xf32>
    %112 = arith.addf %110, %111 : vector<8x128xf32>
    %cst_46 = arith.constant dense<0.000000e+00> : vector<8x128xf32>
    %113 = tpu.matmul %79, %16, %cst_46 {dimension_numbers = #tpu.dot_dimension_numbers<[1], [0], [0], [1], [0, 0, 1, 1], [], []>} : vector<8x32xf32>, vector<32x128xf32>, vector<8x128xf32> -> vector<8x128xf32>
    %114 = arith.addf %112, %113 : vector<8x128xf32>
    %115 = vector.broadcast %8 : vector<1x128xf32> to vector<8x128xf32>
    %116 = arith.mulf %114, %115 : vector<8x128xf32>
    %117 = math.tanh %116 : vector<8x128xf32>
    %118 = vector.extract_strided_slice %117 {offsets = [0, 0], sizes = [8, 32], strides = [1, 1]} : vector<8x128xf32> to vector<8x32xf32>
    %cst_47 = arith.constant 1.000000e+00 : f32
    %119 = vector.broadcast %cst_47 : f32 to vector<8x32xf32>
    %120 = arith.addf %118, %119 : vector<8x32xf32>
    %cst_48 = arith.constant 5.000000e-01 : f32
    %121 = vector.broadcast %cst_48 : f32 to vector<8x32xf32>
    %122 = arith.mulf %121, %120 : vector<8x32xf32>
    %123 = vector.extract_strided_slice %117 {offsets = [0, 32], sizes = [8, 32], strides = [1, 1]} : vector<8x128xf32> to vector<8x32xf32>
    %cst_49 = arith.constant 1.000000e+00 : f32
    %124 = vector.broadcast %cst_49 : f32 to vector<8x32xf32>
    %125 = arith.addf %123, %124 : vector<8x32xf32>
    %cst_50 = arith.constant 5.000000e-01 : f32
    %126 = vector.broadcast %cst_50 : f32 to vector<8x32xf32>
    %127 = arith.mulf %126, %125 : vector<8x32xf32>
    %128 = vector.extract_strided_slice %117 {offsets = [0, 64], sizes = [8, 32], strides = [1, 1]} : vector<8x128xf32> to vector<8x32xf32>
    %129 = vector.extract_strided_slice %117 {offsets = [0, 96], sizes = [8, 32], strides = [1, 1]} : vector<8x128xf32> to vector<8x32xf32>
    %cst_51 = arith.constant 1.000000e+00 : f32
    %130 = vector.broadcast %cst_51 : f32 to vector<8x32xf32>
    %131 = arith.addf %129, %130 : vector<8x32xf32>
    %cst_52 = arith.constant 5.000000e-01 : f32
    %132 = vector.broadcast %cst_52 : f32 to vector<8x32xf32>
    %133 = arith.mulf %132, %131 : vector<8x32xf32>
    %134 = arith.mulf %127, %77 : vector<8x32xf32>
    %135 = arith.mulf %122, %128 : vector<8x32xf32>
    %136 = arith.addf %134, %135 : vector<8x32xf32>
    %137 = math.tanh %136 : vector<8x32xf32>
    %138 = arith.mulf %133, %137 : vector<8x32xf32>
    %c32 = arith.constant 32 : index
    %c0_53 = arith.constant 0 : index
    %139 = vector.load %arg7[%c32, %c0_53] : memref<256x12xf32, #tpu.memory_space<vmem>>, vector<32x12xf32>
    %cst_54 = arith.constant dense<0.000000e+00> : vector<8x12xf32>
    %140 = tpu.matmul %138, %139, %cst_54 {dimension_numbers = #tpu.dot_dimension_numbers<[1], [0], [0], [1], [0, 0, 1, 1], [], []>} : vector<8x32xf32>, vector<32x12xf32>, vector<8x12xf32> -> vector<8x12xf32>
    %141 = arith.addf %82, %140 : vector<8x12xf32>
    %142 = vector.extract_strided_slice %14 {offsets = [16, 0], sizes = [8, 128], strides = [1, 1]} : vector<64x128xf32> to vector<8x128xf32>
    %cst_55 = arith.constant dense<0.000000e+00> : vector<8x128xf32>
    %143 = tpu.matmul %109, %15, %cst_55 {dimension_numbers = #tpu.dot_dimension_numbers<[1], [0], [0], [1], [0, 0, 1, 1], [], []>} : vector<8x32xf32>, vector<32x128xf32>, vector<8x128xf32> -> vector<8x128xf32>
    %144 = arith.addf %142, %143 : vector<8x128xf32>
    %145 = vector.broadcast %8 : vector<1x128xf32> to vector<8x128xf32>
    %146 = arith.mulf %144, %145 : vector<8x128xf32>
    %147 = math.tanh %146 : vector<8x128xf32>
    %148 = vector.extract_strided_slice %147 {offsets = [0, 0], sizes = [8, 32], strides = [1, 1]} : vector<8x128xf32> to vector<8x32xf32>
    %cst_56 = arith.constant 1.000000e+00 : f32
    %149 = vector.broadcast %cst_56 : f32 to vector<8x32xf32>
    %150 = arith.addf %148, %149 : vector<8x32xf32>
    %cst_57 = arith.constant 5.000000e-01 : f32
    %151 = vector.broadcast %cst_57 : f32 to vector<8x32xf32>
    %152 = arith.mulf %151, %150 : vector<8x32xf32>
    %153 = vector.extract_strided_slice %147 {offsets = [0, 32], sizes = [8, 32], strides = [1, 1]} : vector<8x128xf32> to vector<8x32xf32>
    %cst_58 = arith.constant 1.000000e+00 : f32
    %154 = vector.broadcast %cst_58 : f32 to vector<8x32xf32>
    %155 = arith.addf %153, %154 : vector<8x32xf32>
    %cst_59 = arith.constant 5.000000e-01 : f32
    %156 = vector.broadcast %cst_59 : f32 to vector<8x32xf32>
    %157 = arith.mulf %156, %155 : vector<8x32xf32>
    %158 = vector.extract_strided_slice %147 {offsets = [0, 64], sizes = [8, 32], strides = [1, 1]} : vector<8x128xf32> to vector<8x32xf32>
    %159 = vector.extract_strided_slice %147 {offsets = [0, 96], sizes = [8, 32], strides = [1, 1]} : vector<8x128xf32> to vector<8x32xf32>
    %cst_60 = arith.constant 1.000000e+00 : f32
    %160 = vector.broadcast %cst_60 : f32 to vector<8x32xf32>
    %161 = arith.addf %159, %160 : vector<8x32xf32>
    %cst_61 = arith.constant 5.000000e-01 : f32
    %162 = vector.broadcast %cst_61 : f32 to vector<8x32xf32>
    %163 = arith.mulf %162, %161 : vector<8x32xf32>
    %164 = arith.mulf %157, %107 : vector<8x32xf32>
    %165 = arith.mulf %152, %158 : vector<8x32xf32>
    %166 = arith.addf %164, %165 : vector<8x32xf32>
    %167 = math.tanh %166 : vector<8x32xf32>
    %168 = arith.mulf %163, %167 : vector<8x32xf32>
    %cst_62 = arith.constant dense<0.000000e+00> : vector<8x128xf32>
    %169 = tpu.matmul %168, %17, %cst_62 {dimension_numbers = #tpu.dot_dimension_numbers<[1], [0], [0], [1], [0, 0, 1, 1], [], []>} : vector<8x32xf32>, vector<32x128xf32>, vector<8x128xf32> -> vector<8x128xf32>
    %170 = vector.broadcast %18 : vector<1x128xf32> to vector<8x128xf32>
    %171 = arith.addf %169, %170 : vector<8x128xf32>
    %cst_63 = arith.constant dense<0.000000e+00> : vector<8x128xf32>
    %172 = tpu.matmul %138, %16, %cst_63 {dimension_numbers = #tpu.dot_dimension_numbers<[1], [0], [0], [1], [0, 0, 1, 1], [], []>} : vector<8x32xf32>, vector<32x128xf32>, vector<8x128xf32> -> vector<8x128xf32>
    %173 = arith.addf %171, %172 : vector<8x128xf32>
    %174 = vector.broadcast %8 : vector<1x128xf32> to vector<8x128xf32>
    %175 = arith.mulf %173, %174 : vector<8x128xf32>
    %176 = math.tanh %175 : vector<8x128xf32>
    %177 = vector.extract_strided_slice %176 {offsets = [0, 0], sizes = [8, 32], strides = [1, 1]} : vector<8x128xf32> to vector<8x32xf32>
    %cst_64 = arith.constant 1.000000e+00 : f32
    %178 = vector.broadcast %cst_64 : f32 to vector<8x32xf32>
    %179 = arith.addf %177, %178 : vector<8x32xf32>
    %cst_65 = arith.constant 5.000000e-01 : f32
    %180 = vector.broadcast %cst_65 : f32 to vector<8x32xf32>
    %181 = arith.mulf %180, %179 : vector<8x32xf32>
    %182 = vector.extract_strided_slice %176 {offsets = [0, 32], sizes = [8, 32], strides = [1, 1]} : vector<8x128xf32> to vector<8x32xf32>
    %cst_66 = arith.constant 1.000000e+00 : f32
    %183 = vector.broadcast %cst_66 : f32 to vector<8x32xf32>
    %184 = arith.addf %182, %183 : vector<8x32xf32>
    %cst_67 = arith.constant 5.000000e-01 : f32
    %185 = vector.broadcast %cst_67 : f32 to vector<8x32xf32>
    %186 = arith.mulf %185, %184 : vector<8x32xf32>
    %187 = vector.extract_strided_slice %176 {offsets = [0, 64], sizes = [8, 32], strides = [1, 1]} : vector<8x128xf32> to vector<8x32xf32>
    %188 = vector.extract_strided_slice %176 {offsets = [0, 96], sizes = [8, 32], strides = [1, 1]} : vector<8x128xf32> to vector<8x32xf32>
    %cst_68 = arith.constant 1.000000e+00 : f32
    %189 = vector.broadcast %cst_68 : f32 to vector<8x32xf32>
    %190 = arith.addf %188, %189 : vector<8x32xf32>
    %cst_69 = arith.constant 5.000000e-01 : f32
    %191 = vector.broadcast %cst_69 : f32 to vector<8x32xf32>
    %192 = arith.mulf %191, %190 : vector<8x32xf32>
    %193 = arith.mulf %186, %136 : vector<8x32xf32>
    %194 = arith.mulf %181, %187 : vector<8x32xf32>
    %195 = arith.addf %193, %194 : vector<8x32xf32>
    %196 = math.tanh %195 : vector<8x32xf32>
    %197 = arith.mulf %192, %196 : vector<8x32xf32>
    %c64 = arith.constant 64 : index
    %c0_70 = arith.constant 0 : index
    %198 = vector.load %arg7[%c64, %c0_70] : memref<256x12xf32, #tpu.memory_space<vmem>>, vector<32x12xf32>
    %cst_71 = arith.constant dense<0.000000e+00> : vector<8x12xf32>
    %199 = tpu.matmul %197, %198, %cst_71 {dimension_numbers = #tpu.dot_dimension_numbers<[1], [0], [0], [1], [0, 0, 1, 1], [], []>} : vector<8x32xf32>, vector<32x12xf32>, vector<8x12xf32> -> vector<8x12xf32>
    %200 = arith.addf %141, %199 : vector<8x12xf32>
    %201 = vector.extract_strided_slice %14 {offsets = [24, 0], sizes = [8, 128], strides = [1, 1]} : vector<64x128xf32> to vector<8x128xf32>
    %cst_72 = arith.constant dense<0.000000e+00> : vector<8x128xf32>
    %202 = tpu.matmul %168, %15, %cst_72 {dimension_numbers = #tpu.dot_dimension_numbers<[1], [0], [0], [1], [0, 0, 1, 1], [], []>} : vector<8x32xf32>, vector<32x128xf32>, vector<8x128xf32> -> vector<8x128xf32>
    %203 = arith.addf %201, %202 : vector<8x128xf32>
    %204 = vector.broadcast %8 : vector<1x128xf32> to vector<8x128xf32>
    %205 = arith.mulf %203, %204 : vector<8x128xf32>
    %206 = math.tanh %205 : vector<8x128xf32>
    %207 = vector.extract_strided_slice %206 {offsets = [0, 0], sizes = [8, 32], strides = [1, 1]} : vector<8x128xf32> to vector<8x32xf32>
    %cst_73 = arith.constant 1.000000e+00 : f32
    %208 = vector.broadcast %cst_73 : f32 to vector<8x32xf32>
    %209 = arith.addf %207, %208 : vector<8x32xf32>
    %cst_74 = arith.constant 5.000000e-01 : f32
    %210 = vector.broadcast %cst_74 : f32 to vector<8x32xf32>
    %211 = arith.mulf %210, %209 : vector<8x32xf32>
    %212 = vector.extract_strided_slice %206 {offsets = [0, 32], sizes = [8, 32], strides = [1, 1]} : vector<8x128xf32> to vector<8x32xf32>
    %cst_75 = arith.constant 1.000000e+00 : f32
    %213 = vector.broadcast %cst_75 : f32 to vector<8x32xf32>
    %214 = arith.addf %212, %213 : vector<8x32xf32>
    %cst_76 = arith.constant 5.000000e-01 : f32
    %215 = vector.broadcast %cst_76 : f32 to vector<8x32xf32>
    %216 = arith.mulf %215, %214 : vector<8x32xf32>
    %217 = vector.extract_strided_slice %206 {offsets = [0, 64], sizes = [8, 32], strides = [1, 1]} : vector<8x128xf32> to vector<8x32xf32>
    %218 = vector.extract_strided_slice %206 {offsets = [0, 96], sizes = [8, 32], strides = [1, 1]} : vector<8x128xf32> to vector<8x32xf32>
    %cst_77 = arith.constant 1.000000e+00 : f32
    %219 = vector.broadcast %cst_77 : f32 to vector<8x32xf32>
    %220 = arith.addf %218, %219 : vector<8x32xf32>
    %cst_78 = arith.constant 5.000000e-01 : f32
    %221 = vector.broadcast %cst_78 : f32 to vector<8x32xf32>
    %222 = arith.mulf %221, %220 : vector<8x32xf32>
    %223 = arith.mulf %216, %166 : vector<8x32xf32>
    %224 = arith.mulf %211, %217 : vector<8x32xf32>
    %225 = arith.addf %223, %224 : vector<8x32xf32>
    %226 = math.tanh %225 : vector<8x32xf32>
    %227 = arith.mulf %222, %226 : vector<8x32xf32>
    %cst_79 = arith.constant dense<0.000000e+00> : vector<8x128xf32>
    %228 = tpu.matmul %227, %17, %cst_79 {dimension_numbers = #tpu.dot_dimension_numbers<[1], [0], [0], [1], [0, 0, 1, 1], [], []>} : vector<8x32xf32>, vector<32x128xf32>, vector<8x128xf32> -> vector<8x128xf32>
    %229 = vector.broadcast %18 : vector<1x128xf32> to vector<8x128xf32>
    %230 = arith.addf %228, %229 : vector<8x128xf32>
    %cst_80 = arith.constant dense<0.000000e+00> : vector<8x128xf32>
    %231 = tpu.matmul %197, %16, %cst_80 {dimension_numbers = #tpu.dot_dimension_numbers<[1], [0], [0], [1], [0, 0, 1, 1], [], []>} : vector<8x32xf32>, vector<32x128xf32>, vector<8x128xf32> -> vector<8x128xf32>
    %232 = arith.addf %230, %231 : vector<8x128xf32>
    %233 = vector.broadcast %8 : vector<1x128xf32> to vector<8x128xf32>
    %234 = arith.mulf %232, %233 : vector<8x128xf32>
    %235 = math.tanh %234 : vector<8x128xf32>
    %236 = vector.extract_strided_slice %235 {offsets = [0, 0], sizes = [8, 32], strides = [1, 1]} : vector<8x128xf32> to vector<8x32xf32>
    %cst_81 = arith.constant 1.000000e+00 : f32
    %237 = vector.broadcast %cst_81 : f32 to vector<8x32xf32>
    %238 = arith.addf %236, %237 : vector<8x32xf32>
    %cst_82 = arith.constant 5.000000e-01 : f32
    %239 = vector.broadcast %cst_82 : f32 to vector<8x32xf32>
    %240 = arith.mulf %239, %238 : vector<8x32xf32>
    %241 = vector.extract_strided_slice %235 {offsets = [0, 32], sizes = [8, 32], strides = [1, 1]} : vector<8x128xf32> to vector<8x32xf32>
    %cst_83 = arith.constant 1.000000e+00 : f32
    %242 = vector.broadcast %cst_83 : f32 to vector<8x32xf32>
    %243 = arith.addf %241, %242 : vector<8x32xf32>
    %cst_84 = arith.constant 5.000000e-01 : f32
    %244 = vector.broadcast %cst_84 : f32 to vector<8x32xf32>
    %245 = arith.mulf %244, %243 : vector<8x32xf32>
    %246 = vector.extract_strided_slice %235 {offsets = [0, 64], sizes = [8, 32], strides = [1, 1]} : vector<8x128xf32> to vector<8x32xf32>
    %247 = vector.extract_strided_slice %235 {offsets = [0, 96], sizes = [8, 32], strides = [1, 1]} : vector<8x128xf32> to vector<8x32xf32>
    %cst_85 = arith.constant 1.000000e+00 : f32
    %248 = vector.broadcast %cst_85 : f32 to vector<8x32xf32>
    %249 = arith.addf %247, %248 : vector<8x32xf32>
    %cst_86 = arith.constant 5.000000e-01 : f32
    %250 = vector.broadcast %cst_86 : f32 to vector<8x32xf32>
    %251 = arith.mulf %250, %249 : vector<8x32xf32>
    %252 = arith.mulf %245, %195 : vector<8x32xf32>
    %253 = arith.mulf %240, %246 : vector<8x32xf32>
    %254 = arith.addf %252, %253 : vector<8x32xf32>
    %255 = math.tanh %254 : vector<8x32xf32>
    %256 = arith.mulf %251, %255 : vector<8x32xf32>
    %c96 = arith.constant 96 : index
    %c0_87 = arith.constant 0 : index
    %257 = vector.load %arg7[%c96, %c0_87] : memref<256x12xf32, #tpu.memory_space<vmem>>, vector<32x12xf32>
    %cst_88 = arith.constant dense<0.000000e+00> : vector<8x12xf32>
    %258 = tpu.matmul %256, %257, %cst_88 {dimension_numbers = #tpu.dot_dimension_numbers<[1], [0], [0], [1], [0, 0, 1, 1], [], []>} : vector<8x32xf32>, vector<32x12xf32>, vector<8x12xf32> -> vector<8x12xf32>
    %259 = arith.addf %200, %258 : vector<8x12xf32>
    %260 = vector.extract_strided_slice %14 {offsets = [32, 0], sizes = [8, 128], strides = [1, 1]} : vector<64x128xf32> to vector<8x128xf32>
    %cst_89 = arith.constant dense<0.000000e+00> : vector<8x128xf32>
    %261 = tpu.matmul %227, %15, %cst_89 {dimension_numbers = #tpu.dot_dimension_numbers<[1], [0], [0], [1], [0, 0, 1, 1], [], []>} : vector<8x32xf32>, vector<32x128xf32>, vector<8x128xf32> -> vector<8x128xf32>
    %262 = arith.addf %260, %261 : vector<8x128xf32>
    %263 = vector.broadcast %8 : vector<1x128xf32> to vector<8x128xf32>
    %264 = arith.mulf %262, %263 : vector<8x128xf32>
    %265 = math.tanh %264 : vector<8x128xf32>
    %266 = vector.extract_strided_slice %265 {offsets = [0, 0], sizes = [8, 32], strides = [1, 1]} : vector<8x128xf32> to vector<8x32xf32>
    %cst_90 = arith.constant 1.000000e+00 : f32
    %267 = vector.broadcast %cst_90 : f32 to vector<8x32xf32>
    %268 = arith.addf %266, %267 : vector<8x32xf32>
    %cst_91 = arith.constant 5.000000e-01 : f32
    %269 = vector.broadcast %cst_91 : f32 to vector<8x32xf32>
    %270 = arith.mulf %269, %268 : vector<8x32xf32>
    %271 = vector.extract_strided_slice %265 {offsets = [0, 32], sizes = [8, 32], strides = [1, 1]} : vector<8x128xf32> to vector<8x32xf32>
    %cst_92 = arith.constant 1.000000e+00 : f32
    %272 = vector.broadcast %cst_92 : f32 to vector<8x32xf32>
    %273 = arith.addf %271, %272 : vector<8x32xf32>
    %cst_93 = arith.constant 5.000000e-01 : f32
    %274 = vector.broadcast %cst_93 : f32 to vector<8x32xf32>
    %275 = arith.mulf %274, %273 : vector<8x32xf32>
    %276 = vector.extract_strided_slice %265 {offsets = [0, 64], sizes = [8, 32], strides = [1, 1]} : vector<8x128xf32> to vector<8x32xf32>
    %277 = vector.extract_strided_slice %265 {offsets = [0, 96], sizes = [8, 32], strides = [1, 1]} : vector<8x128xf32> to vector<8x32xf32>
    %cst_94 = arith.constant 1.000000e+00 : f32
    %278 = vector.broadcast %cst_94 : f32 to vector<8x32xf32>
    %279 = arith.addf %277, %278 : vector<8x32xf32>
    %cst_95 = arith.constant 5.000000e-01 : f32
    %280 = vector.broadcast %cst_95 : f32 to vector<8x32xf32>
    %281 = arith.mulf %280, %279 : vector<8x32xf32>
    %282 = arith.mulf %275, %225 : vector<8x32xf32>
    %283 = arith.mulf %270, %276 : vector<8x32xf32>
    %284 = arith.addf %282, %283 : vector<8x32xf32>
    %285 = math.tanh %284 : vector<8x32xf32>
    %286 = arith.mulf %281, %285 : vector<8x32xf32>
    %cst_96 = arith.constant dense<0.000000e+00> : vector<8x128xf32>
    %287 = tpu.matmul %286, %17, %cst_96 {dimension_numbers = #tpu.dot_dimension_numbers<[1], [0], [0], [1], [0, 0, 1, 1], [], []>} : vector<8x32xf32>, vector<32x128xf32>, vector<8x128xf32> -> vector<8x128xf32>
    %288 = vector.broadcast %18 : vector<1x128xf32> to vector<8x128xf32>
    %289 = arith.addf %287, %288 : vector<8x128xf32>
    %cst_97 = arith.constant dense<0.000000e+00> : vector<8x128xf32>
    %290 = tpu.matmul %256, %16, %cst_97 {dimension_numbers = #tpu.dot_dimension_numbers<[1], [0], [0], [1], [0, 0, 1, 1], [], []>} : vector<8x32xf32>, vector<32x128xf32>, vector<8x128xf32> -> vector<8x128xf32>
    %291 = arith.addf %289, %290 : vector<8x128xf32>
    %292 = vector.broadcast %8 : vector<1x128xf32> to vector<8x128xf32>
    %293 = arith.mulf %291, %292 : vector<8x128xf32>
    %294 = math.tanh %293 : vector<8x128xf32>
    %295 = vector.extract_strided_slice %294 {offsets = [0, 0], sizes = [8, 32], strides = [1, 1]} : vector<8x128xf32> to vector<8x32xf32>
    %cst_98 = arith.constant 1.000000e+00 : f32
    %296 = vector.broadcast %cst_98 : f32 to vector<8x32xf32>
    %297 = arith.addf %295, %296 : vector<8x32xf32>
    %cst_99 = arith.constant 5.000000e-01 : f32
    %298 = vector.broadcast %cst_99 : f32 to vector<8x32xf32>
    %299 = arith.mulf %298, %297 : vector<8x32xf32>
    %300 = vector.extract_strided_slice %294 {offsets = [0, 32], sizes = [8, 32], strides = [1, 1]} : vector<8x128xf32> to vector<8x32xf32>
    %cst_100 = arith.constant 1.000000e+00 : f32
    %301 = vector.broadcast %cst_100 : f32 to vector<8x32xf32>
    %302 = arith.addf %300, %301 : vector<8x32xf32>
    %cst_101 = arith.constant 5.000000e-01 : f32
    %303 = vector.broadcast %cst_101 : f32 to vector<8x32xf32>
    %304 = arith.mulf %303, %302 : vector<8x32xf32>
    %305 = vector.extract_strided_slice %294 {offsets = [0, 64], sizes = [8, 32], strides = [1, 1]} : vector<8x128xf32> to vector<8x32xf32>
    %306 = vector.extract_strided_slice %294 {offsets = [0, 96], sizes = [8, 32], strides = [1, 1]} : vector<8x128xf32> to vector<8x32xf32>
    %cst_102 = arith.constant 1.000000e+00 : f32
    %307 = vector.broadcast %cst_102 : f32 to vector<8x32xf32>
    %308 = arith.addf %306, %307 : vector<8x32xf32>
    %cst_103 = arith.constant 5.000000e-01 : f32
    %309 = vector.broadcast %cst_103 : f32 to vector<8x32xf32>
    %310 = arith.mulf %309, %308 : vector<8x32xf32>
    %311 = arith.mulf %304, %254 : vector<8x32xf32>
    %312 = arith.mulf %299, %305 : vector<8x32xf32>
    %313 = arith.addf %311, %312 : vector<8x32xf32>
    %314 = math.tanh %313 : vector<8x32xf32>
    %315 = arith.mulf %310, %314 : vector<8x32xf32>
    %c128 = arith.constant 128 : index
    %c0_104 = arith.constant 0 : index
    %316 = vector.load %arg7[%c128, %c0_104] : memref<256x12xf32, #tpu.memory_space<vmem>>, vector<32x12xf32>
    %cst_105 = arith.constant dense<0.000000e+00> : vector<8x12xf32>
    %317 = tpu.matmul %315, %316, %cst_105 {dimension_numbers = #tpu.dot_dimension_numbers<[1], [0], [0], [1], [0, 0, 1, 1], [], []>} : vector<8x32xf32>, vector<32x12xf32>, vector<8x12xf32> -> vector<8x12xf32>
    %318 = arith.addf %259, %317 : vector<8x12xf32>
    %319 = vector.extract_strided_slice %14 {offsets = [40, 0], sizes = [8, 128], strides = [1, 1]} : vector<64x128xf32> to vector<8x128xf32>
    %cst_106 = arith.constant dense<0.000000e+00> : vector<8x128xf32>
    %320 = tpu.matmul %286, %15, %cst_106 {dimension_numbers = #tpu.dot_dimension_numbers<[1], [0], [0], [1], [0, 0, 1, 1], [], []>} : vector<8x32xf32>, vector<32x128xf32>, vector<8x128xf32> -> vector<8x128xf32>
    %321 = arith.addf %319, %320 : vector<8x128xf32>
    %322 = vector.broadcast %8 : vector<1x128xf32> to vector<8x128xf32>
    %323 = arith.mulf %321, %322 : vector<8x128xf32>
    %324 = math.tanh %323 : vector<8x128xf32>
    %325 = vector.extract_strided_slice %324 {offsets = [0, 0], sizes = [8, 32], strides = [1, 1]} : vector<8x128xf32> to vector<8x32xf32>
    %cst_107 = arith.constant 1.000000e+00 : f32
    %326 = vector.broadcast %cst_107 : f32 to vector<8x32xf32>
    %327 = arith.addf %325, %326 : vector<8x32xf32>
    %cst_108 = arith.constant 5.000000e-01 : f32
    %328 = vector.broadcast %cst_108 : f32 to vector<8x32xf32>
    %329 = arith.mulf %328, %327 : vector<8x32xf32>
    %330 = vector.extract_strided_slice %324 {offsets = [0, 32], sizes = [8, 32], strides = [1, 1]} : vector<8x128xf32> to vector<8x32xf32>
    %cst_109 = arith.constant 1.000000e+00 : f32
    %331 = vector.broadcast %cst_109 : f32 to vector<8x32xf32>
    %332 = arith.addf %330, %331 : vector<8x32xf32>
    %cst_110 = arith.constant 5.000000e-01 : f32
    %333 = vector.broadcast %cst_110 : f32 to vector<8x32xf32>
    %334 = arith.mulf %333, %332 : vector<8x32xf32>
    %335 = vector.extract_strided_slice %324 {offsets = [0, 64], sizes = [8, 32], strides = [1, 1]} : vector<8x128xf32> to vector<8x32xf32>
    %336 = vector.extract_strided_slice %324 {offsets = [0, 96], sizes = [8, 32], strides = [1, 1]} : vector<8x128xf32> to vector<8x32xf32>
    %cst_111 = arith.constant 1.000000e+00 : f32
    %337 = vector.broadcast %cst_111 : f32 to vector<8x32xf32>
    %338 = arith.addf %336, %337 : vector<8x32xf32>
    %cst_112 = arith.constant 5.000000e-01 : f32
    %339 = vector.broadcast %cst_112 : f32 to vector<8x32xf32>
    %340 = arith.mulf %339, %338 : vector<8x32xf32>
    %341 = arith.mulf %334, %284 : vector<8x32xf32>
    %342 = arith.mulf %329, %335 : vector<8x32xf32>
    %343 = arith.addf %341, %342 : vector<8x32xf32>
    %344 = math.tanh %343 : vector<8x32xf32>
    %345 = arith.mulf %340, %344 : vector<8x32xf32>
    %cst_113 = arith.constant dense<0.000000e+00> : vector<8x128xf32>
    %346 = tpu.matmul %345, %17, %cst_113 {dimension_numbers = #tpu.dot_dimension_numbers<[1], [0], [0], [1], [0, 0, 1, 1], [], []>} : vector<8x32xf32>, vector<32x128xf32>, vector<8x128xf32> -> vector<8x128xf32>
    %347 = vector.broadcast %18 : vector<1x128xf32> to vector<8x128xf32>
    %348 = arith.addf %346, %347 : vector<8x128xf32>
    %cst_114 = arith.constant dense<0.000000e+00> : vector<8x128xf32>
    %349 = tpu.matmul %315, %16, %cst_114 {dimension_numbers = #tpu.dot_dimension_numbers<[1], [0], [0], [1], [0, 0, 1, 1], [], []>} : vector<8x32xf32>, vector<32x128xf32>, vector<8x128xf32> -> vector<8x128xf32>
    %350 = arith.addf %348, %349 : vector<8x128xf32>
    %351 = vector.broadcast %8 : vector<1x128xf32> to vector<8x128xf32>
    %352 = arith.mulf %350, %351 : vector<8x128xf32>
    %353 = math.tanh %352 : vector<8x128xf32>
    %354 = vector.extract_strided_slice %353 {offsets = [0, 0], sizes = [8, 32], strides = [1, 1]} : vector<8x128xf32> to vector<8x32xf32>
    %cst_115 = arith.constant 1.000000e+00 : f32
    %355 = vector.broadcast %cst_115 : f32 to vector<8x32xf32>
    %356 = arith.addf %354, %355 : vector<8x32xf32>
    %cst_116 = arith.constant 5.000000e-01 : f32
    %357 = vector.broadcast %cst_116 : f32 to vector<8x32xf32>
    %358 = arith.mulf %357, %356 : vector<8x32xf32>
    %359 = vector.extract_strided_slice %353 {offsets = [0, 32], sizes = [8, 32], strides = [1, 1]} : vector<8x128xf32> to vector<8x32xf32>
    %cst_117 = arith.constant 1.000000e+00 : f32
    %360 = vector.broadcast %cst_117 : f32 to vector<8x32xf32>
    %361 = arith.addf %359, %360 : vector<8x32xf32>
    %cst_118 = arith.constant 5.000000e-01 : f32
    %362 = vector.broadcast %cst_118 : f32 to vector<8x32xf32>
    %363 = arith.mulf %362, %361 : vector<8x32xf32>
    %364 = vector.extract_strided_slice %353 {offsets = [0, 64], sizes = [8, 32], strides = [1, 1]} : vector<8x128xf32> to vector<8x32xf32>
    %365 = vector.extract_strided_slice %353 {offsets = [0, 96], sizes = [8, 32], strides = [1, 1]} : vector<8x128xf32> to vector<8x32xf32>
    %cst_119 = arith.constant 1.000000e+00 : f32
    %366 = vector.broadcast %cst_119 : f32 to vector<8x32xf32>
    %367 = arith.addf %365, %366 : vector<8x32xf32>
    %cst_120 = arith.constant 5.000000e-01 : f32
    %368 = vector.broadcast %cst_120 : f32 to vector<8x32xf32>
    %369 = arith.mulf %368, %367 : vector<8x32xf32>
    %370 = arith.mulf %363, %313 : vector<8x32xf32>
    %371 = arith.mulf %358, %364 : vector<8x32xf32>
    %372 = arith.addf %370, %371 : vector<8x32xf32>
    %373 = math.tanh %372 : vector<8x32xf32>
    %374 = arith.mulf %369, %373 : vector<8x32xf32>
    %c160 = arith.constant 160 : index
    %c0_121 = arith.constant 0 : index
    %375 = vector.load %arg7[%c160, %c0_121] : memref<256x12xf32, #tpu.memory_space<vmem>>, vector<32x12xf32>
    %cst_122 = arith.constant dense<0.000000e+00> : vector<8x12xf32>
    %376 = tpu.matmul %374, %375, %cst_122 {dimension_numbers = #tpu.dot_dimension_numbers<[1], [0], [0], [1], [0, 0, 1, 1], [], []>} : vector<8x32xf32>, vector<32x12xf32>, vector<8x12xf32> -> vector<8x12xf32>
    %377 = arith.addf %318, %376 : vector<8x12xf32>
    %378 = vector.extract_strided_slice %14 {offsets = [48, 0], sizes = [8, 128], strides = [1, 1]} : vector<64x128xf32> to vector<8x128xf32>
    %cst_123 = arith.constant dense<0.000000e+00> : vector<8x128xf32>
    %379 = tpu.matmul %345, %15, %cst_123 {dimension_numbers = #tpu.dot_dimension_numbers<[1], [0], [0], [1], [0, 0, 1, 1], [], []>} : vector<8x32xf32>, vector<32x128xf32>, vector<8x128xf32> -> vector<8x128xf32>
    %380 = arith.addf %378, %379 : vector<8x128xf32>
    %381 = vector.broadcast %8 : vector<1x128xf32> to vector<8x128xf32>
    %382 = arith.mulf %380, %381 : vector<8x128xf32>
    %383 = math.tanh %382 : vector<8x128xf32>
    %384 = vector.extract_strided_slice %383 {offsets = [0, 0], sizes = [8, 32], strides = [1, 1]} : vector<8x128xf32> to vector<8x32xf32>
    %cst_124 = arith.constant 1.000000e+00 : f32
    %385 = vector.broadcast %cst_124 : f32 to vector<8x32xf32>
    %386 = arith.addf %384, %385 : vector<8x32xf32>
    %cst_125 = arith.constant 5.000000e-01 : f32
    %387 = vector.broadcast %cst_125 : f32 to vector<8x32xf32>
    %388 = arith.mulf %387, %386 : vector<8x32xf32>
    %389 = vector.extract_strided_slice %383 {offsets = [0, 32], sizes = [8, 32], strides = [1, 1]} : vector<8x128xf32> to vector<8x32xf32>
    %cst_126 = arith.constant 1.000000e+00 : f32
    %390 = vector.broadcast %cst_126 : f32 to vector<8x32xf32>
    %391 = arith.addf %389, %390 : vector<8x32xf32>
    %cst_127 = arith.constant 5.000000e-01 : f32
    %392 = vector.broadcast %cst_127 : f32 to vector<8x32xf32>
    %393 = arith.mulf %392, %391 : vector<8x32xf32>
    %394 = vector.extract_strided_slice %383 {offsets = [0, 64], sizes = [8, 32], strides = [1, 1]} : vector<8x128xf32> to vector<8x32xf32>
    %395 = vector.extract_strided_slice %383 {offsets = [0, 96], sizes = [8, 32], strides = [1, 1]} : vector<8x128xf32> to vector<8x32xf32>
    %cst_128 = arith.constant 1.000000e+00 : f32
    %396 = vector.broadcast %cst_128 : f32 to vector<8x32xf32>
    %397 = arith.addf %395, %396 : vector<8x32xf32>
    %cst_129 = arith.constant 5.000000e-01 : f32
    %398 = vector.broadcast %cst_129 : f32 to vector<8x32xf32>
    %399 = arith.mulf %398, %397 : vector<8x32xf32>
    %400 = arith.mulf %393, %343 : vector<8x32xf32>
    %401 = arith.mulf %388, %394 : vector<8x32xf32>
    %402 = arith.addf %400, %401 : vector<8x32xf32>
    %403 = math.tanh %402 : vector<8x32xf32>
    %404 = arith.mulf %399, %403 : vector<8x32xf32>
    %cst_130 = arith.constant dense<0.000000e+00> : vector<8x128xf32>
    %405 = tpu.matmul %404, %17, %cst_130 {dimension_numbers = #tpu.dot_dimension_numbers<[1], [0], [0], [1], [0, 0, 1, 1], [], []>} : vector<8x32xf32>, vector<32x128xf32>, vector<8x128xf32> -> vector<8x128xf32>
    %406 = vector.broadcast %18 : vector<1x128xf32> to vector<8x128xf32>
    %407 = arith.addf %405, %406 : vector<8x128xf32>
    %cst_131 = arith.constant dense<0.000000e+00> : vector<8x128xf32>
    %408 = tpu.matmul %374, %16, %cst_131 {dimension_numbers = #tpu.dot_dimension_numbers<[1], [0], [0], [1], [0, 0, 1, 1], [], []>} : vector<8x32xf32>, vector<32x128xf32>, vector<8x128xf32> -> vector<8x128xf32>
    %409 = arith.addf %407, %408 : vector<8x128xf32>
    %410 = vector.broadcast %8 : vector<1x128xf32> to vector<8x128xf32>
    %411 = arith.mulf %409, %410 : vector<8x128xf32>
    %412 = math.tanh %411 : vector<8x128xf32>
    %413 = vector.extract_strided_slice %412 {offsets = [0, 0], sizes = [8, 32], strides = [1, 1]} : vector<8x128xf32> to vector<8x32xf32>
    %cst_132 = arith.constant 1.000000e+00 : f32
    %414 = vector.broadcast %cst_132 : f32 to vector<8x32xf32>
    %415 = arith.addf %413, %414 : vector<8x32xf32>
    %cst_133 = arith.constant 5.000000e-01 : f32
    %416 = vector.broadcast %cst_133 : f32 to vector<8x32xf32>
    %417 = arith.mulf %416, %415 : vector<8x32xf32>
    %418 = vector.extract_strided_slice %412 {offsets = [0, 32], sizes = [8, 32], strides = [1, 1]} : vector<8x128xf32> to vector<8x32xf32>
    %cst_134 = arith.constant 1.000000e+00 : f32
    %419 = vector.broadcast %cst_134 : f32 to vector<8x32xf32>
    %420 = arith.addf %418, %419 : vector<8x32xf32>
    %cst_135 = arith.constant 5.000000e-01 : f32
    %421 = vector.broadcast %cst_135 : f32 to vector<8x32xf32>
    %422 = arith.mulf %421, %420 : vector<8x32xf32>
    %423 = vector.extract_strided_slice %412 {offsets = [0, 64], sizes = [8, 32], strides = [1, 1]} : vector<8x128xf32> to vector<8x32xf32>
    %424 = vector.extract_strided_slice %412 {offsets = [0, 96], sizes = [8, 32], strides = [1, 1]} : vector<8x128xf32> to vector<8x32xf32>
    %cst_136 = arith.constant 1.000000e+00 : f32
    %425 = vector.broadcast %cst_136 : f32 to vector<8x32xf32>
    %426 = arith.addf %424, %425 : vector<8x32xf32>
    %cst_137 = arith.constant 5.000000e-01 : f32
    %427 = vector.broadcast %cst_137 : f32 to vector<8x32xf32>
    %428 = arith.mulf %427, %426 : vector<8x32xf32>
    %429 = arith.mulf %422, %372 : vector<8x32xf32>
    %430 = arith.mulf %417, %423 : vector<8x32xf32>
    %431 = arith.addf %429, %430 : vector<8x32xf32>
    %432 = math.tanh %431 : vector<8x32xf32>
    %433 = arith.mulf %428, %432 : vector<8x32xf32>
    %c192 = arith.constant 192 : index
    %c0_138 = arith.constant 0 : index
    %434 = vector.load %arg7[%c192, %c0_138] : memref<256x12xf32, #tpu.memory_space<vmem>>, vector<32x12xf32>
    %cst_139 = arith.constant dense<0.000000e+00> : vector<8x12xf32>
    %435 = tpu.matmul %433, %434, %cst_139 {dimension_numbers = #tpu.dot_dimension_numbers<[1], [0], [0], [1], [0, 0, 1, 1], [], []>} : vector<8x32xf32>, vector<32x12xf32>, vector<8x12xf32> -> vector<8x12xf32>
    %436 = arith.addf %377, %435 : vector<8x12xf32>
    %437 = vector.extract_strided_slice %14 {offsets = [56, 0], sizes = [8, 128], strides = [1, 1]} : vector<64x128xf32> to vector<8x128xf32>
    %cst_140 = arith.constant dense<0.000000e+00> : vector<8x128xf32>
    %438 = tpu.matmul %404, %15, %cst_140 {dimension_numbers = #tpu.dot_dimension_numbers<[1], [0], [0], [1], [0, 0, 1, 1], [], []>} : vector<8x32xf32>, vector<32x128xf32>, vector<8x128xf32> -> vector<8x128xf32>
    %439 = arith.addf %437, %438 : vector<8x128xf32>
    %440 = vector.broadcast %8 : vector<1x128xf32> to vector<8x128xf32>
    %441 = arith.mulf %439, %440 : vector<8x128xf32>
    %442 = math.tanh %441 : vector<8x128xf32>
    %443 = vector.extract_strided_slice %442 {offsets = [0, 0], sizes = [8, 32], strides = [1, 1]} : vector<8x128xf32> to vector<8x32xf32>
    %cst_141 = arith.constant 1.000000e+00 : f32
    %444 = vector.broadcast %cst_141 : f32 to vector<8x32xf32>
    %445 = arith.addf %443, %444 : vector<8x32xf32>
    %cst_142 = arith.constant 5.000000e-01 : f32
    %446 = vector.broadcast %cst_142 : f32 to vector<8x32xf32>
    %447 = arith.mulf %446, %445 : vector<8x32xf32>
    %448 = vector.extract_strided_slice %442 {offsets = [0, 32], sizes = [8, 32], strides = [1, 1]} : vector<8x128xf32> to vector<8x32xf32>
    %cst_143 = arith.constant 1.000000e+00 : f32
    %449 = vector.broadcast %cst_143 : f32 to vector<8x32xf32>
    %450 = arith.addf %448, %449 : vector<8x32xf32>
    %cst_144 = arith.constant 5.000000e-01 : f32
    %451 = vector.broadcast %cst_144 : f32 to vector<8x32xf32>
    %452 = arith.mulf %451, %450 : vector<8x32xf32>
    %453 = vector.extract_strided_slice %442 {offsets = [0, 64], sizes = [8, 32], strides = [1, 1]} : vector<8x128xf32> to vector<8x32xf32>
    %454 = vector.extract_strided_slice %442 {offsets = [0, 96], sizes = [8, 32], strides = [1, 1]} : vector<8x128xf32> to vector<8x32xf32>
    %cst_145 = arith.constant 1.000000e+00 : f32
    %455 = vector.broadcast %cst_145 : f32 to vector<8x32xf32>
    %456 = arith.addf %454, %455 : vector<8x32xf32>
    %cst_146 = arith.constant 5.000000e-01 : f32
    %457 = vector.broadcast %cst_146 : f32 to vector<8x32xf32>
    %458 = arith.mulf %457, %456 : vector<8x32xf32>
    %459 = arith.mulf %452, %402 : vector<8x32xf32>
    %460 = arith.mulf %447, %453 : vector<8x32xf32>
    %461 = arith.addf %459, %460 : vector<8x32xf32>
    %462 = math.tanh %461 : vector<8x32xf32>
    %463 = arith.mulf %458, %462 : vector<8x32xf32>
    %cst_147 = arith.constant dense<0.000000e+00> : vector<8x128xf32>
    %464 = tpu.matmul %463, %17, %cst_147 {dimension_numbers = #tpu.dot_dimension_numbers<[1], [0], [0], [1], [0, 0, 1, 1], [], []>} : vector<8x32xf32>, vector<32x128xf32>, vector<8x128xf32> -> vector<8x128xf32>
    %465 = vector.broadcast %18 : vector<1x128xf32> to vector<8x128xf32>
    %466 = arith.addf %464, %465 : vector<8x128xf32>
    %cst_148 = arith.constant dense<0.000000e+00> : vector<8x128xf32>
    %467 = tpu.matmul %433, %16, %cst_148 {dimension_numbers = #tpu.dot_dimension_numbers<[1], [0], [0], [1], [0, 0, 1, 1], [], []>} : vector<8x32xf32>, vector<32x128xf32>, vector<8x128xf32> -> vector<8x128xf32>
    %468 = arith.addf %466, %467 : vector<8x128xf32>
    %469 = vector.broadcast %8 : vector<1x128xf32> to vector<8x128xf32>
    %470 = arith.mulf %468, %469 : vector<8x128xf32>
    %471 = math.tanh %470 : vector<8x128xf32>
    %472 = vector.extract_strided_slice %471 {offsets = [0, 0], sizes = [8, 32], strides = [1, 1]} : vector<8x128xf32> to vector<8x32xf32>
    %cst_149 = arith.constant 1.000000e+00 : f32
    %473 = vector.broadcast %cst_149 : f32 to vector<8x32xf32>
    %474 = arith.addf %472, %473 : vector<8x32xf32>
    %cst_150 = arith.constant 5.000000e-01 : f32
    %475 = vector.broadcast %cst_150 : f32 to vector<8x32xf32>
    %476 = arith.mulf %475, %474 : vector<8x32xf32>
    %477 = vector.extract_strided_slice %471 {offsets = [0, 32], sizes = [8, 32], strides = [1, 1]} : vector<8x128xf32> to vector<8x32xf32>
    %cst_151 = arith.constant 1.000000e+00 : f32
    %478 = vector.broadcast %cst_151 : f32 to vector<8x32xf32>
    %479 = arith.addf %477, %478 : vector<8x32xf32>
    %cst_152 = arith.constant 5.000000e-01 : f32
    %480 = vector.broadcast %cst_152 : f32 to vector<8x32xf32>
    %481 = arith.mulf %480, %479 : vector<8x32xf32>
    %482 = vector.extract_strided_slice %471 {offsets = [0, 64], sizes = [8, 32], strides = [1, 1]} : vector<8x128xf32> to vector<8x32xf32>
    %483 = vector.extract_strided_slice %471 {offsets = [0, 96], sizes = [8, 32], strides = [1, 1]} : vector<8x128xf32> to vector<8x32xf32>
    %cst_153 = arith.constant 1.000000e+00 : f32
    %484 = vector.broadcast %cst_153 : f32 to vector<8x32xf32>
    %485 = arith.addf %483, %484 : vector<8x32xf32>
    %cst_154 = arith.constant 5.000000e-01 : f32
    %486 = vector.broadcast %cst_154 : f32 to vector<8x32xf32>
    %487 = arith.mulf %486, %485 : vector<8x32xf32>
    %488 = arith.mulf %481, %431 : vector<8x32xf32>
    %489 = arith.mulf %476, %482 : vector<8x32xf32>
    %490 = arith.addf %488, %489 : vector<8x32xf32>
    %491 = math.tanh %490 : vector<8x32xf32>
    %492 = arith.mulf %487, %491 : vector<8x32xf32>
    %c224 = arith.constant 224 : index
    %c0_155 = arith.constant 0 : index
    %493 = vector.load %arg7[%c224, %c0_155] : memref<256x12xf32, #tpu.memory_space<vmem>>, vector<32x12xf32>
    %cst_156 = arith.constant dense<0.000000e+00> : vector<8x12xf32>
    %494 = tpu.matmul %492, %493, %cst_156 {dimension_numbers = #tpu.dot_dimension_numbers<[1], [0], [0], [1], [0, 0, 1, 1], [], []>} : vector<8x32xf32>, vector<32x12xf32>, vector<8x12xf32> -> vector<8x12xf32>
    %495 = arith.addf %436, %494 : vector<8x12xf32>
    %c0_157 = arith.constant 0 : index
    %c0_158 = arith.constant 0 : index
    %496 = vector.load %arg8[%c0_157, %c0_158] : memref<1x12xf32, #tpu.memory_space<vmem>>, vector<1x12xf32>
    %497 = vector.broadcast %496 : vector<1x12xf32> to vector<8x12xf32>
    %498 = arith.addf %495, %497 : vector<8x12xf32>
    %c0_159 = arith.constant 0 : index
    %c0_160 = arith.constant 0 : index
    %499 = vector.load %arg9[%c0_159, %c0_160] : memref<8x12xf32, #tpu.memory_space<vmem>>, vector<8x12xf32>
    tpu.vector_store %arg9[%c0_159, %c0_160], %498 {strides = array<i32>} : memref<8x12xf32, #tpu.memory_space<vmem>>, vector<8x12xf32>,
    return
  }
}

</mosaic_0001>

<llo_original>
// kernel: tpu_custom_call.1
$region0: #{tpu_custom_call.1}
  #allocation0 [shape = 'u32[]', space=smem, size = 0x4, offset = 0x4, fixed_abs, tag = 'smem constant byte address 0x4 - core index']
  #allocation1 [shape = 'u32[144,128]{1,0:T(1,128)}', space=vmem, size = 0x12000, scoped, tag = 'internal scratch']
  %s0 = inlined_call_operand.vmem [shape: f32[64,4], index: 0, kind: input, shape index: {}]
  %s1 = inlined_call_operand.vmem [shape: f32[4,128], index: 1, kind: input, shape index: {}]
  %s2 = inlined_call_operand.vmem [shape: f32[32,128], index: 2, kind: input, shape index: {}]
  %s3 = inlined_call_operand.vmem [shape: f32[1,128], index: 3, kind: input, shape index: {}]
  %s4 = inlined_call_operand.vmem [shape: f32[32,128], index: 4, kind: input, shape index: {}]
  %s5 = inlined_call_operand.vmem [shape: f32[32,128], index: 5, kind: input, shape index: {}]
  %s6 = inlined_call_operand.vmem [shape: f32[1,128], index: 6, kind: input, shape index: {}]
  %s7 = inlined_call_operand.vmem [shape: f32[256,12], index: 7, kind: input, shape index: {}]
  %s8 = inlined_call_operand.vmem [shape: f32[1,12], index: 8, kind: input, shape index: {}]
  %s9 = inlined_call_operand.hbm [shape: f32[8,12], index: 9, kind: output, shape index: {}]
  %s10 = sld [smem:[#allocation0]]
  $region46: #{tpu_custom_call.1} parent=0
    _
  %s12 = ssub.s32 1, %s10
  %s13 = scalar_select 0, %s12, %s10
  $region1: #{tpu_custom_call.1} parent=0
    #allocation2 [shape = 'u8[4096]{0}', space=vmem, size = 0x1000, scoped, tag = 'output window, operand 0, single buffered']
    #allocation3 [shape = 's32[1]{0}', space=sflag, size = 0x4, scoped, tag = 'scoped memory for tpu_custom_call.1']
    %14 = vsyncpa [#allocation3], 0
    // Predicated region
    $region2: #{tpu_custom_call.1} parent=1 // pred_check
      _
    $region3: #{tpu_custom_call.1} parent=1 // pred_check_branch
      %16 = sbr.rel (0) target = $region5
    $region4: #{tpu_custom_call.1} parent=1 // pred_region
      _
    $region5: #{tpu_custom_call.1} parent=1 // pred_fallthru
      _
    // Predicated region
    $region6: #{tpu_custom_call.1} parent=1 // pred_check
      _
    $region7: #{tpu_custom_call.1} parent=1 // pred_check_branch
      %18 = sbr.rel (0) target = $region9
    $region8: #{tpu_custom_call.1} parent=1 // pred_region
      _
    $region9: #{tpu_custom_call.1} parent=1 // pred_fallthru
      _
    // Predicated region
    $region10: #{tpu_custom_call.1} parent=1 // pred_check
      _
    $region11: #{tpu_custom_call.1} parent=1 // pred_check_branch
      %20 = sbr.rel (0) target = $region13
    $region12: #{tpu_custom_call.1} parent=1 // pred_region
      _
    $region13: #{tpu_custom_call.1} parent=1 // pred_fallthru
      _
    // Predicated region
    $region14: #{tpu_custom_call.1} parent=1 // pred_check
      _
    $region15: #{tpu_custom_call.1} parent=1 // pred_check_branch
      %22 = sbr.rel (0) target = $region17
    $region16: #{tpu_custom_call.1} parent=1 // pred_region
      _
    $region17: #{tpu_custom_call.1} parent=1 // pred_fallthru
      _
    // Predicated region
    $region18: #{tpu_custom_call.1} parent=1 // pred_check
      _
    $region19: #{tpu_custom_call.1} parent=1 // pred_check_branch
      %24 = sbr.rel (0) target = $region21
    $region20: #{tpu_custom_call.1} parent=1 // pred_region
      _
    $region21: #{tpu_custom_call.1} parent=1 // pred_fallthru
      _
    // Predicated region
    $region22: #{tpu_custom_call.1} parent=1 // pred_check
      _
    $region23: #{tpu_custom_call.1} parent=1 // pred_check_branch
      %26 = sbr.rel (0) target = $region25
    $region24: #{tpu_custom_call.1} parent=1 // pred_region
      _
    $region25: #{tpu_custom_call.1} parent=1 // pred_fallthru
      _
    // Predicated region
    $region26: #{tpu_custom_call.1} parent=1 // pred_check
      _
    $region27: #{tpu_custom_call.1} parent=1 // pred_check_branch
      %28 = sbr.rel (0) target = $region29
    $region28: #{tpu_custom_call.1} parent=1 // pred_region
      _
    $region29: #{tpu_custom_call.1} parent=1 // pred_fallthru
      _
    // Predicated region
    $region30: #{tpu_custom_call.1} parent=1 // pred_check
      _
    $region31: #{tpu_custom_call.1} parent=1 // pred_check_branch
      %30 = sbr.rel (0) target = $region33
    $region32: #{tpu_custom_call.1} parent=1 // pred_region
      _
    $region33: #{tpu_custom_call.1} parent=1 // pred_fallthru
      _
    // Predicated region
    $region34: #{tpu_custom_call.1} parent=1 // pred_check
      _
    $region35: #{tpu_custom_call.1} parent=1 // pred_check_branch
      %32 = sbr.rel (0) target = $region37
    $region36: #{tpu_custom_call.1} parent=1 // pred_region
      _
    $region37: #{tpu_custom_call.1} parent=1 // pred_fallthru
      _
    %v33 = vlaneseq
    %v34 = vand.u32 %v33, 127
    %vm35 = vcmp.ge.s32.totalorder %v34, 64
    %vm36 = vcmp.lt.s32.totalorder %v34, 96
    %vm37 = vmand %vm35, %vm36
    %v38 = vsel %vm37, 1.0, 0.5
    %v39 = vld [vmem:[%s0] sm:$0xff]
    %v40 = vld [vmem:[%s0 + $0x8] sm:$0xff]
    %v41 = vld [vmem:[%s0 + $0x10] sm:$0xff]
    %v42 = vld [vmem:[%s0 + $0x18] sm:$0xff]
    %v43 = vld [vmem:[%s0 + $0x20] sm:$0xff]
    %v44 = vld [vmem:[%s0 + $0x28] sm:$0xff]
    %v45 = vld [vmem:[%s0 + $0x30] sm:$0xff]
    %v46 = vld [vmem:[%s0 + $0x38] sm:$0xff]
    %v47 = vld [vmem:[%s1] sm:$0xf]
    %v48 = vld [vmem:[%s3] sm:$0x1]
    %v50 = vlaneseq
    %v51 = vshrl.u32 %v50, 7
    %v52 = vsub.s32 0, %v51
    %v53 = vrot.slane %v48, %v52
    %vm55 = vcmask 31744
    %v57 = vsel %vm55, %v39, 0
    %v60 = vsel %vm55, %v40, 0
    %v63 = vsel %vm55, %v41, 0
    %v66 = vsel %vm55, %v42, 0
    %v69 = vsel %vm55, %v43, 0
    %v72 = vsel %vm55, %v44, 0
    %v75 = vsel %vm55, %v45, 0
    %v78 = vsel %vm55, %v46, 0
    %vm80 = vcmask 1043456
    %v82 = vsel %vm80, %v47, 0
    %84 = vmatprep.subr.mxu0 0.0
    %85 = vmatpush1.msra.mxu0 %v82
    %86 = vmatprep.subr.mxu0 0.0
    %87 = vmatpush1.msra.mxu0 0.0
    %88 = vmatprep.subr.mxu0 0.0
    %89 = vmatpush1.msra.mxu0 0.0
    %90 = vmatprep.subr.mxu0 0.0
    %91 = vmatpush1.msra.mxu0 0.0
    %92 = vmatprep.subr.mxu0 0.0
    %93 = vmatpush1.msra.mxu0 0.0
    %94 = vmatprep.subr.mxu0 0.0
    %95 = vmatpush1.msra.mxu0 0.0
    %96 = vmatprep.subr.mxu0 0.0
    %97 = vmatpush1.msra.mxu0 0.0
    %98 = vmatprep.subr.mxu0 0.0
    %99 = vmatpush1.msra.mxu0 0.0
    %100 = vmatprep.subr.mxu0 0.0
    %101 = vmatpush1.msra.mxu0 0.0
    %102 = vmatprep.subr.mxu0 0.0
    %103 = vmatpush1.msra.mxu0 0.0
    %104 = vmatprep.subr.mxu0 0.0
    %105 = vmatpush1.msra.mxu0 0.0
    %106 = vmatprep.subr.mxu0 0.0
    %107 = vmatpush1.msra.mxu0 0.0
    %108 = vmatprep.subr.mxu0 0.0
    %109 = vmatpush1.msra.mxu0 0.0
    %110 = vmatprep.subr.mxu0 0.0
    %111 = vmatpush1.msra.mxu0 0.0
    %112 = vmatprep.subr.mxu0 0.0
    %113 = vmatpush1.msra.mxu0 0.0
    %114 = vmatprep.subr.mxu0 0.0
    %115 = vmatpush1.msra.mxu0 0.0
    %116 = vmatprep.subr.mxu0 0.0
    %117 = vmatpush1.msra.mxu0 0.0
    %118 = vmatprep.subr.mxu0 0.0
    %119 = vmatpush1.msra.mxu0 0.0
    %120 = vmatprep.subr.mxu0 0.0
    %121 = vmatpush1.msra.mxu0 0.0
    %122 = vmatprep.subr.mxu0 0.0
    %123 = vmatpush1.msra.mxu0 0.0
    %124 = vmatprep.subr.mxu0 0.0
    %125 = vmatpush1.msra.mxu0 0.0
    %126 = vmatprep.subr.mxu0 0.0
    %127 = vmatpush1.msra.mxu0 0.0
    %128 = vmatprep.subr.mxu0 0.0
    %129 = vmatpush1.msra.mxu0 0.0
    %130 = vmatprep.subr.mxu0 0.0
    %131 = vmatpush1.msra.mxu0 0.0
    %132 = vmatprep.subr.mxu0 0.0
    %133 = vmatpush1.msra.mxu0 0.0
    %134 = vmatprep.subr.mxu0 0.0
    %135 = vmatpush1.msra.mxu0 0.0
    %136 = vmatprep.subr.mxu0 0.0
    %137 = vmatpush1.msra.mxu0 0.0
    %138 = vmatprep.subr.mxu0 0.0
    %139 = vmatpush1.msra.mxu0 0.0
    %140 = vmatprep.subr.mxu0 0.0
    %141 = vmatpush1.msra.mxu0 0.0
    %142 = vmatprep.subr.mxu0 0.0
    %143 = vmatpush1.msra.mxu0 0.0
    %144 = vmatprep.subr.mxu0 0.0
    %145 = vmatpush1.msra.mxu0 0.0
    %146 = vmatprep.subr.mxu0 0.0
    %147 = vmatpush1.msra.mxu0 0.0
    %148 = vmatprep.mubr.f32.mxu0 0.0
    %149 = vmatmul.mubr.f32.gmra.mrb[0].mxu0 %v57
    %v150 = vpop.f32.mrb[0].mxu0
    %v151 = vadd.f32 %v53, %v150
    %v152 = vpop.f32.mrb[0].mxu0
    %153 = vmatprep.mubr.f32.mxu0 0.0
    %154 = vmatmul.mubr.f32.gmra.mrb[0].mxu0 %v60
    %v155 = vpop.f32.mrb[0].mxu0
    %v156 = vadd.f32 %v53, %v155
    %v157 = vpop.f32.mrb[0].mxu0
    %158 = vmatprep.mubr.f32.mxu0 0.0
    %159 = vmatmul.mubr.f32.gmra.mrb[0].mxu0 %v63
    %v160 = vpop.f32.mrb[0].mxu0
    %v161 = vadd.f32 %v53, %v160
    %v162 = vpop.f32.mrb[0].mxu0
    %163 = vmatprep.mubr.f32.mxu0 0.0
    %164 = vmatmul.mubr.f32.gmra.mrb[0].mxu0 %v66
    %v165 = vpop.f32.mrb[0].mxu0
    %v166 = vadd.f32 %v53, %v165
    %v167 = vpop.f32.mrb[0].mxu0
    %168 = vmatprep.mubr.f32.mxu0 0.0
    %169 = vmatmul.mubr.f32.gmra.mrb[0].mxu0 %v69
    %v170 = vpop.f32.mrb[0].mxu0
    %v171 = vadd.f32 %v53, %v170
    %v172 = vpop.f32.mrb[0].mxu0
    %173 = vmatprep.mubr.f32.mxu0 0.0
    %174 = vmatmul.mubr.f32.gmra.mrb[0].mxu0 %v72
    %v175 = vpop.f32.mrb[0].mxu0
    %v176 = vadd.f32 %v53, %v175
    %v177 = vpop.f32.mrb[0].mxu0
    %178 = vmatprep.mubr.f32.mxu0 0.0
    %179 = vmatmul.mubr.f32.gmra.mrb[0].mxu0 %v75
    %v180 = vpop.f32.mrb[0].mxu0
    %v181 = vadd.f32 %v53, %v180
    %v182 = vpop.f32.mrb[0].mxu0
    %183 = vmatprep.mubr.f32.mxu0 0.0
    %184 = vmatmul.mubr.f32.gmra.mrb[0].mxu0 %v78
    %v185 = vpop.f32.mrb[0].mxu0
    %v186 = vadd.f32 %v53, %v185
    %v187 = vpop.f32.mrb[0].mxu0
    %188 = vdwg.mxu0
    %v189 = vld [vmem:[%s2] sm:$0xff]
    %v190 = vld [vmem:[%s2 + $0x8] sm:$0xff]
    %v191 = vld [vmem:[%s2 + $0x10] sm:$0xff]
    %v192 = vld [vmem:[%s2 + $0x18] sm:$0xff]
    %v193 = vld [vmem:[%s5] sm:$0xff]
    %v194 = vld [vmem:[%s5 + $0x8] sm:$0xff]
    %v195 = vld [vmem:[%s5 + $0x10] sm:$0xff]
    %v196 = vld [vmem:[%s5 + $0x18] sm:$0xff]
    %v197 = vld [vmem:[%s4] sm:$0xff]
    %v198 = vld [vmem:[%s4 + $0x8] sm:$0xff]
    %v199 = vld [vmem:[%s4 + $0x10] sm:$0xff]
    %v200 = vld [vmem:[%s4 + $0x18] sm:$0xff]
    %v201 = vld [vmem:[%s6] sm:$0x1]
    %vm202 = vcmask 261120
    %v204 = vsel %vm202, 0.0, 0
    %206 = vmatprep.subr.mxu0 0.0
    %207 = vmatpush1.msra.mxu0 %v189
    %208 = vmatprep.subr.mxu0 0.0
    %209 = vmatpush1.msra.mxu0 %v190
    %210 = vmatprep.subr.mxu0 0.0
    %211 = vmatpush1.msra.mxu0 %v191
    %212 = vmatprep.subr.mxu0 0.0
    %213 = vmatpush1.msra.mxu0 %v192
    %214 = vmatprep.subr.mxu0 0.0
    %215 = vmatpush1.msra.mxu0 0.0
    %216 = vmatprep.subr.mxu0 0.0
    %217 = vmatpush1.msra.mxu0 0.0
    %218 = vmatprep.subr.mxu0 0.0
    %219 = vmatpush1.msra.mxu0 0.0
    %220 = vmatprep.subr.mxu0 0.0
    %221 = vmatpush1.msra.mxu0 0.0
    %222 = vmatprep.subr.mxu0 0.0
    %223 = vmatpush1.msra.mxu0 0.0
    %224 = vmatprep.subr.mxu0 0.0
    %225 = vmatpush1.msra.mxu0 0.0
    %226 = vmatprep.subr.mxu0 0.0
    %227 = vmatpush1.msra.mxu0 0.0
    %228 = vmatprep.subr.mxu0 0.0
    %229 = vmatpush1.msra.mxu0 0.0
    %230 = vmatprep.subr.mxu0 0.0
    %231 = vmatpush1.msra.mxu0 0.0
    %232 = vmatprep.subr.mxu0 0.0
    %233 = vmatpush1.msra.mxu0 0.0
    %234 = vmatprep.subr.mxu0 0.0
    %235 = vmatpush1.msra.mxu0 0.0
    %236 = vmatprep.subr.mxu0 0.0
    %237 = vmatpush1.msra.mxu0 0.0
    %238 = vmatprep.subr.mxu0 0.0
    %239 = vmatpush1.msra.mxu0 0.0
    %240 = vmatprep.subr.mxu0 0.0
    %241 = vmatpush1.msra.mxu0 0.0
    %242 = vmatprep.subr.mxu0 0.0
    %243 = vmatpush1.msra.mxu0 0.0
    %244 = vmatprep.subr.mxu0 0.0
    %245 = vmatpush1.msra.mxu0 0.0
    %246 = vmatprep.subr.mxu0 0.0
    %247 = vmatpush1.msra.mxu0 0.0
    %248 = vmatprep.subr.mxu0 0.0
    %249 = vmatpush1.msra.mxu0 0.0
    %250 = vmatprep.subr.mxu0 0.0
    %251 = vmatpush1.msra.mxu0 0.0
    %252 = vmatprep.subr.mxu0 0.0
    %253 = vmatpush1.msra.mxu0 0.0
    %254 = vmatprep.subr.mxu0 0.0
    %255 = vmatpush1.msra.mxu0 0.0
    %256 = vmatprep.subr.mxu0 0.0
    %257 = vmatpush1.msra.mxu0 0.0
    %258 = vmatprep.subr.mxu0 0.0
    %259 = vmatpush1.msra.mxu0 0.0
    %260 = vmatprep.subr.mxu0 0.0
    %261 = vmatpush1.msra.mxu0 0.0
    %262 = vmatprep.subr.mxu0 0.0
    %263 = vmatpush1.msra.mxu0 0.0
    %264 = vmatprep.subr.mxu0 0.0
    %265 = vmatpush1.msra.mxu0 0.0
    %266 = vmatprep.subr.mxu0 0.0
    %267 = vmatpush1.msra.mxu0 0.0
    %268 = vmatprep.subr.mxu0 0.0
    %269 = vmatpush1.msra.mxu0 0.0
    %270 = vmatprep.mubr.f32.mxu0 0.0
    %271 = vmatmul.mubr.f32.gmra.mrb[0].mxu0 %v204
    %v272 = vpop.f32.mrb[0].mxu0
    %v273 = vadd.f32 0.0, %v272
    %v274 = vpop.f32.mrb[0].mxu0
    %275 = vdwg.mxu0
    %v276 = vadd.f32 %v151, %v273
    %v277 = vmul.f32 %v276, %v38
    %v278 = vtanh.pop %v277
    %v279 = vadd.f32 %v278, 1.0
    %v280 = vmul.f32 %v279, 0.5
    %v281 = vmul.f32 %v280, 0.0
    %283 = vrot.lane.b32.xlu0 %v278, 64
    %v284 = vpop.permute.xlu0 %283
    %v286 = vmul.f32 %v280, %v284
    %288 = vrot.lane.b32.xlu0 %v286, 32
    %v289 = vpop.permute.xlu0 %288
    %v291 = vadd.f32 %v281, %v289
    %v292 = vtanh.pop %v291
    %294 = vrot.lane.b32.xlu0 %v292, 64
    %v295 = vpop.permute.xlu0 %294
    %v297 = vmul.f32 %v280, %v295
    %v299 = vlaneseq
    %v300 = vshrl.u32 %v299, 7
    %v301 = vsub.s32 0, %v300
    %v302 = vrot.slane %v201, %v301
    %305 = vrot.lane.b32.xlu0 %v297, 32
    %v306 = vpop.permute.xlu0 %305
    %v307 = vsel %vm202, %v306, 0
    %309 = vmatprep.subr.mxu0 0.0
    %310 = vmatpush1.msra.mxu0 %v197
    %311 = vmatprep.subr.mxu0 0.0
    %312 = vmatpush1.msra.mxu0 %v198
    %313 = vmatprep.subr.mxu0 0.0
    %314 = vmatpush1.msra.mxu0 %v199
    %315 = vmatprep.subr.mxu0 0.0
    %316 = vmatpush1.msra.mxu0 %v200
    %317 = vmatprep.subr.mxu0 0.0
    %318 = vmatpush1.msra.mxu0 0.0
    %319 = vmatprep.subr.mxu0 0.0
    %320 = vmatpush1.msra.mxu0 0.0
    %321 = vmatprep.subr.mxu0 0.0
    %322 = vmatpush1.msra.mxu0 0.0
    %323 = vmatprep.subr.mxu0 0.0
    %324 = vmatpush1.msra.mxu0 0.0
    %325 = vmatprep.subr.mxu0 0.0
    %326 = vmatpush1.msra.mxu0 0.0
    %327 = vmatprep.subr.mxu0 0.0
    %328 = vmatpush1.msra.mxu0 0.0
    %329 = vmatprep.subr.mxu0 0.0
    %330 = vmatpush1.msra.mxu0 0.0
    %331 = vmatprep.subr.mxu0 0.0
    %332 = vmatpush1.msra.mxu0 0.0
    %333 = vmatprep.subr.mxu0 0.0
    %334 = vmatpush1.msra.mxu0 0.0
    %335 = vmatprep.subr.mxu0 0.0
    %336 = vmatpush1.msra.mxu0 0.0
    %337 = vmatprep.subr.mxu0 0.0
    %338 = vmatpush1.msra.mxu0 0.0
    %339 = vmatprep.subr.mxu0 0.0
    %340 = vmatpush1.msra.mxu0 0.0
    %341 = vmatprep.subr.mxu0 0.0
    %342 = vmatpush1.msra.mxu0 0.0
    %343 = vmatprep.subr.mxu0 0.0
    %344 = vmatpush1.msra.mxu0 0.0
    %345 = vmatprep.subr.mxu0 0.0
    %346 = vmatpush1.msra.mxu0 0.0
    %347 = vmatprep.subr.mxu0 0.0
    %348 = vmatpush1.msra.mxu0 0.0
    %349 = vmatprep.subr.mxu0 0.0
    %350 = vmatpush1.msra.mxu0 0.0
    %351 = vmatprep.subr.mxu0 0.0
    %352 = vmatpush1.msra.mxu0 0.0
    %353 = vmatprep.subr.mxu0 0.0
    %354 = vmatpush1.msra.mxu0 0.0
    %355 = vmatprep.subr.mxu0 0.0
    %356 = vmatpush1.msra.mxu0 0.0
    %357 = vmatprep.subr.mxu0 0.0
    %358 = vmatpush1.msra.mxu0 0.0
    %359 = vmatprep.subr.mxu0 0.0
    %360 = vmatpush1.msra.mxu0 0.0
    %361 = vmatprep.subr.mxu0 0.0
    %362 = vmatpush1.msra.mxu0 0.0
    %363 = vmatprep.subr.mxu0 0.0
    %364 = vmatpush1.msra.mxu0 0.0
    %365 = vmatprep.subr.mxu0 0.0
    %366 = vmatpush1.msra.mxu0 0.0
    %367 = vmatprep.subr.mxu0 0.0
    %368 = vmatpush1.msra.mxu0 0.0
    %369 = vmatprep.subr.mxu0 0.0
    %370 = vmatpush1.msra.mxu0 0.0
    %371 = vmatprep.subr.mxu0 0.0
    %372 = vmatpush1.msra.mxu0 0.0
    %373 = vmatprep.mubr.f32.mxu0 0.0
    %374 = vmatmul.mubr.f32.gmra.mrb[0].mxu0 %v307
    %v375 = vpop.f32.mrb[0].mxu0
    %v376 = vadd.f32 %v302, %v375
    %v377 = vpop.f32.mrb[0].mxu0
    %378 = vdwg.mxu0
    %379 = vmatprep.subr.mxu0 0.0
    %380 = vmatpush1.msra.mxu0 %v193
    %381 = vmatprep.subr.mxu0 0.0
    %382 = vmatpush1.msra.mxu0 %v194
    %383 = vmatprep.subr.mxu0 0.0
    %384 = vmatpush1.msra.mxu0 %v195
    %385 = vmatprep.subr.mxu0 0.0
    %386 = vmatpush1.msra.mxu0 %v196
    %387 = vmatprep.subr.mxu0 0.0
    %388 = vmatpush1.msra.mxu0 0.0
    %389 = vmatprep.subr.mxu0 0.0
    %390 = vmatpush1.msra.mxu0 0.0
    %391 = vmatprep.subr.mxu0 0.0
    %392 = vmatpush1.msra.mxu0 0.0
    %393 = vmatprep.subr.mxu0 0.0
    %394 = vmatpush1.msra.mxu0 0.0
    %395 = vmatprep.subr.mxu0 0.0
    %396 = vmatpush1.msra.mxu0 0.0
    %397 = vmatprep.subr.mxu0 0.0
    %398 = vmatpush1.msra.mxu0 0.0
    %399 = vmatprep.subr.mxu0 0.0
    %400 = vmatpush1.msra.mxu0 0.0
    %401 = vmatprep.subr.mxu0 0.0
    %402 = vmatpush1.msra.mxu0 0.0
    %403 = vmatprep.subr.mxu0 0.0
    %404 = vmatpush1.msra.mxu0 0.0
    %405 = vmatprep.subr.mxu0 0.0
    %406 = vmatpush1.msra.mxu0 0.0
    %407 = vmatprep.subr.mxu0 0.0
    %408 = vmatpush1.msra.mxu0 0.0
    %409 = vmatprep.subr.mxu0 0.0
    %410 = vmatpush1.msra.mxu0 0.0
    %411 = vmatprep.subr.mxu0 0.0
    %412 = vmatpush1.msra.mxu0 0.0
    %413 = vmatprep.subr.mxu0 0.0
    %414 = vmatpush1.msra.mxu0 0.0
    %415 = vmatprep.subr.mxu0 0.0
    %416 = vmatpush1.msra.mxu0 0.0
    %417 = vmatprep.subr.mxu0 0.0
    %418 = vmatpush1.msra.mxu0 0.0
    %419 = vmatprep.subr.mxu0 0.0
    %420 = vmatpush1.msra.mxu0 0.0
    %421 = vmatprep.subr.mxu0 0.0
    %422 = vmatpush1.msra.mxu0 0.0
    %423 = vmatprep.subr.mxu0 0.0
    %424 = vmatpush1.msra.mxu0 0.0
    %425 = vmatprep.subr.mxu0 0.0
    %426 = vmatpush1.msra.mxu0 0.0
    %427 = vmatprep.subr.mxu0 0.0
    %428 = vmatpush1.msra.mxu0 0.0
    %429 = vmatprep.subr.mxu0 0.0
    %430 = vmatpush1.msra.mxu0 0.0
    %431 = vmatprep.subr.mxu0 0.0
    %432 = vmatpush1.msra.mxu0 0.0
    %433 = vmatprep.subr.mxu0 0.0
    %434 = vmatpush1.msra.mxu0 0.0
    %435 = vmatprep.subr.mxu0 0.0
    %436 = vmatpush1.msra.mxu0 0.0
    %437 = vmatprep.subr.mxu0 0.0
    %438 = vmatpush1.msra.mxu0 0.0
    %439 = vmatprep.subr.mxu0 0.0
    %440 = vmatpush1.msra.mxu0 0.0
    %441 = vmatprep.subr.mxu0 0.0
    %442 = vmatpush1.msra.mxu0 0.0
    %443 = vmatprep.mubr.f32.mxu0 0.0
    %444 = vmatmul.mubr.f32.gmra.mrb[0].mxu0 %v204
    %v445 = vpop.f32.mrb[0].mxu0
    %v446 = vadd.f32 0.0, %v445
    %v447 = vpop.f32.mrb[0].mxu0
    %448 = vdwg.mxu0
    %v449 = vadd.f32 %v376, %v446
    %v450 = vmul.f32 %v449, %v38
    %v451 = vtanh.pop %v450
    %v452 = vadd.f32 %v451, 1.0
    %v453 = vmul.f32 %v452, 0.5
    %v454 = vmul.f32 %v453, 0.0
    %456 = vrot.lane.b32.xlu0 %v451, 64
    %v457 = vpop.permute.xlu0 %456
    %v459 = vmul.f32 %v453, %v457
    %461 = vrot.lane.b32.xlu0 %v459, 32
    %v462 = vpop.permute.xlu0 %461
    %v464 = vadd.f32 %v454, %v462
    %v465 = vtanh.pop %v464
    %467 = vrot.lane.b32.xlu0 %v465, 64
    %v468 = vpop.permute.xlu0 %467
    %v470 = vmul.f32 %v453, %v468
    %v471 = vld [vmem:[%s7] sm:$0xff]
    %v472 = vld [vmem:[%s7 + $0x8] sm:$0xff]
    %v473 = vld [vmem:[%s7 + $0x10] sm:$0xff]
    %v474 = vld [vmem:[%s7 + $0x18] sm:$0xff]
    %475 = vmatprep.subr.mxu0 0.0
    %476 = vmatpush1.msra.mxu0 %v189
    %477 = vmatprep.subr.mxu0 0.0
    %478 = vmatpush1.msra.mxu0 %v190
    %479 = vmatprep.subr.mxu0 0.0
    %480 = vmatpush1.msra.mxu0 %v191
    %481 = vmatprep.subr.mxu0 0.0
    %482 = vmatpush1.msra.mxu0 %v192
    %483 = vmatprep.subr.mxu0 0.0
    %484 = vmatpush1.msra.mxu0 0.0
    %485 = vmatprep.subr.mxu0 0.0
    %486 = vmatpush1.msra.mxu0 0.0
    %487 = vmatprep.subr.mxu0 0.0
    %488 = vmatpush1.msra.mxu0 0.0
    %489 = vmatprep.subr.mxu0 0.0
    %490 = vmatpush1.msra.mxu0 0.0
    %491 = vmatprep.subr.mxu0 0.0
    %492 = vmatpush1.msra.mxu0 0.0
    %493 = vmatprep.subr.mxu0 0.0
    %494 = vmatpush1.msra.mxu0 0.0
    %495 = vmatprep.subr.mxu0 0.0
    %496 = vmatpush1.msra.mxu0 0.0
    %497 = vmatprep.subr.mxu0 0.0
    %498 = vmatpush1.msra.mxu0 0.0
    %499 = vmatprep.subr.mxu0 0.0
    %500 = vmatpush1.msra.mxu0 0.0
    %501 = vmatprep.subr.mxu0 0.0
    %502 = vmatpush1.msra.mxu0 0.0
    %503 = vmatprep.subr.mxu0 0.0
    %504 = vmatpush1.msra.mxu0 0.0
    %505 = vmatprep.subr.mxu0 0.0
    %506 = vmatpush1.msra.mxu0 0.0
    %507 = vmatprep.subr.mxu0 0.0
    %508 = vmatpush1.msra.mxu0 0.0
    %509 = vmatprep.subr.mxu0 0.0
    %510 = vmatpush1.msra.mxu0 0.0
    %511 = vmatprep.subr.mxu0 0.0
    %512 = vmatpush1.msra.mxu0 0.0
    %513 = vmatprep.subr.mxu0 0.0
    %514 = vmatpush1.msra.mxu0 0.0
    %515 = vmatprep.subr.mxu0 0.0
    %516 = vmatpush1.msra.mxu0 0.0
    %517 = vmatprep.subr.mxu0 0.0
    %518 = vmatpush1.msra.mxu0 0.0
    %519 = vmatprep.subr.mxu0 0.0
    %520 = vmatpush1.msra.mxu0 0.0
    %521 = vmatprep.subr.mxu0 0.0
    %522 = vmatpush1.msra.mxu0 0.0
    %523 = vmatprep.subr.mxu0 0.0
    %524 = vmatpush1.msra.mxu0 0.0
    %525 = vmatprep.subr.mxu0 0.0
    %526 = vmatpush1.msra.mxu0 0.0
    %527 = vmatprep.subr.mxu0 0.0
    %528 = vmatpush1.msra.mxu0 0.0
    %529 = vmatprep.subr.mxu0 0.0
    %530 = vmatpush1.msra.mxu0 0.0
    %531 = vmatprep.subr.mxu0 0.0
    %532 = vmatpush1.msra.mxu0 0.0
    %533 = vmatprep.subr.mxu0 0.0
    %534 = vmatpush1.msra.mxu0 0.0
    %535 = vmatprep.subr.mxu0 0.0
    %536 = vmatpush1.msra.mxu0 0.0
    %537 = vmatprep.subr.mxu0 0.0
    %538 = vmatpush1.msra.mxu0 0.0
    %539 = vmatprep.mubr.f32.mxu0 0.0
    %540 = vmatmul.mubr.f32.gmra.mrb[0].mxu0 %v307
    %v541 = vpop.f32.mrb[0].mxu0
    %v542 = vadd.f32 0.0, %v541
    %v543 = vpop.f32.mrb[0].mxu0
    %544 = vdwg.mxu0
    %v545 = vadd.f32 %v156, %v542
    %v546 = vmul.f32 %v545, %v38
    %v547 = vtanh.pop %v546
    %v548 = vadd.f32 %v547, 1.0
    %v549 = vmul.f32 %v548, 0.5
    %v550 = vmul.f32 %v549, %v291
    %552 = vrot.lane.b32.xlu0 %v547, 64
    %v553 = vpop.permute.xlu0 %552
    %v555 = vmul.f32 %v549, %v553
    %557 = vrot.lane.b32.xlu0 %v555, 32
    %v558 = vpop.permute.xlu0 %557
    %v560 = vadd.f32 %v550, %v558
    %v561 = vtanh.pop %v560
    %563 = vrot.lane.b32.xlu0 %v561, 64
    %v564 = vpop.permute.xlu0 %563
    %v566 = vmul.f32 %v549, %v564
    %568 = vrot.lane.b32.xlu0 %v566, 32
    %v569 = vpop.permute.xlu0 %568
    %v570 = vsel %vm202, %v569, 0
    %572 = vmatprep.subr.mxu0 0.0
    %573 = vmatpush1.msra.mxu0 %v197
    %574 = vmatprep.subr.mxu0 0.0
    %575 = vmatpush1.msra.mxu0 %v198
    %576 = vmatprep.subr.mxu0 0.0
    %577 = vmatpush1.msra.mxu0 %v199
    %578 = vmatprep.subr.mxu0 0.0
    %579 = vmatpush1.msra.mxu0 %v200
    %580 = vmatprep.subr.mxu0 0.0
    %581 = vmatpush1.msra.mxu0 0.0
    %582 = vmatprep.subr.mxu0 0.0
    %583 = vmatpush1.msra.mxu0 0.0
    %584 = vmatprep.subr.mxu0 0.0
    %585 = vmatpush1.msra.mxu0 0.0
    %586 = vmatprep.subr.mxu0 0.0
    %587 = vmatpush1.msra.mxu0 0.0
    %588 = vmatprep.subr.mxu0 0.0
    %589 = vmatpush1.msra.mxu0 0.0
    %590 = vmatprep.subr.mxu0 0.0
    %591 = vmatpush1.msra.mxu0 0.0
    %592 = vmatprep.subr.mxu0 0.0
    %593 = vmatpush1.msra.mxu0 0.0
    %594 = vmatprep.subr.mxu0 0.0
    %595 = vmatpush1.msra.mxu0 0.0
    %596 = vmatprep.subr.mxu0 0.0
    %597 = vmatpush1.msra.mxu0 0.0
    %598 = vmatprep.subr.mxu0 0.0
    %599 = vmatpush1.msra.mxu0 0.0
    %600 = vmatprep.subr.mxu0 0.0
    %601 = vmatpush1.msra.mxu0 0.0
    %602 = vmatprep.subr.mxu0 0.0
    %603 = vmatpush1.msra.mxu0 0.0
    %604 = vmatprep.subr.mxu0 0.0
    %605 = vmatpush1.msra.mxu0 0.0
    %606 = vmatprep.subr.mxu0 0.0
    %607 = vmatpush1.msra.mxu0 0.0
    %608 = vmatprep.subr.mxu0 0.0
    %609 = vmatpush1.msra.mxu0 0.0
    %610 = vmatprep.subr.mxu0 0.0
    %611 = vmatpush1.msra.mxu0 0.0
    %612 = vmatprep.subr.mxu0 0.0
    %613 = vmatpush1.msra.mxu0 0.0
    %614 = vmatprep.subr.mxu0 0.0
    %615 = vmatpush1.msra.mxu0 0.0
    %616 = vmatprep.subr.mxu0 0.0
    %617 = vmatpush1.msra.mxu0 0.0
    %618 = vmatprep.subr.mxu0 0.0
    %619 = vmatpush1.msra.mxu0 0.0
    %620 = vmatprep.subr.mxu0 0.0
    %621 = vmatpush1.msra.mxu0 0.0
    %622 = vmatprep.subr.mxu0 0.0
    %623 = vmatpush1.msra.mxu0 0.0
    %624 = vmatprep.subr.mxu0 0.0
    %625 = vmatpush1.msra.mxu0 0.0
    %626 = vmatprep.subr.mxu0 0.0
    %627 = vmatpush1.msra.mxu0 0.0
    %628 = vmatprep.subr.mxu0 0.0
    %629 = vmatpush1.msra.mxu0 0.0
    %630 = vmatprep.subr.mxu0 0.0
    %631 = vmatpush1.msra.mxu0 0.0
    %632 = vmatprep.subr.mxu0 0.0
    %633 = vmatpush1.msra.mxu0 0.0
    %634 = vmatprep.subr.mxu0 0.0
    %635 = vmatpush1.msra.mxu0 0.0
    %636 = vmatprep.mubr.f32.mxu0 0.0
    %637 = vmatmul.mubr.f32.gmra.mrb[0].mxu0 %v570
    %v638 = vpop.f32.mrb[0].mxu0
    %v639 = vadd.f32 %v302, %v638
    %v640 = vpop.f32.mrb[0].mxu0
    %641 = vdwg.mxu0
    %643 = vrot.lane.b32.xlu0 %v470, 32
    %v644 = vpop.permute.xlu0 %643
    %v645 = vsel %vm202, %v644, 0
    %647 = vmatprep.subr.mxu0 0.0
    %648 = vmatpush1.msra.mxu0 %v193
    %649 = vmatprep.subr.mxu0 0.0
    %650 = vmatpush1.msra.mxu0 %v194
    %651 = vmatprep.subr.mxu0 0.0
    %652 = vmatpush1.msra.mxu0 %v195
    %653 = vmatprep.subr.mxu0 0.0
    %654 = vmatpush1.msra.mxu0 %v196
    %655 = vmatprep.subr.mxu0 0.0
    %656 = vmatpush1.msra.mxu0 0.0
    %657 = vmatprep.subr.mxu0 0.0
    %658 = vmatpush1.msra.mxu0 0.0
    %659 = vmatprep.subr.mxu0 0.0
    %660 = vmatpush1.msra.mxu0 0.0
    %661 = vmatprep.subr.mxu0 0.0
    %662 = vmatpush1.msra.mxu0 0.0
    %663 = vmatprep.subr.mxu0 0.0
    %664 = vmatpush1.msra.mxu0 0.0
    %665 = vmatprep.subr.mxu0 0.0
    %666 = vmatpush1.msra.mxu0 0.0
    %667 = vmatprep.subr.mxu0 0.0
    %668 = vmatpush1.msra.mxu0 0.0
    %669 = vmatprep.subr.mxu0 0.0
    %670 = vmatpush1.msra.mxu0 0.0
    %671 = vmatprep.subr.mxu0 0.0
    %672 = vmatpush1.msra.mxu0 0.0
    %673 = vmatprep.subr.mxu0 0.0
    %674 = vmatpush1.msra.mxu0 0.0
    %675 = vmatprep.subr.mxu0 0.0
    %676 = vmatpush1.msra.mxu0 0.0
    %677 = vmatprep.subr.mxu0 0.0
    %678 = vmatpush1.msra.mxu0 0.0
    %679 = vmatprep.subr.mxu0 0.0
    %680 = vmatpush1.msra.mxu0 0.0
    %681 = vmatprep.subr.mxu0 0.0
    %682 = vmatpush1.msra.mxu0 0.0
    %683 = vmatprep.subr.mxu0 0.0
    %684 = vmatpush1.msra.mxu0 0.0
    %685 = vmatprep.subr.mxu0 0.0
    %686 = vmatpush1.msra.mxu0 0.0
    %687 = vmatprep.subr.mxu0 0.0
    %688 = vmatpush1.msra.mxu0 0.0
    %689 = vmatprep.subr.mxu0 0.0
    %690 = vmatpush1.msra.mxu0 0.0
    %691 = vmatprep.subr.mxu0 0.0
    %692 = vmatpush1.msra.mxu0 0.0
    %693 = vmatprep.subr.mxu0 0.0
    %694 = vmatpush1.msra.mxu0 0.0
    %695 = vmatprep.subr.mxu0 0.0
    %696 = vmatpush1.msra.mxu0 0.0
    %697 = vmatprep.subr.mxu0 0.0
    %698 = vmatpush1.msra.mxu0 0.0
    %699 = vmatprep.subr.mxu0 0.0
    %700 = vmatpush1.msra.mxu0 0.0
    %701 = vmatprep.subr.mxu0 0.0
    %702 = vmatpush1.msra.mxu0 0.0
    %703 = vmatprep.subr.mxu0 0.0
    %704 = vmatpush1.msra.mxu0 0.0
    %705 = vmatprep.subr.mxu0 0.0
    %706 = vmatpush1.msra.mxu0 0.0
    %707 = vmatprep.subr.mxu0 0.0
    %708 = vmatpush1.msra.mxu0 0.0
    %709 = vmatprep.subr.mxu0 0.0
    %710 = vmatpush1.msra.mxu0 0.0
    %711 = vmatprep.mubr.f32.mxu0 0.0
    %712 = vmatmul.mubr.f32.gmra.mrb[0].mxu0 %v645
    %v713 = vpop.f32.mrb[0].mxu0
    %v714 = vadd.f32 0.0, %v713
    %v715 = vpop.f32.mrb[0].mxu0
    %716 = vdwg.mxu0
    %v717 = vadd.f32 %v639, %v714
    %v718 = vmul.f32 %v717, %v38
    %v719 = vtanh.pop %v718
    %v720 = vadd.f32 %v719, 1.0
    %v721 = vmul.f32 %v720, 0.5
    %v722 = vmul.f32 %v721, %v464
    %724 = vrot.lane.b32.xlu0 %v719, 64
    %v725 = vpop.permute.xlu0 %724
    %v727 = vmul.f32 %v721, %v725
    %729 = vrot.lane.b32.xlu0 %v727, 32
    %v730 = vpop.permute.xlu0 %729
    %v732 = vadd.f32 %v722, %v730
    %v733 = vtanh.pop %v732
    %735 = vrot.lane.b32.xlu0 %v733, 64
    %v736 = vpop.permute.xlu0 %735
    %v738 = vmul.f32 %v721, %v736
    %v739 = vld [vmem:[%s7 + $0x20] sm:$0xff]
    %v740 = vld [vmem:[%s7 + $0x28] sm:$0xff]
    %v741 = vld [vmem:[%s7 + $0x30] sm:$0xff]
    %v742 = vld [vmem:[%s7 + $0x38] sm:$0xff]
    %744 = vrot.lane.b32.xlu0 %v738, 32
    %v745 = vpop.permute.xlu0 %744
    %v746 = vsel %vm202, %v745, 0
    %748 = vmatprep.subr.mxu0 0.0
    %749 = vmatpush1.msra.mxu0 %v739
    %750 = vmatprep.subr.mxu0 0.0
    %751 = vmatpush1.msra.mxu0 %v740
    %752 = vmatprep.subr.mxu0 0.0
    %753 = vmatpush1.msra.mxu0 %v741
    %754 = vmatprep.subr.mxu0 0.0
    %755 = vmatpush1.msra.mxu0 %v742
    %756 = vmatprep.subr.mxu0 0.0
    %757 = vmatpush1.msra.mxu0 0.0
    %758 = vmatprep.subr.mxu0 0.0
    %759 = vmatpush1.msra.mxu0 0.0
    %760 = vmatprep.subr.mxu0 0.0
    %761 = vmatpush1.msra.mxu0 0.0
    %762 = vmatprep.subr.mxu0 0.0
    %763 = vmatpush1.msra.mxu0 0.0
    %764 = vmatprep.subr.mxu0 0.0
    %765 = vmatpush1.msra.mxu0 0.0
    %766 = vmatprep.subr.mxu0 0.0
    %767 = vmatpush1.msra.mxu0 0.0
    %768 = vmatprep.subr.mxu0 0.0
    %769 = vmatpush1.msra.mxu0 0.0
    %770 = vmatprep.subr.mxu0 0.0
    %771 = vmatpush1.msra.mxu0 0.0
    %772 = vmatprep.subr.mxu0 0.0
    %773 = vmatpush1.msra.mxu0 0.0
    %774 = vmatprep.subr.mxu0 0.0
    %775 = vmatpush1.msra.mxu0 0.0
    %776 = vmatprep.subr.mxu0 0.0
    %777 = vmatpush1.msra.mxu0 0.0
    %778 = vmatprep.subr.mxu0 0.0
    %779 = vmatpush1.msra.mxu0 0.0
    %780 = vmatprep.subr.mxu0 0.0
    %781 = vmatpush1.msra.mxu0 0.0
    %782 = vmatprep.subr.mxu0 0.0
    %783 = vmatpush1.msra.mxu0 0.0
    %784 = vmatprep.subr.mxu0 0.0
    %785 = vmatpush1.msra.mxu0 0.0
    %786 = vmatprep.subr.mxu0 0.0
    %787 = vmatpush1.msra.mxu0 0.0
    %788 = vmatprep.subr.mxu0 0.0
    %789 = vmatpush1.msra.mxu0 0.0
    %790 = vmatprep.subr.mxu0 0.0
    %791 = vmatpush1.msra.mxu0 0.0
    %792 = vmatprep.subr.mxu0 0.0
    %793 = vmatpush1.msra.mxu0 0.0
    %794 = vmatprep.subr.mxu0 0.0
    %795 = vmatpush1.msra.mxu0 0.0
    %796 = vmatprep.subr.mxu0 0.0
    %797 = vmatpush1.msra.mxu0 0.0
    %798 = vmatprep.subr.mxu0 0.0
    %799 = vmatpush1.msra.mxu0 0.0
    %800 = vmatprep.subr.mxu0 0.0
    %801 = vmatpush1.msra.mxu0 0.0
    %802 = vmatprep.subr.mxu0 0.0
    %803 = vmatpush1.msra.mxu0 0.0
    %804 = vmatprep.subr.mxu0 0.0
    %805 = vmatpush1.msra.mxu0 0.0
    %806 = vmatprep.subr.mxu0 0.0
    %807 = vmatpush1.msra.mxu0 0.0
    %808 = vmatprep.subr.mxu0 0.0
    %809 = vmatpush1.msra.mxu0 0.0
    %810 = vmatprep.subr.mxu0 0.0
    %811 = vmatpush1.msra.mxu0 0.0
    %812 = vmatprep.mubr.f32.mxu0 0.0
    %813 = vmatmul.mubr.f32.gmra.mrb[0].mxu0 %v746
    %v814 = vpop.f32.mrb[0].mxu0
    %v815 = vadd.f32 0.0, %v814
    %v816 = vpop.f32.mrb[0].mxu0
    %817 = vdwg.mxu0
    %818 = vmatprep.subr.mxu0 0.0
    %819 = vmatpush1.msra.mxu0 %v471
    %820 = vmatprep.subr.mxu0 0.0
    %821 = vmatpush1.msra.mxu0 %v472
    %822 = vmatprep.subr.mxu0 0.0
    %823 = vmatpush1.msra.mxu0 %v473
    %824 = vmatprep.subr.mxu0 0.0
    %825 = vmatpush1.msra.mxu0 %v474
    %826 = vmatprep.subr.mxu0 0.0
    %827 = vmatpush1.msra.mxu0 0.0
    %828 = vmatprep.subr.mxu0 0.0
    %829 = vmatpush1.msra.mxu0 0.0
    %830 = vmatprep.subr.mxu0 0.0
    %831 = vmatpush1.msra.mxu0 0.0
    %832 = vmatprep.subr.mxu0 0.0
    %833 = vmatpush1.msra.mxu0 0.0
    %834 = vmatprep.subr.mxu0 0.0
    %835 = vmatpush1.msra.mxu0 0.0
    %836 = vmatprep.subr.mxu0 0.0
    %837 = vmatpush1.msra.mxu0 0.0
    %838 = vmatprep.subr.mxu0 0.0
    %839 = vmatpush1.msra.mxu0 0.0
    %840 = vmatprep.subr.mxu0 0.0
    %841 = vmatpush1.msra.mxu0 0.0
    %842 = vmatprep.subr.mxu0 0.0
    %843 = vmatpush1.msra.mxu0 0.0
    %844 = vmatprep.subr.mxu0 0.0
    %845 = vmatpush1.msra.mxu0 0.0
    %846 = vmatprep.subr.mxu0 0.0
    %847 = vmatpush1.msra.mxu0 0.0
    %848 = vmatprep.subr.mxu0 0.0
    %849 = vmatpush1.msra.mxu0 0.0
    %850 = vmatprep.subr.mxu0 0.0
    %851 = vmatpush1.msra.mxu0 0.0
    %852 = vmatprep.subr.mxu0 0.0
    %853 = vmatpush1.msra.mxu0 0.0
    %854 = vmatprep.subr.mxu0 0.0
    %855 = vmatpush1.msra.mxu0 0.0
    %856 = vmatprep.subr.mxu0 0.0
    %857 = vmatpush1.msra.mxu0 0.0
    %858 = vmatprep.subr.mxu0 0.0
    %859 = vmatpush1.msra.mxu0 0.0
    %860 = vmatprep.subr.mxu0 0.0
    %861 = vmatpush1.msra.mxu0 0.0
    %862 = vmatprep.subr.mxu0 0.0
    %863 = vmatpush1.msra.mxu0 0.0
    %864 = vmatprep.subr.mxu0 0.0
    %865 = vmatpush1.msra.mxu0 0.0
    %866 = vmatprep.subr.mxu0 0.0
    %867 = vmatpush1.msra.mxu0 0.0
    %868 = vmatprep.subr.mxu0 0.0
    %869 = vmatpush1.msra.mxu0 0.0
    %870 = vmatprep.subr.mxu0 0.0
    %871 = vmatpush1.msra.mxu0 0.0
    %872 = vmatprep.subr.mxu0 0.0
    %873 = vmatpush1.msra.mxu0 0.0
    %874 = vmatprep.subr.mxu0 0.0
    %875 = vmatpush1.msra.mxu0 0.0
    %876 = vmatprep.subr.mxu0 0.0
    %877 = vmatpush1.msra.mxu0 0.0
    %878 = vmatprep.subr.mxu0 0.0
    %879 = vmatpush1.msra.mxu0 0.0
    %880 = vmatprep.subr.mxu0 0.0
    %881 = vmatpush1.msra.mxu0 0.0
    %882 = vmatprep.mubr.f32.mxu0 0.0
    %883 = vmatmul.mubr.f32.gmra.mrb[0].mxu0 %v645
    %v884 = vpop.f32.mrb[0].mxu0
    %v885 = vadd.f32 %v815, %v884
    %v886 = vpop.f32.mrb[0].mxu0
    %887 = vdwg.mxu0
    %888 = vmatprep.subr.mxu0 0.0
    %889 = vmatpush1.msra.mxu0 %v189
    %890 = vmatprep.subr.mxu0 0.0
    %891 = vmatpush1.msra.mxu0 %v190
    %892 = vmatprep.subr.mxu0 0.0
    %893 = vmatpush1.msra.mxu0 %v191
    %894 = vmatprep.subr.mxu0 0.0
    %895 = vmatpush1.msra.mxu0 %v192
    %896 = vmatprep.subr.mxu0 0.0
    %897 = vmatpush1.msra.mxu0 0.0
    %898 = vmatprep.subr.mxu0 0.0
    %899 = vmatpush1.msra.mxu0 0.0
    %900 = vmatprep.subr.mxu0 0.0
    %901 = vmatpush1.msra.mxu0 0.0
    %902 = vmatprep.subr.mxu0 0.0
    %903 = vmatpush1.msra.mxu0 0.0
    %904 = vmatprep.subr.mxu0 0.0
    %905 = vmatpush1.msra.mxu0 0.0
    %906 = vmatprep.subr.mxu0 0.0
    %907 = vmatpush1.msra.mxu0 0.0
    %908 = vmatprep.subr.mxu0 0.0
    %909 = vmatpush1.msra.mxu0 0.0
    %910 = vmatprep.subr.mxu0 0.0
    %911 = vmatpush1.msra.mxu0 0.0
    %912 = vmatprep.subr.mxu0 0.0
    %913 = vmatpush1.msra.mxu0 0.0
    %914 = vmatprep.subr.mxu0 0.0
    %915 = vmatpush1.msra.mxu0 0.0
    %916 = vmatprep.subr.mxu0 0.0
    %917 = vmatpush1.msra.mxu0 0.0
    %918 = vmatprep.subr.mxu0 0.0
    %919 = vmatpush1.msra.mxu0 0.0
    %920 = vmatprep.subr.mxu0 0.0
    %921 = vmatpush1.msra.mxu0 0.0
    %922 = vmatprep.subr.mxu0 0.0
    %923 = vmatpush1.msra.mxu0 0.0
    %924 = vmatprep.subr.mxu0 0.0
    %925 = vmatpush1.msra.mxu0 0.0
    %926 = vmatprep.subr.mxu0 0.0
    %927 = vmatpush1.msra.mxu0 0.0
    %928 = vmatprep.subr.mxu0 0.0
    %929 = vmatpush1.msra.mxu0 0.0
    %930 = vmatprep.subr.mxu0 0.0
    %931 = vmatpush1.msra.mxu0 0.0
    %932 = vmatprep.subr.mxu0 0.0
    %933 = vmatpush1.msra.mxu0 0.0
    %934 = vmatprep.subr.mxu0 0.0
    %935 = vmatpush1.msra.mxu0 0.0
    %936 = vmatprep.subr.mxu0 0.0
    %937 = vmatpush1.msra.mxu0 0.0
    %938 = vmatprep.subr.mxu0 0.0
    %939 = vmatpush1.msra.mxu0 0.0
    %940 = vmatprep.subr.mxu0 0.0
    %941 = vmatpush1.msra.mxu0 0.0
    %942 = vmatprep.subr.mxu0 0.0
    %943 = vmatpush1.msra.mxu0 0.0
    %944 = vmatprep.subr.mxu0 0.0
    %945 = vmatpush1.msra.mxu0 0.0
    %946 = vmatprep.subr.mxu0 0.0
    %947 = vmatpush1.msra.mxu0 0.0
    %948 = vmatprep.subr.mxu0 0.0
    %949 = vmatpush1.msra.mxu0 0.0
    %950 = vmatprep.subr.mxu0 0.0
    %951 = vmatpush1.msra.mxu0 0.0
    %952 = vmatprep.mubr.f32.mxu0 0.0
    %953 = vmatmul.mubr.f32.gmra.mrb[0].mxu0 %v570
    %v954 = vpop.f32.mrb[0].mxu0
    %v955 = vadd.f32 0.0, %v954
    %v956 = vpop.f32.mrb[0].mxu0
    %957 = vdwg.mxu0
    %v958 = vadd.f32 %v161, %v955
    %v959 = vmul.f32 %v958, %v38
    %v960 = vtanh.pop %v959
    %v961 = vadd.f32 %v960, 1.0
    %v962 = vmul.f32 %v961, 0.5
    %v963 = vmul.f32 %v962, %v560
    %965 = vrot.lane.b32.xlu0 %v960, 64
    %v966 = vpop.permute.xlu0 %965
    %v968 = vmul.f32 %v962, %v966
    %970 = vrot.lane.b32.xlu0 %v968, 32
    %v971 = vpop.permute.xlu0 %970
    %v973 = vadd.f32 %v963, %v971
    %v974 = vtanh.pop %v973
    %976 = vrot.lane.b32.xlu0 %v974, 64
    %v977 = vpop.permute.xlu0 %976
    %v979 = vmul.f32 %v962, %v977
    %981 = vrot.lane.b32.xlu0 %v979, 32
    %v982 = vpop.permute.xlu0 %981
    %v983 = vsel %vm202, %v982, 0
    %985 = vmatprep.subr.mxu0 0.0
    %986 = vmatpush1.msra.mxu0 %v197
    %987 = vmatprep.subr.mxu0 0.0
    %988 = vmatpush1.msra.mxu0 %v198
    %989 = vmatprep.subr.mxu0 0.0
    %990 = vmatpush1.msra.mxu0 %v199
    %991 = vmatprep.subr.mxu0 0.0
    %992 = vmatpush1.msra.mxu0 %v200
    %993 = vmatprep.subr.mxu0 0.0
    %994 = vmatpush1.msra.mxu0 0.0
    %995 = vmatprep.subr.mxu0 0.0
    %996 = vmatpush1.msra.mxu0 0.0
    %997 = vmatprep.subr.mxu0 0.0
    %998 = vmatpush1.msra.mxu0 0.0
    %999 = vmatprep.subr.mxu0 0.0
    %1000 = vmatpush1.msra.mxu0 0.0
    %1001 = vmatprep.subr.mxu0 0.0
    %1002 = vmatpush1.msra.mxu0 0.0
    %1003 = vmatprep.subr.mxu0 0.0
    %1004 = vmatpush1.msra.mxu0 0.0
    %1005 = vmatprep.subr.mxu0 0.0
    %1006 = vmatpush1.msra.mxu0 0.0
    %1007 = vmatprep.subr.mxu0 0.0
    %1008 = vmatpush1.msra.mxu0 0.0
    %1009 = vmatprep.subr.mxu0 0.0
    %1010 = vmatpush1.msra.mxu0 0.0
    %1011 = vmatprep.subr.mxu0 0.0
    %1012 = vmatpush1.msra.mxu0 0.0
    %1013 = vmatprep.subr.mxu0 0.0
    %1014 = vmatpush1.msra.mxu0 0.0
    %1015 = vmatprep.subr.mxu0 0.0
    %1016 = vmatpush1.msra.mxu0 0.0
    %1017 = vmatprep.subr.mxu0 0.0
    %1018 = vmatpush1.msra.mxu0 0.0
    %1019 = vmatprep.subr.mxu0 0.0
    %1020 = vmatpush1.msra.mxu0 0.0
    %1021 = vmatprep.subr.mxu0 0.0
    %1022 = vmatpush1.msra.mxu0 0.0
    %1023 = vmatprep.subr.mxu0 0.0
    %1024 = vmatpush1.msra.mxu0 0.0
    %1025 = vmatprep.subr.mxu0 0.0
    %1026 = vmatpush1.msra.mxu0 0.0
    %1027 = vmatprep.subr.mxu0 0.0
    %1028 = vmatpush1.msra.mxu0 0.0
    %1029 = vmatprep.subr.mxu0 0.0
    %1030 = vmatpush1.msra.mxu0 0.0
    %1031 = vmatprep.subr.mxu0 0.0
    %1032 = vmatpush1.msra.mxu0 0.0
    %1033 = vmatprep.subr.mxu0 0.0
    %1034 = vmatpush1.msra.mxu0 0.0
    %1035 = vmatprep.subr.mxu0 0.0
    %1036 = vmatpush1.msra.mxu0 0.0
    %1037 = vmatprep.subr.mxu0 0.0
    %1038 = vmatpush1.msra.mxu0 0.0
    %1039 = vmatprep.subr.mxu0 0.0
    %1040 = vmatpush1.msra.mxu0 0.0
    %1041 = vmatprep.subr.mxu0 0.0
    %1042 = vmatpush1.msra.mxu0 0.0
    %1043 = vmatprep.subr.mxu0 0.0
    %1044 = vmatpush1.msra.mxu0 0.0
    %1045 = vmatprep.subr.mxu0 0.0
    %1046 = vmatpush1.msra.mxu0 0.0
    %1047 = vmatprep.subr.mxu0 0.0
    %1048 = vmatpush1.msra.mxu0 0.0
    %1049 = vmatprep.mubr.f32.mxu0 0.0
    %1050 = vmatmul.mubr.f32.gmra.mrb[0].mxu0 %v983
    %v1051 = vpop.f32.mrb[0].mxu0
    %v1052 = vadd.f32 %v302, %v1051
    %v1053 = vpop.f32.mrb[0].mxu0
    %1054 = vdwg.mxu0
    %1055 = vmatprep.subr.mxu0 0.0
    %1056 = vmatpush1.msra.mxu0 %v193
    %1057 = vmatprep.subr.mxu0 0.0
    %1058 = vmatpush1.msra.mxu0 %v194
    %1059 = vmatprep.subr.mxu0 0.0
    %1060 = vmatpush1.msra.mxu0 %v195
    %1061 = vmatprep.subr.mxu0 0.0
    %1062 = vmatpush1.msra.mxu0 %v196
    %1063 = vmatprep.subr.mxu0 0.0
    %1064 = vmatpush1.msra.mxu0 0.0
    %1065 = vmatprep.subr.mxu0 0.0
    %1066 = vmatpush1.msra.mxu0 0.0
    %1067 = vmatprep.subr.mxu0 0.0
    %1068 = vmatpush1.msra.mxu0 0.0
    %1069 = vmatprep.subr.mxu0 0.0
    %1070 = vmatpush1.msra.mxu0 0.0
    %1071 = vmatprep.subr.mxu0 0.0
    %1072 = vmatpush1.msra.mxu0 0.0
    %1073 = vmatprep.subr.mxu0 0.0
    %1074 = vmatpush1.msra.mxu0 0.0
    %1075 = vmatprep.subr.mxu0 0.0
    %1076 = vmatpush1.msra.mxu0 0.0
    %1077 = vmatprep.subr.mxu0 0.0
    %1078 = vmatpush1.msra.mxu0 0.0
    %1079 = vmatprep.subr.mxu0 0.0
    %1080 = vmatpush1.msra.mxu0 0.0
    %1081 = vmatprep.subr.mxu0 0.0
    %1082 = vmatpush1.msra.mxu0 0.0
    %1083 = vmatprep.subr.mxu0 0.0
    %1084 = vmatpush1.msra.mxu0 0.0
    %1085 = vmatprep.subr.mxu0 0.0
    %1086 = vmatpush1.msra.mxu0 0.0
    %1087 = vmatprep.subr.mxu0 0.0
    %1088 = vmatpush1.msra.mxu0 0.0
    %1089 = vmatprep.subr.mxu0 0.0
    %1090 = vmatpush1.msra.mxu0 0.0
    %1091 = vmatprep.subr.mxu0 0.0
    %1092 = vmatpush1.msra.mxu0 0.0
    %1093 = vmatprep.subr.mxu0 0.0
    %1094 = vmatpush1.msra.mxu0 0.0
    %1095 = vmatprep.subr.mxu0 0.0
    %1096 = vmatpush1.msra.mxu0 0.0
    %1097 = vmatprep.subr.mxu0 0.0
    %1098 = vmatpush1.msra.mxu0 0.0
    %1099 = vmatprep.subr.mxu0 0.0
    %1100 = vmatpush1.msra.mxu0 0.0
    %1101 = vmatprep.subr.mxu0 0.0
    %1102 = vmatpush1.msra.mxu0 0.0
    %1103 = vmatprep.subr.mxu0 0.0
    %1104 = vmatpush1.msra.mxu0 0.0
    %1105 = vmatprep.subr.mxu0 0.0
    %1106 = vmatpush1.msra.mxu0 0.0
    %1107 = vmatprep.subr.mxu0 0.0
    %1108 = vmatpush1.msra.mxu0 0.0
    %1109 = vmatprep.subr.mxu0 0.0
    %1110 = vmatpush1.msra.mxu0 0.0
    %1111 = vmatprep.subr.mxu0 0.0
    %1112 = vmatpush1.msra.mxu0 0.0
    %1113 = vmatprep.subr.mxu0 0.0
    %1114 = vmatpush1.msra.mxu0 0.0
    %1115 = vmatprep.subr.mxu0 0.0
    %1116 = vmatpush1.msra.mxu0 0.0
    %1117 = vmatprep.subr.mxu0 0.0
    %1118 = vmatpush1.msra.mxu0 0.0
    %1119 = vmatprep.mubr.f32.mxu0 0.0
    %1120 = vmatmul.mubr.f32.gmra.mrb[0].mxu0 %v746
    %v1121 = vpop.f32.mrb[0].mxu0
    %v1122 = vadd.f32 0.0, %v1121
    %v1123 = vpop.f32.mrb[0].mxu0
    %1124 = vdwg.mxu0
    %v1125 = vadd.f32 %v1052, %v1122
    %v1126 = vmul.f32 %v1125, %v38
    %v1127 = vtanh.pop %v1126
    %v1128 = vadd.f32 %v1127, 1.0
    %v1129 = vmul.f32 %v1128, 0.5
    %v1130 = vmul.f32 %v1129, %v732
    %1132 = vrot.lane.b32.xlu0 %v1127, 64
    %v1133 = vpop.permute.xlu0 %1132
    %v1135 = vmul.f32 %v1129, %v1133
    %1137 = vrot.lane.b32.xlu0 %v1135, 32
    %v1138 = vpop.permute.xlu0 %1137
    %v1140 = vadd.f32 %v1130, %v1138
    %v1141 = vtanh.pop %v1140
    %1143 = vrot.lane.b32.xlu0 %v1141, 64
    %v1144 = vpop.permute.xlu0 %1143
    %v1146 = vmul.f32 %v1129, %v1144
    %v1147 = vld [vmem:[%s7 + $0x40] sm:$0xff]
    %v1148 = vld [vmem:[%s7 + $0x48] sm:$0xff]
    %v1149 = vld [vmem:[%s7 + $0x50] sm:$0xff]
    %v1150 = vld [vmem:[%s7 + $0x58] sm:$0xff]
    %1152 = vrot.lane.b32.xlu0 %v1146, 32
    %v1153 = vpop.permute.xlu0 %1152
    %v1154 = vsel %vm202, %v1153, 0
    %1156 = vmatprep.subr.mxu0 0.0
    %1157 = vmatpush1.msra.mxu0 %v1147
    %1158 = vmatprep.subr.mxu0 0.0
    %1159 = vmatpush1.msra.mxu0 %v1148
    %1160 = vmatprep.subr.mxu0 0.0
    %1161 = vmatpush1.msra.mxu0 %v1149
    %1162 = vmatprep.subr.mxu0 0.0
    %1163 = vmatpush1.msra.mxu0 %v1150
    %1164 = vmatprep.subr.mxu0 0.0
    %1165 = vmatpush1.msra.mxu0 0.0
    %1166 = vmatprep.subr.mxu0 0.0
    %1167 = vmatpush1.msra.mxu0 0.0
    %1168 = vmatprep.subr.mxu0 0.0
    %1169 = vmatpush1.msra.mxu0 0.0
    %1170 = vmatprep.subr.mxu0 0.0
    %1171 = vmatpush1.msra.mxu0 0.0
    %1172 = vmatprep.subr.mxu0 0.0
    %1173 = vmatpush1.msra.mxu0 0.0
    %1174 = vmatprep.subr.mxu0 0.0
    %1175 = vmatpush1.msra.mxu0 0.0
    %1176 = vmatprep.subr.mxu0 0.0
    %1177 = vmatpush1.msra.mxu0 0.0
    %1178 = vmatprep.subr.mxu0 0.0
    %1179 = vmatpush1.msra.mxu0 0.0
    %1180 = vmatprep.subr.mxu0 0.0
    %1181 = vmatpush1.msra.mxu0 0.0
    %1182 = vmatprep.subr.mxu0 0.0
    %1183 = vmatpush1.msra.mxu0 0.0
    %1184 = vmatprep.subr.mxu0 0.0
    %1185 = vmatpush1.msra.mxu0 0.0
    %1186 = vmatprep.subr.mxu0 0.0
    %1187 = vmatpush1.msra.mxu0 0.0
    %1188 = vmatprep.subr.mxu0 0.0
    %1189 = vmatpush1.msra.mxu0 0.0
    %1190 = vmatprep.subr.mxu0 0.0
    %1191 = vmatpush1.msra.mxu0 0.0
    %1192 = vmatprep.subr.mxu0 0.0
    %1193 = vmatpush1.msra.mxu0 0.0
    %1194 = vmatprep.subr.mxu0 0.0
    %1195 = vmatpush1.msra.mxu0 0.0
    %1196 = vmatprep.subr.mxu0 0.0
    %1197 = vmatpush1.msra.mxu0 0.0
    %1198 = vmatprep.subr.mxu0 0.0
    %1199 = vmatpush1.msra.mxu0 0.0
    %1200 = vmatprep.subr.mxu0 0.0
    %1201 = vmatpush1.msra.mxu0 0.0
    %1202 = vmatprep.subr.mxu0 0.0
    %1203 = vmatpush1.msra.mxu0 0.0
    %1204 = vmatprep.subr.mxu0 0.0
    %1205 = vmatpush1.msra.mxu0 0.0
    %1206 = vmatprep.subr.mxu0 0.0
    %1207 = vmatpush1.msra.mxu0 0.0
    %1208 = vmatprep.subr.mxu0 0.0
    %1209 = vmatpush1.msra.mxu0 0.0
    %1210 = vmatprep.subr.mxu0 0.0
    %1211 = vmatpush1.msra.mxu0 0.0
    %1212 = vmatprep.subr.mxu0 0.0
    %1213 = vmatpush1.msra.mxu0 0.0
    %1214 = vmatprep.subr.mxu0 0.0
    %1215 = vmatpush1.msra.mxu0 0.0
    %1216 = vmatprep.subr.mxu0 0.0
    %1217 = vmatpush1.msra.mxu0 0.0
    %1218 = vmatprep.subr.mxu0 0.0
    %1219 = vmatpush1.msra.mxu0 0.0
    %1220 = vmatprep.mubr.f32.mxu0 0.0
    %1221 = vmatmul.mubr.f32.gmra.mrb[0].mxu0 %v1154
    %v1222 = vpop.f32.mrb[0].mxu0
    %v1223 = vadd.f32 0.0, %v1222
    %v1224 = vpop.f32.mrb[0].mxu0
    %1225 = vdwg.mxu0
    %v1226 = vadd.f32 %v885, %v1223
    %1227 = vmatprep.subr.mxu0 0.0
    %1228 = vmatpush1.msra.mxu0 %v189
    %1229 = vmatprep.subr.mxu0 0.0
    %1230 = vmatpush1.msra.mxu0 %v190
    %1231 = vmatprep.subr.mxu0 0.0
    %1232 = vmatpush1.msra.mxu0 %v191
    %1233 = vmatprep.subr.mxu0 0.0
    %1234 = vmatpush1.msra.mxu0 %v192
    %1235 = vmatprep.subr.mxu0 0.0
    %1236 = vmatpush1.msra.mxu0 0.0
    %1237 = vmatprep.subr.mxu0 0.0
    %1238 = vmatpush1.msra.mxu0 0.0
    %1239 = vmatprep.subr.mxu0 0.0
    %1240 = vmatpush1.msra.mxu0 0.0
    %1241 = vmatprep.subr.mxu0 0.0
    %1242 = vmatpush1.msra.mxu0 0.0
    %1243 = vmatprep.subr.mxu0 0.0
    %1244 = vmatpush1.msra.mxu0 0.0
    %1245 = vmatprep.subr.mxu0 0.0
    %1246 = vmatpush1.msra.mxu0 0.0
    %1247 = vmatprep.subr.mxu0 0.0
    %1248 = vmatpush1.msra.mxu0 0.0
    %1249 = vmatprep.subr.mxu0 0.0
    %1250 = vmatpush1.msra.mxu0 0.0
    %1251 = vmatprep.subr.mxu0 0.0
    %1252 = vmatpush1.msra.mxu0 0.0
    %1253 = vmatprep.subr.mxu0 0.0
    %1254 = vmatpush1.msra.mxu0 0.0
    %1255 = vmatprep.subr.mxu0 0.0
    %1256 = vmatpush1.msra.mxu0 0.0
    %1257 = vmatprep.subr.mxu0 0.0
    %1258 = vmatpush1.msra.mxu0 0.0
    %1259 = vmatprep.subr.mxu0 0.0
    %1260 = vmatpush1.msra.mxu0 0.0
    %1261 = vmatprep.subr.mxu0 0.0
    %1262 = vmatpush1.msra.mxu0 0.0
    %1263 = vmatprep.subr.mxu0 0.0
    %1264 = vmatpush1.msra.mxu0 0.0
    %1265 = vmatprep.subr.mxu0 0.0
    %1266 = vmatpush1.msra.mxu0 0.0
    %1267 = vmatprep.subr.mxu0 0.0
    %1268 = vmatpush1.msra.mxu0 0.0
    %1269 = vmatprep.subr.mxu0 0.0
    %1270 = vmatpush1.msra.mxu0 0.0
    %1271 = vmatprep.subr.mxu0 0.0
    %1272 = vmatpush1.msra.mxu0 0.0
    %1273 = vmatprep.subr.mxu0 0.0
    %1274 = vmatpush1.msra.mxu0 0.0
    %1275 = vmatprep.subr.mxu0 0.0
    %1276 = vmatpush1.msra.mxu0 0.0
    %1277 = vmatprep.subr.mxu0 0.0
    %1278 = vmatpush1.msra.mxu0 0.0
    %1279 = vmatprep.subr.mxu0 0.0
    %1280 = vmatpush1.msra.mxu0 0.0
    %1281 = vmatprep.subr.mxu0 0.0
    %1282 = vmatpush1.msra.mxu0 0.0
    %1283 = vmatprep.subr.mxu0 0.0
    %1284 = vmatpush1.msra.mxu0 0.0
    %1285 = vmatprep.subr.mxu0 0.0
    %1286 = vmatpush1.msra.mxu0 0.0
    %1287 = vmatprep.subr.mxu0 0.0
    %1288 = vmatpush1.msra.mxu0 0.0
    %1289 = vmatprep.subr.mxu0 0.0
    %1290 = vmatpush1.msra.mxu0 0.0
    %1291 = vmatprep.mubr.f32.mxu0 0.0
    %1292 = vmatmul.mubr.f32.gmra.mrb[0].mxu0 %v983
    %v1293 = vpop.f32.mrb[0].mxu0
    %v1294 = vadd.f32 0.0, %v1293
    %v1295 = vpop.f32.mrb[0].mxu0
    %1296 = vdwg.mxu0
    %v1297 = vadd.f32 %v166, %v1294
    %v1298 = vmul.f32 %v1297, %v38
    %v1299 = vtanh.pop %v1298
    %v1300 = vadd.f32 %v1299, 1.0
    %v1301 = vmul.f32 %v1300, 0.5
    %v1302 = vmul.f32 %v1301, %v973
    %1304 = vrot.lane.b32.xlu0 %v1299, 64
    %v1305 = vpop.permute.xlu0 %1304
    %v1307 = vmul.f32 %v1301, %v1305
    %1309 = vrot.lane.b32.xlu0 %v1307, 32
    %v1310 = vpop.permute.xlu0 %1309
    %v1312 = vadd.f32 %v1302, %v1310
    %v1313 = vtanh.pop %v1312
    %1315 = vrot.lane.b32.xlu0 %v1313, 64
    %v1316 = vpop.permute.xlu0 %1315
    %v1318 = vmul.f32 %v1301, %v1316
    %1320 = vrot.lane.b32.xlu0 %v1318, 32
    %v1321 = vpop.permute.xlu0 %1320
    %v1322 = vsel %vm202, %v1321, 0
    %1324 = vmatprep.subr.mxu0 0.0
    %1325 = vmatpush1.msra.mxu0 %v197
    %1326 = vmatprep.subr.mxu0 0.0
    %1327 = vmatpush1.msra.mxu0 %v198
    %1328 = vmatprep.subr.mxu0 0.0
    %1329 = vmatpush1.msra.mxu0 %v199
    %1330 = vmatprep.subr.mxu0 0.0
    %1331 = vmatpush1.msra.mxu0 %v200
    %1332 = vmatprep.subr.mxu0 0.0
    %1333 = vmatpush1.msra.mxu0 0.0
    %1334 = vmatprep.subr.mxu0 0.0
    %1335 = vmatpush1.msra.mxu0 0.0
    %1336 = vmatprep.subr.mxu0 0.0
    %1337 = vmatpush1.msra.mxu0 0.0
    %1338 = vmatprep.subr.mxu0 0.0
    %1339 = vmatpush1.msra.mxu0 0.0
    %1340 = vmatprep.subr.mxu0 0.0
    %1341 = vmatpush1.msra.mxu0 0.0
    %1342 = vmatprep.subr.mxu0 0.0
    %1343 = vmatpush1.msra.mxu0 0.0
    %1344 = vmatprep.subr.mxu0 0.0
    %1345 = vmatpush1.msra.mxu0 0.0
    %1346 = vmatprep.subr.mxu0 0.0
    %1347 = vmatpush1.msra.mxu0 0.0
    %1348 = vmatprep.subr.mxu0 0.0
    %1349 = vmatpush1.msra.mxu0 0.0
    %1350 = vmatprep.subr.mxu0 0.0
    %1351 = vmatpush1.msra.mxu0 0.0
    %1352 = vmatprep.subr.mxu0 0.0
    %1353 = vmatpush1.msra.mxu0 0.0
    %1354 = vmatprep.subr.mxu0 0.0
    %1355 = vmatpush1.msra.mxu0 0.0
    %1356 = vmatprep.subr.mxu0 0.0
    %1357 = vmatpush1.msra.mxu0 0.0
    %1358 = vmatprep.subr.mxu0 0.0
    %1359 = vmatpush1.msra.mxu0 0.0
    %1360 = vmatprep.subr.mxu0 0.0
    %1361 = vmatpush1.msra.mxu0 0.0
    %1362 = vmatprep.subr.mxu0 0.0
    %1363 = vmatpush1.msra.mxu0 0.0
    %1364 = vmatprep.subr.mxu0 0.0
    %1365 = vmatpush1.msra.mxu0 0.0
    %1366 = vmatprep.subr.mxu0 0.0
    %1367 = vmatpush1.msra.mxu0 0.0
    %1368 = vmatprep.subr.mxu0 0.0
    %1369 = vmatpush1.msra.mxu0 0.0
    %1370 = vmatprep.subr.mxu0 0.0
    %1371 = vmatpush1.msra.mxu0 0.0
    %1372 = vmatprep.subr.mxu0 0.0
    %1373 = vmatpush1.msra.mxu0 0.0
    %1374 = vmatprep.subr.mxu0 0.0
    %1375 = vmatpush1.msra.mxu0 0.0
    %1376 = vmatprep.subr.mxu0 0.0
    %1377 = vmatpush1.msra.mxu0 0.0
    %1378 = vmatprep.subr.mxu0 0.0
    %1379 = vmatpush1.msra.mxu0 0.0
    %1380 = vmatprep.subr.mxu0 0.0
    %1381 = vmatpush1.msra.mxu0 0.0
    %1382 = vmatprep.subr.mxu0 0.0
    %1383 = vmatpush1.msra.mxu0 0.0
    %1384 = vmatprep.subr.mxu0 0.0
    %1385 = vmatpush1.msra.mxu0 0.0
    %1386 = vmatprep.subr.mxu0 0.0
    %1387 = vmatpush1.msra.mxu0 0.0
    %1388 = vmatprep.mubr.f32.mxu0 0.0
    %1389 = vmatmul.mubr.f32.gmra.mrb[0].mxu0 %v1322
    %v1390 = vpop.f32.mrb[0].mxu0
    %v1391 = vadd.f32 %v302, %v1390
    %v1392 = vpop.f32.mrb[0].mxu0
    %1393 = vdwg.mxu0
    %1394 = vmatprep.subr.mxu0 0.0
    %1395 = vmatpush1.msra.mxu0 %v193
    %1396 = vmatprep.subr.mxu0 0.0
    %1397 = vmatpush1.msra.mxu0 %v194
    %1398 = vmatprep.subr.mxu0 0.0
    %1399 = vmatpush1.msra.mxu0 %v195
    %1400 = vmatprep.subr.mxu0 0.0
    %1401 = vmatpush1.msra.mxu0 %v196
    %1402 = vmatprep.subr.mxu0 0.0
    %1403 = vmatpush1.msra.mxu0 0.0
    %1404 = vmatprep.subr.mxu0 0.0
    %1405 = vmatpush1.msra.mxu0 0.0
    %1406 = vmatprep.subr.mxu0 0.0
    %1407 = vmatpush1.msra.mxu0 0.0
    %1408 = vmatprep.subr.mxu0 0.0
    %1409 = vmatpush1.msra.mxu0 0.0
    %1410 = vmatprep.subr.mxu0 0.0
    %1411 = vmatpush1.msra.mxu0 0.0
    %1412 = vmatprep.subr.mxu0 0.0
    %1413 = vmatpush1.msra.mxu0 0.0
    %1414 = vmatprep.subr.mxu0 0.0
    %1415 = vmatpush1.msra.mxu0 0.0
    %1416 = vmatprep.subr.mxu0 0.0
    %1417 = vmatpush1.msra.mxu0 0.0
    %1418 = vmatprep.subr.mxu0 0.0
    %1419 = vmatpush1.msra.mxu0 0.0
    %1420 = vmatprep.subr.mxu0 0.0
    %1421 = vmatpush1.msra.mxu0 0.0
    %1422 = vmatprep.subr.mxu0 0.0
    %1423 = vmatpush1.msra.mxu0 0.0
    %1424 = vmatprep.subr.mxu0 0.0
    %1425 = vmatpush1.msra.mxu0 0.0
    %1426 = vmatprep.subr.mxu0 0.0
    %1427 = vmatpush1.msra.mxu0 0.0
    %1428 = vmatprep.subr.mxu0 0.0
    %1429 = vmatpush1.msra.mxu0 0.0
    %1430 = vmatprep.subr.mxu0 0.0
    %1431 = vmatpush1.msra.mxu0 0.0
    %1432 = vmatprep.subr.mxu0 0.0
    %1433 = vmatpush1.msra.mxu0 0.0
    %1434 = vmatprep.subr.mxu0 0.0
    %1435 = vmatpush1.msra.mxu0 0.0
    %1436 = vmatprep.subr.mxu0 0.0
    %1437 = vmatpush1.msra.mxu0 0.0
    %1438 = vmatprep.subr.mxu0 0.0
    %1439 = vmatpush1.msra.mxu0 0.0
    %1440 = vmatprep.subr.mxu0 0.0
    %1441 = vmatpush1.msra.mxu0 0.0
    %1442 = vmatprep.subr.mxu0 0.0
    %1443 = vmatpush1.msra.mxu0 0.0
    %1444 = vmatprep.subr.mxu0 0.0
    %1445 = vmatpush1.msra.mxu0 0.0
    %1446 = vmatprep.subr.mxu0 0.0
    %1447 = vmatpush1.msra.mxu0 0.0
    %1448 = vmatprep.subr.mxu0 0.0
    %1449 = vmatpush1.msra.mxu0 0.0
    %1450 = vmatprep.subr.mxu0 0.0
    %1451 = vmatpush1.msra.mxu0 0.0
    %1452 = vmatprep.subr.mxu0 0.0
    %1453 = vmatpush1.msra.mxu0 0.0
    %1454 = vmatprep.subr.mxu0 0.0
    %1455 = vmatpush1.msra.mxu0 0.0
    %1456 = vmatprep.subr.mxu0 0.0
    %1457 = vmatpush1.msra.mxu0 0.0
    %1458 = vmatprep.mubr.f32.mxu0 0.0
    %1459 = vmatmul.mubr.f32.gmra.mrb[0].mxu0 %v1154
    %v1460 = vpop.f32.mrb[0].mxu0
    %v1461 = vadd.f32 0.0, %v1460
    %v1462 = vpop.f32.mrb[0].mxu0
    %1463 = vdwg.mxu0
    %v1464 = vadd.f32 %v1391, %v1461
    %v1465 = vmul.f32 %v1464, %v38
    %v1466 = vtanh.pop %v1465
    %v1467 = vadd.f32 %v1466, 1.0
    %v1468 = vmul.f32 %v1467, 0.5
    %v1469 = vmul.f32 %v1468, %v1140
    %1471 = vrot.lane.b32.xlu0 %v1466, 64
    %v1472 = vpop.permute.xlu0 %1471
    %v1474 = vmul.f32 %v1468, %v1472
    %1476 = vrot.lane.b32.xlu0 %v1474, 32
    %v1477 = vpop.permute.xlu0 %1476
    %v1479 = vadd.f32 %v1469, %v1477
    %v1480 = vtanh.pop %v1479
    %1482 = vrot.lane.b32.xlu0 %v1480, 64
    %v1483 = vpop.permute.xlu0 %1482
    %v1485 = vmul.f32 %v1468, %v1483
    %v1486 = vld [vmem:[%s7 + $0x60] sm:$0xff]
    %v1487 = vld [vmem:[%s7 + $0x68] sm:$0xff]
    %v1488 = vld [vmem:[%s7 + $0x70] sm:$0xff]
    %v1489 = vld [vmem:[%s7 + $0x78] sm:$0xff]
    %1491 = vrot.lane.b32.xlu0 %v1485, 32
    %v1492 = vpop.permute.xlu0 %1491
    %v1493 = vsel %vm202, %v1492, 0
    %1495 = vmatprep.subr.mxu0 0.0
    %1496 = vmatpush1.msra.mxu0 %v1486
    %1497 = vmatprep.subr.mxu0 0.0
    %1498 = vmatpush1.msra.mxu0 %v1487
    %1499 = vmatprep.subr.mxu0 0.0
    %1500 = vmatpush1.msra.mxu0 %v1488
    %1501 = vmatprep.subr.mxu0 0.0
    %1502 = vmatpush1.msra.mxu0 %v1489
    %1503 = vmatprep.subr.mxu0 0.0
    %1504 = vmatpush1.msra.mxu0 0.0
    %1505 = vmatprep.subr.mxu0 0.0
    %1506 = vmatpush1.msra.mxu0 0.0
    %1507 = vmatprep.subr.mxu0 0.0
    %1508 = vmatpush1.msra.mxu0 0.0
    %1509 = vmatprep.subr.mxu0 0.0
    %1510 = vmatpush1.msra.mxu0 0.0
    %1511 = vmatprep.subr.mxu0 0.0
    %1512 = vmatpush1.msra.mxu0 0.0
    %1513 = vmatprep.subr.mxu0 0.0
    %1514 = vmatpush1.msra.mxu0 0.0
    %1515 = vmatprep.subr.mxu0 0.0
    %1516 = vmatpush1.msra.mxu0 0.0
    %1517 = vmatprep.subr.mxu0 0.0
    %1518 = vmatpush1.msra.mxu0 0.0
    %1519 = vmatprep.subr.mxu0 0.0
    %1520 = vmatpush1.msra.mxu0 0.0
    %1521 = vmatprep.subr.mxu0 0.0
    %1522 = vmatpush1.msra.mxu0 0.0
    %1523 = vmatprep.subr.mxu0 0.0
    %1524 = vmatpush1.msra.mxu0 0.0
    %1525 = vmatprep.subr.mxu0 0.0
    %1526 = vmatpush1.msra.mxu0 0.0
    %1527 = vmatprep.subr.mxu0 0.0
    %1528 = vmatpush1.msra.mxu0 0.0
    %1529 = vmatprep.subr.mxu0 0.0
    %1530 = vmatpush1.msra.mxu0 0.0
    %1531 = vmatprep.subr.mxu0 0.0
    %1532 = vmatpush1.msra.mxu0 0.0
    %1533 = vmatprep.subr.mxu0 0.0
    %1534 = vmatpush1.msra.mxu0 0.0
    %1535 = vmatprep.subr.mxu0 0.0
    %1536 = vmatpush1.msra.mxu0 0.0
    %1537 = vmatprep.subr.mxu0 0.0
    %1538 = vmatpush1.msra.mxu0 0.0
    %1539 = vmatprep.subr.mxu0 0.0
    %1540 = vmatpush1.msra.mxu0 0.0
    %1541 = vmatprep.subr.mxu0 0.0
    %1542 = vmatpush1.msra.mxu0 0.0
    %1543 = vmatprep.subr.mxu0 0.0
    %1544 = vmatpush1.msra.mxu0 0.0
    %1545 = vmatprep.subr.mxu0 0.0
    %1546 = vmatpush1.msra.mxu0 0.0
    %1547 = vmatprep.subr.mxu0 0.0
    %1548 = vmatpush1.msra.mxu0 0.0
    %1549 = vmatprep.subr.mxu0 0.0
    %1550 = vmatpush1.msra.mxu0 0.0
    %1551 = vmatprep.subr.mxu0 0.0
    %1552 = vmatpush1.msra.mxu0 0.0
    %1553 = vmatprep.subr.mxu0 0.0
    %1554 = vmatpush1.msra.mxu0 0.0
    %1555 = vmatprep.subr.mxu0 0.0
    %1556 = vmatpush1.msra.mxu0 0.0
    %1557 = vmatprep.subr.mxu0 0.0
    %1558 = vmatpush1.msra.mxu0 0.0
    %1559 = vmatprep.mubr.f32.mxu0 0.0
    %1560 = vmatmul.mubr.f32.gmra.mrb[0].mxu0 %v1493
    %v1561 = vpop.f32.mrb[0].mxu0
    %v1562 = vadd.f32 0.0, %v1561
    %v1563 = vpop.f32.mrb[0].mxu0
    %1564 = vdwg.mxu0
    %v1565 = vadd.f32 %v1226, %v1562
    %1566 = vmatprep.subr.mxu0 0.0
    %1567 = vmatpush1.msra.mxu0 %v189
    %1568 = vmatprep.subr.mxu0 0.0
    %1569 = vmatpush1.msra.mxu0 %v190
    %1570 = vmatprep.subr.mxu0 0.0
    %1571 = vmatpush1.msra.mxu0 %v191
    %1572 = vmatprep.subr.mxu0 0.0
    %1573 = vmatpush1.msra.mxu0 %v192
    %1574 = vmatprep.subr.mxu0 0.0
    %1575 = vmatpush1.msra.mxu0 0.0
    %1576 = vmatprep.subr.mxu0 0.0
    %1577 = vmatpush1.msra.mxu0 0.0
    %1578 = vmatprep.subr.mxu0 0.0
    %1579 = vmatpush1.msra.mxu0 0.0
    %1580 = vmatprep.subr.mxu0 0.0
    %1581 = vmatpush1.msra.mxu0 0.0
    %1582 = vmatprep.subr.mxu0 0.0
    %1583 = vmatpush1.msra.mxu0 0.0
    %1584 = vmatprep.subr.mxu0 0.0
    %1585 = vmatpush1.msra.mxu0 0.0
    %1586 = vmatprep.subr.mxu0 0.0
    %1587 = vmatpush1.msra.mxu0 0.0
    %1588 = vmatprep.subr.mxu0 0.0
    %1589 = vmatpush1.msra.mxu0 0.0
    %1590 = vmatprep.subr.mxu0 0.0
    %1591 = vmatpush1.msra.mxu0 0.0
    %1592 = vmatprep.subr.mxu0 0.0
    %1593 = vmatpush1.msra.mxu0 0.0
    %1594 = vmatprep.subr.mxu0 0.0
    %1595 = vmatpush1.msra.mxu0 0.0
    %1596 = vmatprep.subr.mxu0 0.0
    %1597 = vmatpush1.msra.mxu0 0.0
    %1598 = vmatprep.subr.mxu0 0.0
    %1599 = vmatpush1.msra.mxu0 0.0
    %1600 = vmatprep.subr.mxu0 0.0
    %1601 = vmatpush1.msra.mxu0 0.0
    %1602 = vmatprep.subr.mxu0 0.0
    %1603 = vmatpush1.msra.mxu0 0.0
    %1604 = vmatprep.subr.mxu0 0.0
    %1605 = vmatpush1.msra.mxu0 0.0
    %1606 = vmatprep.subr.mxu0 0.0
    %1607 = vmatpush1.msra.mxu0 0.0
    %1608 = vmatprep.subr.mxu0 0.0
    %1609 = vmatpush1.msra.mxu0 0.0
    %1610 = vmatprep.subr.mxu0 0.0
    %1611 = vmatpush1.msra.mxu0 0.0
    %1612 = vmatprep.subr.mxu0 0.0
    %1613 = vmatpush1.msra.mxu0 0.0
    %1614 = vmatprep.subr.mxu0 0.0
    %1615 = vmatpush1.msra.mxu0 0.0
    %1616 = vmatprep.subr.mxu0 0.0
    %1617 = vmatpush1.msra.mxu0 0.0
    %1618 = vmatprep.subr.mxu0 0.0
    %1619 = vmatpush1.msra.mxu0 0.0
    %1620 = vmatprep.subr.mxu0 0.0
    %1621 = vmatpush1.msra.mxu0 0.0
    %1622 = vmatprep.subr.mxu0 0.0
    %1623 = vmatpush1.msra.mxu0 0.0
    %1624 = vmatprep.subr.mxu0 0.0
    %1625 = vmatpush1.msra.mxu0 0.0
    %1626 = vmatprep.subr.mxu0 0.0
    %1627 = vmatpush1.msra.mxu0 0.0
    %1628 = vmatprep.subr.mxu0 0.0
    %1629 = vmatpush1.msra.mxu0 0.0
    %1630 = vmatprep.mubr.f32.mxu0 0.0
    %1631 = vmatmul.mubr.f32.gmra.mrb[0].mxu0 %v1322
    %v1632 = vpop.f32.mrb[0].mxu0
    %v1633 = vadd.f32 0.0, %v1632
    %v1634 = vpop.f32.mrb[0].mxu0
    %1635 = vdwg.mxu0
    %v1636 = vadd.f32 %v171, %v1633
    %v1637 = vmul.f32 %v1636, %v38
    %v1638 = vtanh.pop %v1637
    %v1639 = vadd.f32 %v1638, 1.0
    %v1640 = vmul.f32 %v1639, 0.5
    %v1641 = vmul.f32 %v1640, %v1312
    %1643 = vrot.lane.b32.xlu0 %v1638, 64
    %v1644 = vpop.permute.xlu0 %1643
    %v1646 = vmul.f32 %v1640, %v1644
    %1648 = vrot.lane.b32.xlu0 %v1646, 32
    %v1649 = vpop.permute.xlu0 %1648
    %v1651 = vadd.f32 %v1641, %v1649
    %v1652 = vtanh.pop %v1651
    %1654 = vrot.lane.b32.xlu0 %v1652, 64
    %v1655 = vpop.permute.xlu0 %1654
    %v1657 = vmul.f32 %v1640, %v1655
    %1659 = vrot.lane.b32.xlu0 %v1657, 32
    %v1660 = vpop.permute.xlu0 %1659
    %v1661 = vsel %vm202, %v1660, 0
    %1663 = vmatprep.subr.mxu0 0.0
    %1664 = vmatpush1.msra.mxu0 %v197
    %1665 = vmatprep.subr.mxu0 0.0
    %1666 = vmatpush1.msra.mxu0 %v198
    %1667 = vmatprep.subr.mxu0 0.0
    %1668 = vmatpush1.msra.mxu0 %v199
    %1669 = vmatprep.subr.mxu0 0.0
    %1670 = vmatpush1.msra.mxu0 %v200
    %1671 = vmatprep.subr.mxu0 0.0
    %1672 = vmatpush1.msra.mxu0 0.0
    %1673 = vmatprep.subr.mxu0 0.0
    %1674 = vmatpush1.msra.mxu0 0.0
    %1675 = vmatprep.subr.mxu0 0.0
    %1676 = vmatpush1.msra.mxu0 0.0
    %1677 = vmatprep.subr.mxu0 0.0
    %1678 = vmatpush1.msra.mxu0 0.0
    %1679 = vmatprep.subr.mxu0 0.0
    %1680 = vmatpush1.msra.mxu0 0.0
    %1681 = vmatprep.subr.mxu0 0.0
    %1682 = vmatpush1.msra.mxu0 0.0
    %1683 = vmatprep.subr.mxu0 0.0
    %1684 = vmatpush1.msra.mxu0 0.0
    %1685 = vmatprep.subr.mxu0 0.0
    %1686 = vmatpush1.msra.mxu0 0.0
    %1687 = vmatprep.subr.mxu0 0.0
    %1688 = vmatpush1.msra.mxu0 0.0
    %1689 = vmatprep.subr.mxu0 0.0
    %1690 = vmatpush1.msra.mxu0 0.0
    %1691 = vmatprep.subr.mxu0 0.0
    %1692 = vmatpush1.msra.mxu0 0.0
    %1693 = vmatprep.subr.mxu0 0.0
    %1694 = vmatpush1.msra.mxu0 0.0
    %1695 = vmatprep.subr.mxu0 0.0
    %1696 = vmatpush1.msra.mxu0 0.0
    %1697 = vmatprep.subr.mxu0 0.0
    %1698 = vmatpush1.msra.mxu0 0.0
    %1699 = vmatprep.subr.mxu0 0.0
    %1700 = vmatpush1.msra.mxu0 0.0
    %1701 = vmatprep.subr.mxu0 0.0
    %1702 = vmatpush1.msra.mxu0 0.0
    %1703 = vmatprep.subr.mxu0 0.0
    %1704 = vmatpush1.msra.mxu0 0.0
    %1705 = vmatprep.subr.mxu0 0.0
    %1706 = vmatpush1.msra.mxu0 0.0
    %1707 = vmatprep.subr.mxu0 0.0
    %1708 = vmatpush1.msra.mxu0 0.0
    %1709 = vmatprep.subr.mxu0 0.0
    %1710 = vmatpush1.msra.mxu0 0.0
    %1711 = vmatprep.subr.mxu0 0.0
    %1712 = vmatpush1.msra.mxu0 0.0
    %1713 = vmatprep.subr.mxu0 0.0
    %1714 = vmatpush1.msra.mxu0 0.0
    %1715 = vmatprep.subr.mxu0 0.0
    %1716 = vmatpush1.msra.mxu0 0.0
    %1717 = vmatprep.subr.mxu0 0.0
    %1718 = vmatpush1.msra.mxu0 0.0
    %1719 = vmatprep.subr.mxu0 0.0
    %1720 = vmatpush1.msra.mxu0 0.0
    %1721 = vmatprep.subr.mxu0 0.0
    %1722 = vmatpush1.msra.mxu0 0.0
    %1723 = vmatprep.subr.mxu0 0.0
    %1724 = vmatpush1.msra.mxu0 0.0
    %1725 = vmatprep.subr.mxu0 0.0
    %1726 = vmatpush1.msra.mxu0 0.0
    %1727 = vmatprep.mubr.f32.mxu0 0.0
    %1728 = vmatmul.mubr.f32.gmra.mrb[0].mxu0 %v1661
    %v1729 = vpop.f32.mrb[0].mxu0
    %v1730 = vadd.f32 %v302, %v1729
    %v1731 = vpop.f32.mrb[0].mxu0
    %1732 = vdwg.mxu0
    %1733 = vmatprep.subr.mxu0 0.0
    %1734 = vmatpush1.msra.mxu0 %v193
    %1735 = vmatprep.subr.mxu0 0.0
    %1736 = vmatpush1.msra.mxu0 %v194
    %1737 = vmatprep.subr.mxu0 0.0
    %1738 = vmatpush1.msra.mxu0 %v195
    %1739 = vmatprep.subr.mxu0 0.0
    %1740 = vmatpush1.msra.mxu0 %v196
    %1741 = vmatprep.subr.mxu0 0.0
    %1742 = vmatpush1.msra.mxu0 0.0
    %1743 = vmatprep.subr.mxu0 0.0
    %1744 = vmatpush1.msra.mxu0 0.0
    %1745 = vmatprep.subr.mxu0 0.0
    %1746 = vmatpush1.msra.mxu0 0.0
    %1747 = vmatprep.subr.mxu0 0.0
    %1748 = vmatpush1.msra.mxu0 0.0
    %1749 = vmatprep.subr.mxu0 0.0
    %1750 = vmatpush1.msra.mxu0 0.0
    %1751 = vmatprep.subr.mxu0 0.0
    %1752 = vmatpush1.msra.mxu0 0.0
    %1753 = vmatprep.subr.mxu0 0.0
    %1754 = vmatpush1.msra.mxu0 0.0
    %1755 = vmatprep.subr.mxu0 0.0
    %1756 = vmatpush1.msra.mxu0 0.0
    %1757 = vmatprep.subr.mxu0 0.0
    %1758 = vmatpush1.msra.mxu0 0.0
    %1759 = vmatprep.subr.mxu0 0.0
    %1760 = vmatpush1.msra.mxu0 0.0
    %1761 = vmatprep.subr.mxu0 0.0
    %1762 = vmatpush1.msra.mxu0 0.0
    %1763 = vmatprep.subr.mxu0 0.0
    %1764 = vmatpush1.msra.mxu0 0.0
    %1765 = vmatprep.subr.mxu0 0.0
    %1766 = vmatpush1.msra.mxu0 0.0
    %1767 = vmatprep.subr.mxu0 0.0
    %1768 = vmatpush1.msra.mxu0 0.0
    %1769 = vmatprep.subr.mxu0 0.0
    %1770 = vmatpush1.msra.mxu0 0.0
    %1771 = vmatprep.subr.mxu0 0.0
    %1772 = vmatpush1.msra.mxu0 0.0
    %1773 = vmatprep.subr.mxu0 0.0
    %1774 = vmatpush1.msra.mxu0 0.0
    %1775 = vmatprep.subr.mxu0 0.0
    %1776 = vmatpush1.msra.mxu0 0.0
    %1777 = vmatprep.subr.mxu0 0.0
    %1778 = vmatpush1.msra.mxu0 0.0
    %1779 = vmatprep.subr.mxu0 0.0
    %1780 = vmatpush1.msra.mxu0 0.0
    %1781 = vmatprep.subr.mxu0 0.0
    %1782 = vmatpush1.msra.mxu0 0.0
    %1783 = vmatprep.subr.mxu0 0.0
    %1784 = vmatpush1.msra.mxu0 0.0
    %1785 = vmatprep.subr.mxu0 0.0
    %1786 = vmatpush1.msra.mxu0 0.0
    %1787 = vmatprep.subr.mxu0 0.0
    %1788 = vmatpush1.msra.mxu0 0.0
    %1789 = vmatprep.subr.mxu0 0.0
    %1790 = vmatpush1.msra.mxu0 0.0
    %1791 = vmatprep.subr.mxu0 0.0
    %1792 = vmatpush1.msra.mxu0 0.0
    %1793 = vmatprep.subr.mxu0 0.0
    %1794 = vmatpush1.msra.mxu0 0.0
    %1795 = vmatprep.subr.mxu0 0.0
    %1796 = vmatpush1.msra.mxu0 0.0
    %1797 = vmatprep.mubr.f32.mxu0 0.0
    %1798 = vmatmul.mubr.f32.gmra.mrb[0].mxu0 %v1493
    %v1799 = vpop.f32.mrb[0].mxu0
    %v1800 = vadd.f32 0.0, %v1799
    %v1801 = vpop.f32.mrb[0].mxu0
    %1802 = vdwg.mxu0
    %v1803 = vadd.f32 %v1730, %v1800
    %v1804 = vmul.f32 %v1803, %v38
    %v1805 = vtanh.pop %v1804
    %v1806 = vadd.f32 %v1805, 1.0
    %v1807 = vmul.f32 %v1806, 0.5
    %v1808 = vmul.f32 %v1807, %v1479
    %1810 = vrot.lane.b32.xlu0 %v1805, 64
    %v1811 = vpop.permute.xlu0 %1810
    %v1813 = vmul.f32 %v1807, %v1811
    %1815 = vrot.lane.b32.xlu0 %v1813, 32
    %v1816 = vpop.permute.xlu0 %1815
    %v1818 = vadd.f32 %v1808, %v1816
    %v1819 = vtanh.pop %v1818
    %1821 = vrot.lane.b32.xlu0 %v1819, 64
    %v1822 = vpop.permute.xlu0 %1821
    %v1824 = vmul.f32 %v1807, %v1822
    %v1825 = vld [vmem:[%s7 + $0x80] sm:$0xff]
    %v1826 = vld [vmem:[%s7 + $0x88] sm:$0xff]
    %v1827 = vld [vmem:[%s7 + $0x90] sm:$0xff]
    %v1828 = vld [vmem:[%s7 + $0x98] sm:$0xff]
    %1830 = vrot.lane.b32.xlu0 %v1824, 32
    %v1831 = vpop.permute.xlu0 %1830
    %v1832 = vsel %vm202, %v1831, 0
    %1834 = vmatprep.subr.mxu0 0.0
    %1835 = vmatpush1.msra.mxu0 %v1825
    %1836 = vmatprep.subr.mxu0 0.0
    %1837 = vmatpush1.msra.mxu0 %v1826
    %1838 = vmatprep.subr.mxu0 0.0
    %1839 = vmatpush1.msra.mxu0 %v1827
    %1840 = vmatprep.subr.mxu0 0.0
    %1841 = vmatpush1.msra.mxu0 %v1828
    %1842 = vmatprep.subr.mxu0 0.0
    %1843 = vmatpush1.msra.mxu0 0.0
    %1844 = vmatprep.subr.mxu0 0.0
    %1845 = vmatpush1.msra.mxu0 0.0
    %1846 = vmatprep.subr.mxu0 0.0
    %1847 = vmatpush1.msra.mxu0 0.0
    %1848 = vmatprep.subr.mxu0 0.0
    %1849 = vmatpush1.msra.mxu0 0.0
    %1850 = vmatprep.subr.mxu0 0.0
    %1851 = vmatpush1.msra.mxu0 0.0
    %1852 = vmatprep.subr.mxu0 0.0
    %1853 = vmatpush1.msra.mxu0 0.0
    %1854 = vmatprep.subr.mxu0 0.0
    %1855 = vmatpush1.msra.mxu0 0.0
    %1856 = vmatprep.subr.mxu0 0.0
    %1857 = vmatpush1.msra.mxu0 0.0
    %1858 = vmatprep.subr.mxu0 0.0
    %1859 = vmatpush1.msra.mxu0 0.0
    %1860 = vmatprep.subr.mxu0 0.0
    %1861 = vmatpush1.msra.mxu0 0.0
    %1862 = vmatprep.subr.mxu0 0.0
    %1863 = vmatpush1.msra.mxu0 0.0
    %1864 = vmatprep.subr.mxu0 0.0
    %1865 = vmatpush1.msra.mxu0 0.0
    %1866 = vmatprep.subr.mxu0 0.0
    %1867 = vmatpush1.msra.mxu0 0.0
    %1868 = vmatprep.subr.mxu0 0.0
    %1869 = vmatpush1.msra.mxu0 0.0
    %1870 = vmatprep.subr.mxu0 0.0
    %1871 = vmatpush1.msra.mxu0 0.0
    %1872 = vmatprep.subr.mxu0 0.0
    %1873 = vmatpush1.msra.mxu0 0.0
    %1874 = vmatprep.subr.mxu0 0.0
    %1875 = vmatpush1.msra.mxu0 0.0
    %1876 = vmatprep.subr.mxu0 0.0
    %1877 = vmatpush1.msra.mxu0 0.0
    %1878 = vmatprep.subr.mxu0 0.0
    %1879 = vmatpush1.msra.mxu0 0.0
    %1880 = vmatprep.subr.mxu0 0.0
    %1881 = vmatpush1.msra.mxu0 0.0
    %1882 = vmatprep.subr.mxu0 0.0
    %1883 = vmatpush1.msra.mxu0 0.0
    %1884 = vmatprep.subr.mxu0 0.0
    %1885 = vmatpush1.msra.mxu0 0.0
    %1886 = vmatprep.subr.mxu0 0.0
    %1887 = vmatpush1.msra.mxu0 0.0
    %1888 = vmatprep.subr.mxu0 0.0
    %1889 = vmatpush1.msra.mxu0 0.0
    %1890 = vmatprep.subr.mxu0 0.0
    %1891 = vmatpush1.msra.mxu0 0.0
    %1892 = vmatprep.subr.mxu0 0.0
    %1893 = vmatpush1.msra.mxu0 0.0
    %1894 = vmatprep.subr.mxu0 0.0
    %1895 = vmatpush1.msra.mxu0 0.0
    %1896 = vmatprep.subr.mxu0 0.0
    %1897 = vmatpush1.msra.mxu0 0.0
    %1898 = vmatprep.mubr.f32.mxu0 0.0
    %1899 = vmatmul.mubr.f32.gmra.mrb[0].mxu0 %v1832
    %v1900 = vpop.f32.mrb[0].mxu0
    %v1901 = vadd.f32 0.0, %v1900
    %v1902 = vpop.f32.mrb[0].mxu0
    %1903 = vdwg.mxu0
    %v1904 = vadd.f32 %v1565, %v1901
    %1905 = vmatprep.subr.mxu0 0.0
    %1906 = vmatpush1.msra.mxu0 %v189
    %1907 = vmatprep.subr.mxu0 0.0
    %1908 = vmatpush1.msra.mxu0 %v190
    %1909 = vmatprep.subr.mxu0 0.0
    %1910 = vmatpush1.msra.mxu0 %v191
    %1911 = vmatprep.subr.mxu0 0.0
    %1912 = vmatpush1.msra.mxu0 %v192
    %1913 = vmatprep.subr.mxu0 0.0
    %1914 = vmatpush1.msra.mxu0 0.0
    %1915 = vmatprep.subr.mxu0 0.0
    %1916 = vmatpush1.msra.mxu0 0.0
    %1917 = vmatprep.subr.mxu0 0.0
    %1918 = vmatpush1.msra.mxu0 0.0
    %1919 = vmatprep.subr.mxu0 0.0
    %1920 = vmatpush1.msra.mxu0 0.0
    %1921 = vmatprep.subr.mxu0 0.0
    %1922 = vmatpush1.msra.mxu0 0.0
    %1923 = vmatprep.subr.mxu0 0.0
    %1924 = vmatpush1.msra.mxu0 0.0
    %1925 = vmatprep.subr.mxu0 0.0
    %1926 = vmatpush1.msra.mxu0 0.0
    %1927 = vmatprep.subr.mxu0 0.0
    %1928 = vmatpush1.msra.mxu0 0.0
    %1929 = vmatprep.subr.mxu0 0.0
    %1930 = vmatpush1.msra.mxu0 0.0
    %1931 = vmatprep.subr.mxu0 0.0
    %1932 = vmatpush1.msra.mxu0 0.0
    %1933 = vmatprep.subr.mxu0 0.0
    %1934 = vmatpush1.msra.mxu0 0.0
    %1935 = vmatprep.subr.mxu0 0.0
    %1936 = vmatpush1.msra.mxu0 0.0
    %1937 = vmatprep.subr.mxu0 0.0
    %1938 = vmatpush1.msra.mxu0 0.0
    %1939 = vmatprep.subr.mxu0 0.0
    %1940 = vmatpush1.msra.mxu0 0.0
    %1941 = vmatprep.subr.mxu0 0.0
    %1942 = vmatpush1.msra.mxu0 0.0
    %1943 = vmatprep.subr.mxu0 0.0
    %1944 = vmatpush1.msra.mxu0 0.0
    %1945 = vmatprep.subr.mxu0 0.0
    %1946 = vmatpush1.msra.mxu0 0.0
    %1947 = vmatprep.subr.mxu0 0.0
    %1948 = vmatpush1.msra.mxu0 0.0
    %1949 = vmatprep.subr.mxu0 0.0
    %1950 = vmatpush1.msra.mxu0 0.0
    %1951 = vmatprep.subr.mxu0 0.0
    %1952 = vmatpush1.msra.mxu0 0.0
    %1953 = vmatprep.subr.mxu0 0.0
    %1954 = vmatpush1.msra.mxu0 0.0
    %1955 = vmatprep.subr.mxu0 0.0
    %1956 = vmatpush1.msra.mxu0 0.0
    %1957 = vmatprep.subr.mxu0 0.0
    %1958 = vmatpush1.msra.mxu0 0.0
    %1959 = vmatprep.subr.mxu0 0.0
    %1960 = vmatpush1.msra.mxu0 0.0
    %1961 = vmatprep.subr.mxu0 0.0
    %1962 = vmatpush1.msra.mxu0 0.0
    %1963 = vmatprep.subr.mxu0 0.0
    %1964 = vmatpush1.msra.mxu0 0.0
    %1965 = vmatprep.subr.mxu0 0.0
    %1966 = vmatpush1.msra.mxu0 0.0
    %1967 = vmatprep.subr.mxu0 0.0
    %1968 = vmatpush1.msra.mxu0 0.0
    %1969 = vmatprep.mubr.f32.mxu0 0.0
    %1970 = vmatmul.mubr.f32.gmra.mrb[0].mxu0 %v1661
    %v1971 = vpop.f32.mrb[0].mxu0
    %v1972 = vadd.f32 0.0, %v1971
    %v1973 = vpop.f32.mrb[0].mxu0
    %1974 = vdwg.mxu0
    %v1975 = vadd.f32 %v176, %v1972
    %v1976 = vmul.f32 %v1975, %v38
    %v1977 = vtanh.pop %v1976
    %v1978 = vadd.f32 %v1977, 1.0
    %v1979 = vmul.f32 %v1978, 0.5
    %v1980 = vmul.f32 %v1979, %v1651
    %1982 = vrot.lane.b32.xlu0 %v1977, 64
    %v1983 = vpop.permute.xlu0 %1982
    %v1985 = vmul.f32 %v1979, %v1983
    %1987 = vrot.lane.b32.xlu0 %v1985, 32
    %v1988 = vpop.permute.xlu0 %1987
    %v1990 = vadd.f32 %v1980, %v1988
    %v1991 = vtanh.pop %v1990
    %1993 = vrot.lane.b32.xlu0 %v1991, 64
    %v1994 = vpop.permute.xlu0 %1993
    %v1996 = vmul.f32 %v1979, %v1994
    %1998 = vrot.lane.b32.xlu0 %v1996, 32
    %v1999 = vpop.permute.xlu0 %1998
    %v2000 = vsel %vm202, %v1999, 0
    %2002 = vmatprep.subr.mxu0 0.0
    %2003 = vmatpush1.msra.mxu0 %v197
    %2004 = vmatprep.subr.mxu0 0.0
    %2005 = vmatpush1.msra.mxu0 %v198
    %2006 = vmatprep.subr.mxu0 0.0
    %2007 = vmatpush1.msra.mxu0 %v199
    %2008 = vmatprep.subr.mxu0 0.0
    %2009 = vmatpush1.msra.mxu0 %v200
    %2010 = vmatprep.subr.mxu0 0.0
    %2011 = vmatpush1.msra.mxu0 0.0
    %2012 = vmatprep.subr.mxu0 0.0
    %2013 = vmatpush1.msra.mxu0 0.0
    %2014 = vmatprep.subr.mxu0 0.0
    %2015 = vmatpush1.msra.mxu0 0.0
    %2016 = vmatprep.subr.mxu0 0.0
    %2017 = vmatpush1.msra.mxu0 0.0
    %2018 = vmatprep.subr.mxu0 0.0
    %2019 = vmatpush1.msra.mxu0 0.0
    %2020 = vmatprep.subr.mxu0 0.0
    %2021 = vmatpush1.msra.mxu0 0.0
    %2022 = vmatprep.subr.mxu0 0.0
    %2023 = vmatpush1.msra.mxu0 0.0
    %2024 = vmatprep.subr.mxu0 0.0
    %2025 = vmatpush1.msra.mxu0 0.0
    %2026 = vmatprep.subr.mxu0 0.0
    %2027 = vmatpush1.msra.mxu0 0.0
    %2028 = vmatprep.subr.mxu0 0.0
    %2029 = vmatpush1.msra.mxu0 0.0
    %2030 = vmatprep.subr.mxu0 0.0
    %2031 = vmatpush1.msra.mxu0 0.0
    %2032 = vmatprep.subr.mxu0 0.0
    %2033 = vmatpush1.msra.mxu0 0.0
    %2034 = vmatprep.subr.mxu0 0.0
    %2035 = vmatpush1.msra.mxu0 0.0
    %2036 = vmatprep.subr.mxu0 0.0
    %2037 = vmatpush1.msra.mxu0 0.0
    %2038 = vmatprep.subr.mxu0 0.0
    %2039 = vmatpush1.msra.mxu0 0.0
    %2040 = vmatprep.subr.mxu0 0.0
    %2041 = vmatpush1.msra.mxu0 0.0
    %2042 = vmatprep.subr.mxu0 0.0
    %2043 = vmatpush1.msra.mxu0 0.0
    %2044 = vmatprep.subr.mxu0 0.0
    %2045 = vmatpush1.msra.mxu0 0.0
    %2046 = vmatprep.subr.mxu0 0.0
    %2047 = vmatpush1.msra.mxu0 0.0
    %2048 = vmatprep.subr.mxu0 0.0
    %2049 = vmatpush1.msra.mxu0 0.0
    %2050 = vmatprep.subr.mxu0 0.0
    %2051 = vmatpush1.msra.mxu0 0.0
    %2052 = vmatprep.subr.mxu0 0.0
    %2053 = vmatpush1.msra.mxu0 0.0
    %2054 = vmatprep.subr.mxu0 0.0
    %2055 = vmatpush1.msra.mxu0 0.0
    %2056 = vmatprep.subr.mxu0 0.0
    %2057 = vmatpush1.msra.mxu0 0.0
    %2058 = vmatprep.subr.mxu0 0.0
    %2059 = vmatpush1.msra.mxu0 0.0
    %2060 = vmatprep.subr.mxu0 0.0
    %2061 = vmatpush1.msra.mxu0 0.0
    %2062 = vmatprep.subr.mxu0 0.0
    %2063 = vmatpush1.msra.mxu0 0.0
    %2064 = vmatprep.subr.mxu0 0.0
    %2065 = vmatpush1.msra.mxu0 0.0
    %2066 = vmatprep.mubr.f32.mxu0 0.0
    %2067 = vmatmul.mubr.f32.gmra.mrb[0].mxu0 %v2000
    %v2068 = vpop.f32.mrb[0].mxu0
    %v2069 = vadd.f32 %v302, %v2068
    %v2070 = vpop.f32.mrb[0].mxu0
    %2071 = vdwg.mxu0
    %2072 = vmatprep.subr.mxu0 0.0
    %2073 = vmatpush1.msra.mxu0 %v193
    %2074 = vmatprep.subr.mxu0 0.0
    %2075 = vmatpush1.msra.mxu0 %v194
    %2076 = vmatprep.subr.mxu0 0.0
    %2077 = vmatpush1.msra.mxu0 %v195
    %2078 = vmatprep.subr.mxu0 0.0
    %2079 = vmatpush1.msra.mxu0 %v196
    %2080 = vmatprep.subr.mxu0 0.0
    %2081 = vmatpush1.msra.mxu0 0.0
    %2082 = vmatprep.subr.mxu0 0.0
    %2083 = vmatpush1.msra.mxu0 0.0
    %2084 = vmatprep.subr.mxu0 0.0
    %2085 = vmatpush1.msra.mxu0 0.0
    %2086 = vmatprep.subr.mxu0 0.0
    %2087 = vmatpush1.msra.mxu0 0.0
    %2088 = vmatprep.subr.mxu0 0.0
    %2089 = vmatpush1.msra.mxu0 0.0
    %2090 = vmatprep.subr.mxu0 0.0
    %2091 = vmatpush1.msra.mxu0 0.0
    %2092 = vmatprep.subr.mxu0 0.0
    %2093 = vmatpush1.msra.mxu0 0.0
    %2094 = vmatprep.subr.mxu0 0.0
    %2095 = vmatpush1.msra.mxu0 0.0
    %2096 = vmatprep.subr.mxu0 0.0
    %2097 = vmatpush1.msra.mxu0 0.0
    %2098 = vmatprep.subr.mxu0 0.0
    %2099 = vmatpush1.msra.mxu0 0.0
    %2100 = vmatprep.subr.mxu0 0.0
    %2101 = vmatpush1.msra.mxu0 0.0
    %2102 = vmatprep.subr.mxu0 0.0
    %2103 = vmatpush1.msra.mxu0 0.0
    %2104 = vmatprep.subr.mxu0 0.0
    %2105 = vmatpush1.msra.mxu0 0.0
    %2106 = vmatprep.subr.mxu0 0.0
    %2107 = vmatpush1.msra.mxu0 0.0
    %2108 = vmatprep.subr.mxu0 0.0
    %2109 = vmatpush1.msra.mxu0 0.0
    %2110 = vmatprep.subr.mxu0 0.0
    %2111 = vmatpush1.msra.mxu0 0.0
    %2112 = vmatprep.subr.mxu0 0.0
    %2113 = vmatpush1.msra.mxu0 0.0
    %2114 = vmatprep.subr.mxu0 0.0
    %2115 = vmatpush1.msra.mxu0 0.0
    %2116 = vmatprep.subr.mxu0 0.0
    %2117 = vmatpush1.msra.mxu0 0.0
    %2118 = vmatprep.subr.mxu0 0.0
    %2119 = vmatpush1.msra.mxu0 0.0
    %2120 = vmatprep.subr.mxu0 0.0
    %2121 = vmatpush1.msra.mxu0 0.0
    %2122 = vmatprep.subr.mxu0 0.0
    %2123 = vmatpush1.msra.mxu0 0.0
    %2124 = vmatprep.subr.mxu0 0.0
    %2125 = vmatpush1.msra.mxu0 0.0
    %2126 = vmatprep.subr.mxu0 0.0
    %2127 = vmatpush1.msra.mxu0 0.0
    %2128 = vmatprep.subr.mxu0 0.0
    %2129 = vmatpush1.msra.mxu0 0.0
    %2130 = vmatprep.subr.mxu0 0.0
    %2131 = vmatpush1.msra.mxu0 0.0
    %2132 = vmatprep.subr.mxu0 0.0
    %2133 = vmatpush1.msra.mxu0 0.0
    %2134 = vmatprep.subr.mxu0 0.0
    %2135 = vmatpush1.msra.mxu0 0.0
    %2136 = vmatprep.mubr.f32.mxu0 0.0
    %2137 = vmatmul.mubr.f32.gmra.mrb[0].mxu0 %v1832
    %v2138 = vpop.f32.mrb[0].mxu0
    %v2139 = vadd.f32 0.0, %v2138
    %v2140 = vpop.f32.mrb[0].mxu0
    %2141 = vdwg.mxu0
    %v2142 = vadd.f32 %v2069, %v2139
    %v2143 = vmul.f32 %v2142, %v38
    %v2144 = vtanh.pop %v2143
    %v2145 = vadd.f32 %v2144, 1.0
    %v2146 = vmul.f32 %v2145, 0.5
    %v2147 = vmul.f32 %v2146, %v1818
    %2149 = vrot.lane.b32.xlu0 %v2144, 64
    %v2150 = vpop.permute.xlu0 %2149
    %v2152 = vmul.f32 %v2146, %v2150
    %2154 = vrot.lane.b32.xlu0 %v2152, 32
    %v2155 = vpop.permute.xlu0 %2154
    %v2157 = vadd.f32 %v2147, %v2155
    %v2158 = vtanh.pop %v2157
    %2160 = vrot.lane.b32.xlu0 %v2158, 64
    %v2161 = vpop.permute.xlu0 %2160
    %v2163 = vmul.f32 %v2146, %v2161
    %v2164 = vld [vmem:[%s7 + $0xa0] sm:$0xff]
    %v2165 = vld [vmem:[%s7 + $0xa8] sm:$0xff]
    %v2166 = vld [vmem:[%s7 + $0xb0] sm:$0xff]
    %v2167 = vld [vmem:[%s7 + $0xb8] sm:$0xff]
    %2169 = vrot.lane.b32.xlu0 %v2163, 32
    %v2170 = vpop.permute.xlu0 %2169
    %v2171 = vsel %vm202, %v2170, 0
    %2173 = vmatprep.subr.mxu0 0.0
    %2174 = vmatpush1.msra.mxu0 %v2164
    %2175 = vmatprep.subr.mxu0 0.0
    %2176 = vmatpush1.msra.mxu0 %v2165
    %2177 = vmatprep.subr.mxu0 0.0
    %2178 = vmatpush1.msra.mxu0 %v2166
    %2179 = vmatprep.subr.mxu0 0.0
    %2180 = vmatpush1.msra.mxu0 %v2167
    %2181 = vmatprep.subr.mxu0 0.0
    %2182 = vmatpush1.msra.mxu0 0.0
    %2183 = vmatprep.subr.mxu0 0.0
    %2184 = vmatpush1.msra.mxu0 0.0
    %2185 = vmatprep.subr.mxu0 0.0
    %2186 = vmatpush1.msra.mxu0 0.0
    %2187 = vmatprep.subr.mxu0 0.0
    %2188 = vmatpush1.msra.mxu0 0.0
    %2189 = vmatprep.subr.mxu0 0.0
    %2190 = vmatpush1.msra.mxu0 0.0
    %2191 = vmatprep.subr.mxu0 0.0
    %2192 = vmatpush1.msra.mxu0 0.0
    %2193 = vmatprep.subr.mxu0 0.0
    %2194 = vmatpush1.msra.mxu0 0.0
    %2195 = vmatprep.subr.mxu0 0.0
    %2196 = vmatpush1.msra.mxu0 0.0
    %2197 = vmatprep.subr.mxu0 0.0
    %2198 = vmatpush1.msra.mxu0 0.0
    %2199 = vmatprep.subr.mxu0 0.0
    %2200 = vmatpush1.msra.mxu0 0.0
    %2201 = vmatprep.subr.mxu0 0.0
    %2202 = vmatpush1.msra.mxu0 0.0
    %2203 = vmatprep.subr.mxu0 0.0
    %2204 = vmatpush1.msra.mxu0 0.0
    %2205 = vmatprep.subr.mxu0 0.0
    %2206 = vmatpush1.msra.mxu0 0.0
    %2207 = vmatprep.subr.mxu0 0.0
    %2208 = vmatpush1.msra.mxu0 0.0
    %2209 = vmatprep.subr.mxu0 0.0
    %2210 = vmatpush1.msra.mxu0 0.0
    %2211 = vmatprep.subr.mxu0 0.0
    %2212 = vmatpush1.msra.mxu0 0.0
    %2213 = vmatprep.subr.mxu0 0.0
    %2214 = vmatpush1.msra.mxu0 0.0
    %2215 = vmatprep.subr.mxu0 0.0
    %2216 = vmatpush1.msra.mxu0 0.0
    %2217 = vmatprep.subr.mxu0 0.0
    %2218 = vmatpush1.msra.mxu0 0.0
    %2219 = vmatprep.subr.mxu0 0.0
    %2220 = vmatpush1.msra.mxu0 0.0
    %2221 = vmatprep.subr.mxu0 0.0
    %2222 = vmatpush1.msra.mxu0 0.0
    %2223 = vmatprep.subr.mxu0 0.0
    %2224 = vmatpush1.msra.mxu0 0.0
    %2225 = vmatprep.subr.mxu0 0.0
    %2226 = vmatpush1.msra.mxu0 0.0
    %2227 = vmatprep.subr.mxu0 0.0
    %2228 = vmatpush1.msra.mxu0 0.0
    %2229 = vmatprep.subr.mxu0 0.0
    %2230 = vmatpush1.msra.mxu0 0.0
    %2231 = vmatprep.subr.mxu0 0.0
    %2232 = vmatpush1.msra.mxu0 0.0
    %2233 = vmatprep.subr.mxu0 0.0
    %2234 = vmatpush1.msra.mxu0 0.0
    %2235 = vmatprep.subr.mxu0 0.0
    %2236 = vmatpush1.msra.mxu0 0.0
    %2237 = vmatprep.mubr.f32.mxu0 0.0
    %2238 = vmatmul.mubr.f32.gmra.mrb[0].mxu0 %v2171
    %v2239 = vpop.f32.mrb[0].mxu0
    %v2240 = vadd.f32 0.0, %v2239
    %v2241 = vpop.f32.mrb[0].mxu0
    %2242 = vdwg.mxu0
    %v2243 = vadd.f32 %v1904, %v2240
    %2244 = vmatprep.subr.mxu0 0.0
    %2245 = vmatpush1.msra.mxu0 %v189
    %2246 = vmatprep.subr.mxu0 0.0
    %2247 = vmatpush1.msra.mxu0 %v190
    %2248 = vmatprep.subr.mxu0 0.0
    %2249 = vmatpush1.msra.mxu0 %v191
    %2250 = vmatprep.subr.mxu0 0.0
    %2251 = vmatpush1.msra.mxu0 %v192
    %2252 = vmatprep.subr.mxu0 0.0
    %2253 = vmatpush1.msra.mxu0 0.0
    %2254 = vmatprep.subr.mxu0 0.0
    %2255 = vmatpush1.msra.mxu0 0.0
    %2256 = vmatprep.subr.mxu0 0.0
    %2257 = vmatpush1.msra.mxu0 0.0
    %2258 = vmatprep.subr.mxu0 0.0
    %2259 = vmatpush1.msra.mxu0 0.0
    %2260 = vmatprep.subr.mxu0 0.0
    %2261 = vmatpush1.msra.mxu0 0.0
    %2262 = vmatprep.subr.mxu0 0.0
    %2263 = vmatpush1.msra.mxu0 0.0
    %2264 = vmatprep.subr.mxu0 0.0
    %2265 = vmatpush1.msra.mxu0 0.0
    %2266 = vmatprep.subr.mxu0 0.0
    %2267 = vmatpush1.msra.mxu0 0.0
    %2268 = vmatprep.subr.mxu0 0.0
    %2269 = vmatpush1.msra.mxu0 0.0
    %2270 = vmatprep.subr.mxu0 0.0
    %2271 = vmatpush1.msra.mxu0 0.0
    %2272 = vmatprep.subr.mxu0 0.0
    %2273 = vmatpush1.msra.mxu0 0.0
    %2274 = vmatprep.subr.mxu0 0.0
    %2275 = vmatpush1.msra.mxu0 0.0
    %2276 = vmatprep.subr.mxu0 0.0
    %2277 = vmatpush1.msra.mxu0 0.0
    %2278 = vmatprep.subr.mxu0 0.0
    %2279 = vmatpush1.msra.mxu0 0.0
    %2280 = vmatprep.subr.mxu0 0.0
    %2281 = vmatpush1.msra.mxu0 0.0
    %2282 = vmatprep.subr.mxu0 0.0
    %2283 = vmatpush1.msra.mxu0 0.0
    %2284 = vmatprep.subr.mxu0 0.0
    %2285 = vmatpush1.msra.mxu0 0.0
    %2286 = vmatprep.subr.mxu0 0.0
    %2287 = vmatpush1.msra.mxu0 0.0
    %2288 = vmatprep.subr.mxu0 0.0
    %2289 = vmatpush1.msra.mxu0 0.0
    %2290 = vmatprep.subr.mxu0 0.0
    %2291 = vmatpush1.msra.mxu0 0.0
    %2292 = vmatprep.subr.mxu0 0.0
    %2293 = vmatpush1.msra.mxu0 0.0
    %2294 = vmatprep.subr.mxu0 0.0
    %2295 = vmatpush1.msra.mxu0 0.0
    %2296 = vmatprep.subr.mxu0 0.0
    %2297 = vmatpush1.msra.mxu0 0.0
    %2298 = vmatprep.subr.mxu0 0.0
    %2299 = vmatpush1.msra.mxu0 0.0
    %2300 = vmatprep.subr.mxu0 0.0
    %2301 = vmatpush1.msra.mxu0 0.0
    %2302 = vmatprep.subr.mxu0 0.0
    %2303 = vmatpush1.msra.mxu0 0.0
    %2304 = vmatprep.subr.mxu0 0.0
    %2305 = vmatpush1.msra.mxu0 0.0
    %2306 = vmatprep.subr.mxu0 0.0
    %2307 = vmatpush1.msra.mxu0 0.0
    %2308 = vmatprep.mubr.f32.mxu0 0.0
    %2309 = vmatmul.mubr.f32.gmra.mrb[0].mxu0 %v2000
    %v2310 = vpop.f32.mrb[0].mxu0
    %v2311 = vadd.f32 0.0, %v2310
    %v2312 = vpop.f32.mrb[0].mxu0
    %2313 = vdwg.mxu0
    %v2314 = vadd.f32 %v181, %v2311
    %v2315 = vmul.f32 %v2314, %v38
    %v2316 = vtanh.pop %v2315
    %v2317 = vadd.f32 %v2316, 1.0
    %v2318 = vmul.f32 %v2317, 0.5
    %v2319 = vmul.f32 %v2318, %v1990
    %2321 = vrot.lane.b32.xlu0 %v2316, 64
    %v2322 = vpop.permute.xlu0 %2321
    %v2324 = vmul.f32 %v2318, %v2322
    %2326 = vrot.lane.b32.xlu0 %v2324, 32
    %v2327 = vpop.permute.xlu0 %2326
    %v2329 = vadd.f32 %v2319, %v2327
    %v2330 = vtanh.pop %v2329
    %2332 = vrot.lane.b32.xlu0 %v2330, 64
    %v2333 = vpop.permute.xlu0 %2332
    %v2335 = vmul.f32 %v2318, %v2333
    %2337 = vrot.lane.b32.xlu0 %v2335, 32
    %v2338 = vpop.permute.xlu0 %2337
    %v2339 = vsel %vm202, %v2338, 0
    %2341 = vmatprep.subr.mxu0 0.0
    %2342 = vmatpush1.msra.mxu0 %v197
    %2343 = vmatprep.subr.mxu0 0.0
    %2344 = vmatpush1.msra.mxu0 %v198
    %2345 = vmatprep.subr.mxu0 0.0
    %2346 = vmatpush1.msra.mxu0 %v199
    %2347 = vmatprep.subr.mxu0 0.0
    %2348 = vmatpush1.msra.mxu0 %v200
    %2349 = vmatprep.subr.mxu0 0.0
    %2350 = vmatpush1.msra.mxu0 0.0
    %2351 = vmatprep.subr.mxu0 0.0
    %2352 = vmatpush1.msra.mxu0 0.0
    %2353 = vmatprep.subr.mxu0 0.0
    %2354 = vmatpush1.msra.mxu0 0.0
    %2355 = vmatprep.subr.mxu0 0.0
    %2356 = vmatpush1.msra.mxu0 0.0
    %2357 = vmatprep.subr.mxu0 0.0
    %2358 = vmatpush1.msra.mxu0 0.0
    %2359 = vmatprep.subr.mxu0 0.0
    %2360 = vmatpush1.msra.mxu0 0.0
    %2361 = vmatprep.subr.mxu0 0.0
    %2362 = vmatpush1.msra.mxu0 0.0
    %2363 = vmatprep.subr.mxu0 0.0
    %2364 = vmatpush1.msra.mxu0 0.0
    %2365 = vmatprep.subr.mxu0 0.0
    %2366 = vmatpush1.msra.mxu0 0.0
    %2367 = vmatprep.subr.mxu0 0.0
    %2368 = vmatpush1.msra.mxu0 0.0
    %2369 = vmatprep.subr.mxu0 0.0
    %2370 = vmatpush1.msra.mxu0 0.0
    %2371 = vmatprep.subr.mxu0 0.0
    %2372 = vmatpush1.msra.mxu0 0.0
    %2373 = vmatprep.subr.mxu0 0.0
    %2374 = vmatpush1.msra.mxu0 0.0
    %2375 = vmatprep.subr.mxu0 0.0
    %2376 = vmatpush1.msra.mxu0 0.0
    %2377 = vmatprep.subr.mxu0 0.0
    %2378 = vmatpush1.msra.mxu0 0.0
    %2379 = vmatprep.subr.mxu0 0.0
    %2380 = vmatpush1.msra.mxu0 0.0
    %2381 = vmatprep.subr.mxu0 0.0
    %2382 = vmatpush1.msra.mxu0 0.0
    %2383 = vmatprep.subr.mxu0 0.0
    %2384 = vmatpush1.msra.mxu0 0.0
    %2385 = vmatprep.subr.mxu0 0.0
    %2386 = vmatpush1.msra.mxu0 0.0
    %2387 = vmatprep.subr.mxu0 0.0
    %2388 = vmatpush1.msra.mxu0 0.0
    %2389 = vmatprep.subr.mxu0 0.0
    %2390 = vmatpush1.msra.mxu0 0.0
    %2391 = vmatprep.subr.mxu0 0.0
    %2392 = vmatpush1.msra.mxu0 0.0
    %2393 = vmatprep.subr.mxu0 0.0
    %2394 = vmatpush1.msra.mxu0 0.0
    %2395 = vmatprep.subr.mxu0 0.0
    %2396 = vmatpush1.msra.mxu0 0.0
    %2397 = vmatprep.subr.mxu0 0.0
    %2398 = vmatpush1.msra.mxu0 0.0
    %2399 = vmatprep.subr.mxu0 0.0
    %2400 = vmatpush1.msra.mxu0 0.0
    %2401 = vmatprep.subr.mxu0 0.0
    %2402 = vmatpush1.msra.mxu0 0.0
    %2403 = vmatprep.subr.mxu0 0.0
    %2404 = vmatpush1.msra.mxu0 0.0
    %2405 = vmatprep.mubr.f32.mxu0 0.0
    %2406 = vmatmul.mubr.f32.gmra.mrb[0].mxu0 %v2339
    %v2407 = vpop.f32.mrb[0].mxu0
    %v2408 = vadd.f32 %v302, %v2407
    %v2409 = vpop.f32.mrb[0].mxu0
    %2410 = vdwg.mxu0
    %2411 = vmatprep.subr.mxu0 0.0
    %2412 = vmatpush1.msra.mxu0 %v193
    %2413 = vmatprep.subr.mxu0 0.0
    %2414 = vmatpush1.msra.mxu0 %v194
    %2415 = vmatprep.subr.mxu0 0.0
    %2416 = vmatpush1.msra.mxu0 %v195
    %2417 = vmatprep.subr.mxu0 0.0
    %2418 = vmatpush1.msra.mxu0 %v196
    %2419 = vmatprep.subr.mxu0 0.0
    %2420 = vmatpush1.msra.mxu0 0.0
    %2421 = vmatprep.subr.mxu0 0.0
    %2422 = vmatpush1.msra.mxu0 0.0
    %2423 = vmatprep.subr.mxu0 0.0
    %2424 = vmatpush1.msra.mxu0 0.0
    %2425 = vmatprep.subr.mxu0 0.0
    %2426 = vmatpush1.msra.mxu0 0.0
    %2427 = vmatprep.subr.mxu0 0.0
    %2428 = vmatpush1.msra.mxu0 0.0
    %2429 = vmatprep.subr.mxu0 0.0
    %2430 = vmatpush1.msra.mxu0 0.0
    %2431 = vmatprep.subr.mxu0 0.0
    %2432 = vmatpush1.msra.mxu0 0.0
    %2433 = vmatprep.subr.mxu0 0.0
    %2434 = vmatpush1.msra.mxu0 0.0
    %2435 = vmatprep.subr.mxu0 0.0
    %2436 = vmatpush1.msra.mxu0 0.0
    %2437 = vmatprep.subr.mxu0 0.0
    %2438 = vmatpush1.msra.mxu0 0.0
    %2439 = vmatprep.subr.mxu0 0.0
    %2440 = vmatpush1.msra.mxu0 0.0
    %2441 = vmatprep.subr.mxu0 0.0
    %2442 = vmatpush1.msra.mxu0 0.0
    %2443 = vmatprep.subr.mxu0 0.0
    %2444 = vmatpush1.msra.mxu0 0.0
    %2445 = vmatprep.subr.mxu0 0.0
    %2446 = vmatpush1.msra.mxu0 0.0
    %2447 = vmatprep.subr.mxu0 0.0
    %2448 = vmatpush1.msra.mxu0 0.0
    %2449 = vmatprep.subr.mxu0 0.0
    %2450 = vmatpush1.msra.mxu0 0.0
    %2451 = vmatprep.subr.mxu0 0.0
    %2452 = vmatpush1.msra.mxu0 0.0
    %2453 = vmatprep.subr.mxu0 0.0
    %2454 = vmatpush1.msra.mxu0 0.0
    %2455 = vmatprep.subr.mxu0 0.0
    %2456 = vmatpush1.msra.mxu0 0.0
    %2457 = vmatprep.subr.mxu0 0.0
    %2458 = vmatpush1.msra.mxu0 0.0
    %2459 = vmatprep.subr.mxu0 0.0
    %2460 = vmatpush1.msra.mxu0 0.0
    %2461 = vmatprep.subr.mxu0 0.0
    %2462 = vmatpush1.msra.mxu0 0.0
    %2463 = vmatprep.subr.mxu0 0.0
    %2464 = vmatpush1.msra.mxu0 0.0
    %2465 = vmatprep.subr.mxu0 0.0
    %2466 = vmatpush1.msra.mxu0 0.0
    %2467 = vmatprep.subr.mxu0 0.0
    %2468 = vmatpush1.msra.mxu0 0.0
    %2469 = vmatprep.subr.mxu0 0.0
    %2470 = vmatpush1.msra.mxu0 0.0
    %2471 = vmatprep.subr.mxu0 0.0
    %2472 = vmatpush1.msra.mxu0 0.0
    %2473 = vmatprep.subr.mxu0 0.0
    %2474 = vmatpush1.msra.mxu0 0.0
    %2475 = vmatprep.mubr.f32.mxu0 0.0
    %2476 = vmatmul.mubr.f32.gmra.mrb[0].mxu0 %v2171
    %v2477 = vpop.f32.mrb[0].mxu0
    %v2478 = vadd.f32 0.0, %v2477
    %v2479 = vpop.f32.mrb[0].mxu0
    %2480 = vdwg.mxu0
    %v2481 = vadd.f32 %v2408, %v2478
    %v2482 = vmul.f32 %v2481, %v38
    %v2483 = vtanh.pop %v2482
    %v2484 = vadd.f32 %v2483, 1.0
    %v2485 = vmul.f32 %v2484, 0.5
    %v2486 = vmul.f32 %v2485, %v2157
    %2488 = vrot.lane.b32.xlu0 %v2483, 64
    %v2489 = vpop.permute.xlu0 %2488
    %v2491 = vmul.f32 %v2485, %v2489
    %2493 = vrot.lane.b32.xlu0 %v2491, 32
    %v2494 = vpop.permute.xlu0 %2493
    %v2496 = vadd.f32 %v2486, %v2494
    %v2497 = vtanh.pop %v2496
    %2499 = vrot.lane.b32.xlu0 %v2497, 64
    %v2500 = vpop.permute.xlu0 %2499
    %v2502 = vmul.f32 %v2485, %v2500
    %v2503 = vld [vmem:[%s7 + $0xc0] sm:$0xff]
    %v2504 = vld [vmem:[%s7 + $0xc8] sm:$0xff]
    %v2505 = vld [vmem:[%s7 + $0xd0] sm:$0xff]
    %v2506 = vld [vmem:[%s7 + $0xd8] sm:$0xff]
    %2508 = vrot.lane.b32.xlu0 %v2502, 32
    %v2509 = vpop.permute.xlu0 %2508
    %v2510 = vsel %vm202, %v2509, 0
    %2512 = vmatprep.subr.mxu0 0.0
    %2513 = vmatpush1.msra.mxu0 %v2503
    %2514 = vmatprep.subr.mxu0 0.0
    %2515 = vmatpush1.msra.mxu0 %v2504
    %2516 = vmatprep.subr.mxu0 0.0
    %2517 = vmatpush1.msra.mxu0 %v2505
    %2518 = vmatprep.subr.mxu0 0.0
    %2519 = vmatpush1.msra.mxu0 %v2506
    %2520 = vmatprep.subr.mxu0 0.0
    %2521 = vmatpush1.msra.mxu0 0.0
    %2522 = vmatprep.subr.mxu0 0.0
    %2523 = vmatpush1.msra.mxu0 0.0
    %2524 = vmatprep.subr.mxu0 0.0
    %2525 = vmatpush1.msra.mxu0 0.0
    %2526 = vmatprep.subr.mxu0 0.0
    %2527 = vmatpush1.msra.mxu0 0.0
    %2528 = vmatprep.subr.mxu0 0.0
    %2529 = vmatpush1.msra.mxu0 0.0
    %2530 = vmatprep.subr.mxu0 0.0
    %2531 = vmatpush1.msra.mxu0 0.0
    %2532 = vmatprep.subr.mxu0 0.0
    %2533 = vmatpush1.msra.mxu0 0.0
    %2534 = vmatprep.subr.mxu0 0.0
    %2535 = vmatpush1.msra.mxu0 0.0
    %2536 = vmatprep.subr.mxu0 0.0
    %2537 = vmatpush1.msra.mxu0 0.0
    %2538 = vmatprep.subr.mxu0 0.0
    %2539 = vmatpush1.msra.mxu0 0.0
    %2540 = vmatprep.subr.mxu0 0.0
    %2541 = vmatpush1.msra.mxu0 0.0
    %2542 = vmatprep.subr.mxu0 0.0
    %2543 = vmatpush1.msra.mxu0 0.0
    %2544 = vmatprep.subr.mxu0 0.0
    %2545 = vmatpush1.msra.mxu0 0.0
    %2546 = vmatprep.subr.mxu0 0.0
    %2547 = vmatpush1.msra.mxu0 0.0
    %2548 = vmatprep.subr.mxu0 0.0
    %2549 = vmatpush1.msra.mxu0 0.0
    %2550 = vmatprep.subr.mxu0 0.0
    %2551 = vmatpush1.msra.mxu0 0.0
    %2552 = vmatprep.subr.mxu0 0.0
    %2553 = vmatpush1.msra.mxu0 0.0
    %2554 = vmatprep.subr.mxu0 0.0
    %2555 = vmatpush1.msra.mxu0 0.0
    %2556 = vmatprep.subr.mxu0 0.0
    %2557 = vmatpush1.msra.mxu0 0.0
    %2558 = vmatprep.subr.mxu0 0.0
    %2559 = vmatpush1.msra.mxu0 0.0
    %2560 = vmatprep.subr.mxu0 0.0
    %2561 = vmatpush1.msra.mxu0 0.0
    %2562 = vmatprep.subr.mxu0 0.0
    %2563 = vmatpush1.msra.mxu0 0.0
    %2564 = vmatprep.subr.mxu0 0.0
    %2565 = vmatpush1.msra.mxu0 0.0
    %2566 = vmatprep.subr.mxu0 0.0
    %2567 = vmatpush1.msra.mxu0 0.0
    %2568 = vmatprep.subr.mxu0 0.0
    %2569 = vmatpush1.msra.mxu0 0.0
    %2570 = vmatprep.subr.mxu0 0.0
    %2571 = vmatpush1.msra.mxu0 0.0
    %2572 = vmatprep.subr.mxu0 0.0
    %2573 = vmatpush1.msra.mxu0 0.0
    %2574 = vmatprep.subr.mxu0 0.0
    %2575 = vmatpush1.msra.mxu0 0.0
    %2576 = vmatprep.mubr.f32.mxu0 0.0
    %2577 = vmatmul.mubr.f32.gmra.mrb[0].mxu0 %v2510
    %v2578 = vpop.f32.mrb[0].mxu0
    %v2579 = vadd.f32 0.0, %v2578
    %v2580 = vpop.f32.mrb[0].mxu0
    %2581 = vdwg.mxu0
    %v2582 = vadd.f32 %v2243, %v2579
    %2583 = vmatprep.subr.mxu0 0.0
    %2584 = vmatpush1.msra.mxu0 %v189
    %2585 = vmatprep.subr.mxu0 0.0
    %2586 = vmatpush1.msra.mxu0 %v190
    %2587 = vmatprep.subr.mxu0 0.0
    %2588 = vmatpush1.msra.mxu0 %v191
    %2589 = vmatprep.subr.mxu0 0.0
    %2590 = vmatpush1.msra.mxu0 %v192
    %2591 = vmatprep.subr.mxu0 0.0
    %2592 = vmatpush1.msra.mxu0 0.0
    %2593 = vmatprep.subr.mxu0 0.0
    %2594 = vmatpush1.msra.mxu0 0.0
    %2595 = vmatprep.subr.mxu0 0.0
    %2596 = vmatpush1.msra.mxu0 0.0
    %2597 = vmatprep.subr.mxu0 0.0
    %2598 = vmatpush1.msra.mxu0 0.0
    %2599 = vmatprep.subr.mxu0 0.0
    %2600 = vmatpush1.msra.mxu0 0.0
    %2601 = vmatprep.subr.mxu0 0.0
    %2602 = vmatpush1.msra.mxu0 0.0
    %2603 = vmatprep.subr.mxu0 0.0
    %2604 = vmatpush1.msra.mxu0 0.0
    %2605 = vmatprep.subr.mxu0 0.0
    %2606 = vmatpush1.msra.mxu0 0.0
    %2607 = vmatprep.subr.mxu0 0.0
    %2608 = vmatpush1.msra.mxu0 0.0
    %2609 = vmatprep.subr.mxu0 0.0
    %2610 = vmatpush1.msra.mxu0 0.0
    %2611 = vmatprep.subr.mxu0 0.0
    %2612 = vmatpush1.msra.mxu0 0.0
    %2613 = vmatprep.subr.mxu0 0.0
    %2614 = vmatpush1.msra.mxu0 0.0
    %2615 = vmatprep.subr.mxu0 0.0
    %2616 = vmatpush1.msra.mxu0 0.0
    %2617 = vmatprep.subr.mxu0 0.0
    %2618 = vmatpush1.msra.mxu0 0.0
    %2619 = vmatprep.subr.mxu0 0.0
    %2620 = vmatpush1.msra.mxu0 0.0
    %2621 = vmatprep.subr.mxu0 0.0
    %2622 = vmatpush1.msra.mxu0 0.0
    %2623 = vmatprep.subr.mxu0 0.0
    %2624 = vmatpush1.msra.mxu0 0.0
    %2625 = vmatprep.subr.mxu0 0.0
    %2626 = vmatpush1.msra.mxu0 0.0
    %2627 = vmatprep.subr.mxu0 0.0
    %2628 = vmatpush1.msra.mxu0 0.0
    %2629 = vmatprep.subr.mxu0 0.0
    %2630 = vmatpush1.msra.mxu0 0.0
    %2631 = vmatprep.subr.mxu0 0.0
    %2632 = vmatpush1.msra.mxu0 0.0
    %2633 = vmatprep.subr.mxu0 0.0
    %2634 = vmatpush1.msra.mxu0 0.0
    %2635 = vmatprep.subr.mxu0 0.0
    %2636 = vmatpush1.msra.mxu0 0.0
    %2637 = vmatprep.subr.mxu0 0.0
    %2638 = vmatpush1.msra.mxu0 0.0
    %2639 = vmatprep.subr.mxu0 0.0
    %2640 = vmatpush1.msra.mxu0 0.0
    %2641 = vmatprep.subr.mxu0 0.0
    %2642 = vmatpush1.msra.mxu0 0.0
    %2643 = vmatprep.subr.mxu0 0.0
    %2644 = vmatpush1.msra.mxu0 0.0
    %2645 = vmatprep.subr.mxu0 0.0
    %2646 = vmatpush1.msra.mxu0 0.0
    %2647 = vmatprep.mubr.f32.mxu0 0.0
    %2648 = vmatmul.mubr.f32.gmra.mrb[0].mxu0 %v2339
    %v2649 = vpop.f32.mrb[0].mxu0
    %v2650 = vadd.f32 0.0, %v2649
    %v2651 = vpop.f32.mrb[0].mxu0
    %2652 = vdwg.mxu0
    %v2653 = vadd.f32 %v186, %v2650
    %v2654 = vmul.f32 %v2653, %v38
    %v2655 = vtanh.pop %v2654
    %v2656 = vadd.f32 %v2655, 1.0
    %v2657 = vmul.f32 %v2656, 0.5
    %v2658 = vmul.f32 %v2657, %v2329
    %2660 = vrot.lane.b32.xlu0 %v2655, 64
    %v2661 = vpop.permute.xlu0 %2660
    %v2663 = vmul.f32 %v2657, %v2661
    %2665 = vrot.lane.b32.xlu0 %v2663, 32
    %v2666 = vpop.permute.xlu0 %2665
    %v2668 = vadd.f32 %v2658, %v2666
    %v2669 = vtanh.pop %v2668
    %2671 = vrot.lane.b32.xlu0 %v2669, 64
    %v2672 = vpop.permute.xlu0 %2671
    %v2674 = vmul.f32 %v2657, %v2672
    %2676 = vrot.lane.b32.xlu0 %v2674, 32
    %v2677 = vpop.permute.xlu0 %2676
    %v2678 = vsel %vm202, %v2677, 0
    %2680 = vmatprep.subr.mxu0 0.0
    %2681 = vmatpush1.msra.mxu0 %v197
    %2682 = vmatprep.subr.mxu0 0.0
    %2683 = vmatpush1.msra.mxu0 %v198
    %2684 = vmatprep.subr.mxu0 0.0
    %2685 = vmatpush1.msra.mxu0 %v199
    %2686 = vmatprep.subr.mxu0 0.0
    %2687 = vmatpush1.msra.mxu0 %v200
    %2688 = vmatprep.subr.mxu0 0.0
    %2689 = vmatpush1.msra.mxu0 0.0
    %2690 = vmatprep.subr.mxu0 0.0
    %2691 = vmatpush1.msra.mxu0 0.0
    %2692 = vmatprep.subr.mxu0 0.0
    %2693 = vmatpush1.msra.mxu0 0.0
    %2694 = vmatprep.subr.mxu0 0.0
    %2695 = vmatpush1.msra.mxu0 0.0
    %2696 = vmatprep.subr.mxu0 0.0
    %2697 = vmatpush1.msra.mxu0 0.0
    %2698 = vmatprep.subr.mxu0 0.0
    %2699 = vmatpush1.msra.mxu0 0.0
    %2700 = vmatprep.subr.mxu0 0.0
    %2701 = vmatpush1.msra.mxu0 0.0
    %2702 = vmatprep.subr.mxu0 0.0
    %2703 = vmatpush1.msra.mxu0 0.0
    %2704 = vmatprep.subr.mxu0 0.0
    %2705 = vmatpush1.msra.mxu0 0.0
    %2706 = vmatprep.subr.mxu0 0.0
    %2707 = vmatpush1.msra.mxu0 0.0
    %2708 = vmatprep.subr.mxu0 0.0
    %2709 = vmatpush1.msra.mxu0 0.0
    %2710 = vmatprep.subr.mxu0 0.0
    %2711 = vmatpush1.msra.mxu0 0.0
    %2712 = vmatprep.subr.mxu0 0.0
    %2713 = vmatpush1.msra.mxu0 0.0
    %2714 = vmatprep.subr.mxu0 0.0
    %2715 = vmatpush1.msra.mxu0 0.0
    %2716 = vmatprep.subr.mxu0 0.0
    %2717 = vmatpush1.msra.mxu0 0.0
    %2718 = vmatprep.subr.mxu0 0.0
    %2719 = vmatpush1.msra.mxu0 0.0
    %2720 = vmatprep.subr.mxu0 0.0
    %2721 = vmatpush1.msra.mxu0 0.0
    %2722 = vmatprep.subr.mxu0 0.0
    %2723 = vmatpush1.msra.mxu0 0.0
    %2724 = vmatprep.subr.mxu0 0.0
    %2725 = vmatpush1.msra.mxu0 0.0
    %2726 = vmatprep.subr.mxu0 0.0
    %2727 = vmatpush1.msra.mxu0 0.0
    %2728 = vmatprep.subr.mxu0 0.0
    %2729 = vmatpush1.msra.mxu0 0.0
    %2730 = vmatprep.subr.mxu0 0.0
    %2731 = vmatpush1.msra.mxu0 0.0
    %2732 = vmatprep.subr.mxu0 0.0
    %2733 = vmatpush1.msra.mxu0 0.0
    %2734 = vmatprep.subr.mxu0 0.0
    %2735 = vmatpush1.msra.mxu0 0.0
    %2736 = vmatprep.subr.mxu0 0.0
    %2737 = vmatpush1.msra.mxu0 0.0
    %2738 = vmatprep.subr.mxu0 0.0
    %2739 = vmatpush1.msra.mxu0 0.0
    %2740 = vmatprep.subr.mxu0 0.0
    %2741 = vmatpush1.msra.mxu0 0.0
    %2742 = vmatprep.subr.mxu0 0.0
    %2743 = vmatpush1.msra.mxu0 0.0
    %2744 = vmatprep.mubr.f32.mxu0 0.0
    %2745 = vmatmul.mubr.f32.gmra.mrb[0].mxu0 %v2678
    %v2746 = vpop.f32.mrb[0].mxu0
    %v2747 = vadd.f32 %v302, %v2746
    %v2748 = vpop.f32.mrb[0].mxu0
    %2749 = vdwg.mxu0
    %2750 = vmatprep.subr.mxu0 0.0
    %2751 = vmatpush1.msra.mxu0 %v193
    %2752 = vmatprep.subr.mxu0 0.0
    %2753 = vmatpush1.msra.mxu0 %v194
    %2754 = vmatprep.subr.mxu0 0.0
    %2755 = vmatpush1.msra.mxu0 %v195
    %2756 = vmatprep.subr.mxu0 0.0
    %2757 = vmatpush1.msra.mxu0 %v196
    %2758 = vmatprep.subr.mxu0 0.0
    %2759 = vmatpush1.msra.mxu0 0.0
    %2760 = vmatprep.subr.mxu0 0.0
    %2761 = vmatpush1.msra.mxu0 0.0
    %2762 = vmatprep.subr.mxu0 0.0
    %2763 = vmatpush1.msra.mxu0 0.0
    %2764 = vmatprep.subr.mxu0 0.0
    %2765 = vmatpush1.msra.mxu0 0.0
    %2766 = vmatprep.subr.mxu0 0.0
    %2767 = vmatpush1.msra.mxu0 0.0
    %2768 = vmatprep.subr.mxu0 0.0
    %2769 = vmatpush1.msra.mxu0 0.0
    %2770 = vmatprep.subr.mxu0 0.0
    %2771 = vmatpush1.msra.mxu0 0.0
    %2772 = vmatprep.subr.mxu0 0.0
    %2773 = vmatpush1.msra.mxu0 0.0
    %2774 = vmatprep.subr.mxu0 0.0
    %2775 = vmatpush1.msra.mxu0 0.0
    %2776 = vmatprep.subr.mxu0 0.0
    %2777 = vmatpush1.msra.mxu0 0.0
    %2778 = vmatprep.subr.mxu0 0.0
    %2779 = vmatpush1.msra.mxu0 0.0
    %2780 = vmatprep.subr.mxu0 0.0
    %2781 = vmatpush1.msra.mxu0 0.0
    %2782 = vmatprep.subr.mxu0 0.0
    %2783 = vmatpush1.msra.mxu0 0.0
    %2784 = vmatprep.subr.mxu0 0.0
    %2785 = vmatpush1.msra.mxu0 0.0
    %2786 = vmatprep.subr.mxu0 0.0
    %2787 = vmatpush1.msra.mxu0 0.0
    %2788 = vmatprep.subr.mxu0 0.0
    %2789 = vmatpush1.msra.mxu0 0.0
    %2790 = vmatprep.subr.mxu0 0.0
    %2791 = vmatpush1.msra.mxu0 0.0
    %2792 = vmatprep.subr.mxu0 0.0
    %2793 = vmatpush1.msra.mxu0 0.0
    %2794 = vmatprep.subr.mxu0 0.0
    %2795 = vmatpush1.msra.mxu0 0.0
    %2796 = vmatprep.subr.mxu0 0.0
    %2797 = vmatpush1.msra.mxu0 0.0
    %2798 = vmatprep.subr.mxu0 0.0
    %2799 = vmatpush1.msra.mxu0 0.0
    %2800 = vmatprep.subr.mxu0 0.0
    %2801 = vmatpush1.msra.mxu0 0.0
    %2802 = vmatprep.subr.mxu0 0.0
    %2803 = vmatpush1.msra.mxu0 0.0
    %2804 = vmatprep.subr.mxu0 0.0
    %2805 = vmatpush1.msra.mxu0 0.0
    %2806 = vmatprep.subr.mxu0 0.0
    %2807 = vmatpush1.msra.mxu0 0.0
    %2808 = vmatprep.subr.mxu0 0.0
    %2809 = vmatpush1.msra.mxu0 0.0
    %2810 = vmatprep.subr.mxu0 0.0
    %2811 = vmatpush1.msra.mxu0 0.0
    %2812 = vmatprep.subr.mxu0 0.0
    %2813 = vmatpush1.msra.mxu0 0.0
    %2814 = vmatprep.mubr.f32.mxu0 0.0
    %2815 = vmatmul.mubr.f32.gmra.mrb[0].mxu0 %v2510
    %v2816 = vpop.f32.mrb[0].mxu0
    %v2817 = vadd.f32 0.0, %v2816
    %v2818 = vpop.f32.mrb[0].mxu0
    %2819 = vdwg.mxu0
    %v2820 = vadd.f32 %v2747, %v2817
    %v2821 = vmul.f32 %v2820, %v38
    %v2822 = vtanh.pop %v2821
    %v2823 = vadd.f32 %v2822, 1.0
    %v2824 = vmul.f32 %v2823, 0.5
    %v2825 = vmul.f32 %v2824, %v2496
    %2827 = vrot.lane.b32.xlu0 %v2822, 64
    %v2828 = vpop.permute.xlu0 %2827
    %v2830 = vmul.f32 %v2824, %v2828
    %2832 = vrot.lane.b32.xlu0 %v2830, 32
    %v2833 = vpop.permute.xlu0 %2832
    %v2835 = vadd.f32 %v2825, %v2833
    %v2836 = vtanh.pop %v2835
    %2838 = vrot.lane.b32.xlu0 %v2836, 64
    %v2839 = vpop.permute.xlu0 %2838
    %v2841 = vmul.f32 %v2824, %v2839
    %v2842 = vld [vmem:[%s7 + $0xe0] sm:$0xff]
    %v2843 = vld [vmem:[%s7 + $0xe8] sm:$0xff]
    %v2844 = vld [vmem:[%s7 + $0xf0] sm:$0xff]
    %v2845 = vld [vmem:[%s7 + $0xf8] sm:$0xff]
    %2847 = vrot.lane.b32.xlu0 %v2841, 32
    %v2848 = vpop.permute.xlu0 %2847
    %v2849 = vsel %vm202, %v2848, 0
    %2851 = vmatprep.subr.mxu0 0.0
    %2852 = vmatpush1.msra.mxu0 %v2842
    %2853 = vmatprep.subr.mxu0 0.0
    %2854 = vmatpush1.msra.mxu0 %v2843
    %2855 = vmatprep.subr.mxu0 0.0
    %2856 = vmatpush1.msra.mxu0 %v2844
    %2857 = vmatprep.subr.mxu0 0.0
    %2858 = vmatpush1.msra.mxu0 %v2845
    %2859 = vmatprep.subr.mxu0 0.0
    %2860 = vmatpush1.msra.mxu0 0.0
    %2861 = vmatprep.subr.mxu0 0.0
    %2862 = vmatpush1.msra.mxu0 0.0
    %2863 = vmatprep.subr.mxu0 0.0
    %2864 = vmatpush1.msra.mxu0 0.0
    %2865 = vmatprep.subr.mxu0 0.0
    %2866 = vmatpush1.msra.mxu0 0.0
    %2867 = vmatprep.subr.mxu0 0.0
    %2868 = vmatpush1.msra.mxu0 0.0
    %2869 = vmatprep.subr.mxu0 0.0
    %2870 = vmatpush1.msra.mxu0 0.0
    %2871 = vmatprep.subr.mxu0 0.0
    %2872 = vmatpush1.msra.mxu0 0.0
    %2873 = vmatprep.subr.mxu0 0.0
    %2874 = vmatpush1.msra.mxu0 0.0
    %2875 = vmatprep.subr.mxu0 0.0
    %2876 = vmatpush1.msra.mxu0 0.0
    %2877 = vmatprep.subr.mxu0 0.0
    %2878 = vmatpush1.msra.mxu0 0.0
    %2879 = vmatprep.subr.mxu0 0.0
    %2880 = vmatpush1.msra.mxu0 0.0
    %2881 = vmatprep.subr.mxu0 0.0
    %2882 = vmatpush1.msra.mxu0 0.0
    %2883 = vmatprep.subr.mxu0 0.0
    %2884 = vmatpush1.msra.mxu0 0.0
    %2885 = vmatprep.subr.mxu0 0.0
    %2886 = vmatpush1.msra.mxu0 0.0
    %2887 = vmatprep.subr.mxu0 0.0
    %2888 = vmatpush1.msra.mxu0 0.0
    %2889 = vmatprep.subr.mxu0 0.0
    %2890 = vmatpush1.msra.mxu0 0.0
    %2891 = vmatprep.subr.mxu0 0.0
    %2892 = vmatpush1.msra.mxu0 0.0
    %2893 = vmatprep.subr.mxu0 0.0
    %2894 = vmatpush1.msra.mxu0 0.0
    %2895 = vmatprep.subr.mxu0 0.0
    %2896 = vmatpush1.msra.mxu0 0.0
    %2897 = vmatprep.subr.mxu0 0.0
    %2898 = vmatpush1.msra.mxu0 0.0
    %2899 = vmatprep.subr.mxu0 0.0
    %2900 = vmatpush1.msra.mxu0 0.0
    %2901 = vmatprep.subr.mxu0 0.0
    %2902 = vmatpush1.msra.mxu0 0.0
    %2903 = vmatprep.subr.mxu0 0.0
    %2904 = vmatpush1.msra.mxu0 0.0
    %2905 = vmatprep.subr.mxu0 0.0
    %2906 = vmatpush1.msra.mxu0 0.0
    %2907 = vmatprep.subr.mxu0 0.0
    %2908 = vmatpush1.msra.mxu0 0.0
    %2909 = vmatprep.subr.mxu0 0.0
    %2910 = vmatpush1.msra.mxu0 0.0
    %2911 = vmatprep.subr.mxu0 0.0
    %2912 = vmatpush1.msra.mxu0 0.0
    %2913 = vmatprep.subr.mxu0 0.0
    %2914 = vmatpush1.msra.mxu0 0.0
    %2915 = vmatprep.mubr.f32.mxu0 0.0
    %2916 = vmatmul.mubr.f32.gmra.mrb[0].mxu0 %v2849
    %v2917 = vpop.f32.mrb[0].mxu0
    %v2918 = vadd.f32 0.0, %v2917
    %v2919 = vpop.f32.mrb[0].mxu0
    %2920 = vdwg.mxu0
    %v2921 = vadd.f32 %v2582, %v2918
    %v2922 = vld [vmem:[%s8] sm:$0x1]
    %v2924 = vlaneseq
    %v2925 = vshrl.u32 %v2924, 7
    %v2926 = vsub.s32 0, %v2925
    %v2927 = vrot.slane %v2922, %v2926
    %v2929 = vadd.f32 %v2921, %v2927
    %vm2930 = vcmask 97280
    %2931 = vst.msk [vmem:[#allocation2] sm:$0xff] %vm2930, %v2929
    // Predicated region
    $region38: #{tpu_custom_call.1} parent=1 // pred_check
      _
    $region39: #{tpu_custom_call.1} parent=1 // pred_check_branch
      %2933 = sbr.rel (0) target = $region41
    $region40: #{tpu_custom_call.1} parent=1 // pred_region
      %s2935 = ssub.s32 128, 128
      %2936 = vsyncadd [#allocation3], %s2935
      %s2938 = sshll.u32 [#allocation2], 4
      %s2939 = int_to_ptr.vmem [resolvable:$true] %s2938
      %2941 = dma.vmem_to_hbm [thread:$0]  %s2939, 128, %s9, [#allocation3]
    $region41: #{tpu_custom_call.1} parent=1 // pred_fallthru
      _
    // Predicated region
    $region42: #{tpu_custom_call.1} parent=1 // pred_check
      _
    $region43: #{tpu_custom_call.1} parent=1 // pred_check_branch
      %2943 = sbr.rel (0) target = $region45
    $region44: #{tpu_custom_call.1} parent=1 // pred_region
      %2944 = dma.done [#allocation3], 128
    $region45: #{tpu_custom_call.1} parent=1 // pred_fallthru
      _
    %2945 = vsyncpa [#allocation3], 1

</llo_original>
